<compile_context>
chip_gen: v6e
topology: v6e:2x2x1
jax: 0.10.0
libtpu: 0.0.40
codegen_flags: <defaults>
</compile_context>

<pallas_src>
import jax
import jax.numpy as jnp
from jax import lax
from jax.experimental import pallas as pl
from jax.experimental.pallas import tpu as pltpu


def _lstm_fc_kernel(gx0_ref, whh0_ref, w1s_ref, b1_ref, wfc_ref, bfc_ref, out_ref):
    # gx0_ref : (T, B, 4Hp)  precomputed x @ W_ih_l0 + b0 (gate order i,f,o,g)
    # whh0_ref: (Hp, 4Hp)    layer-0 recurrent weights
    # w1s_ref : (2Hp, 4Hp)   stacked [W_ih_l1; W_hh_l1]
    # b1_ref  : (1, 4Hp)     combined layer-1 bias
    # wfc_ref : (Hp, O)      final linear
    # bfc_ref : (1, O)
    T, B, G4 = gx0_ref.shape
    Hp = whh0_ref.shape[0]

    whh0 = whh0_ref[...]
    w1s = w1s_ref[...]
    # Hoisted bias broadcast (JAX does not CSE broadcast_in_dim inside the loop).
    b1 = jnp.broadcast_to(b1_ref[...], (B, G4))

    def gates_to_hc(g, c_prev):
        # gate order i, f, o, g  ->  one wide sigmoid + one tanh (128-aligned slices)
        sig = jax.nn.sigmoid(g[:, :3 * Hp])
        i_g = sig[:, 0 * Hp:1 * Hp]
        f_g = sig[:, 1 * Hp:2 * Hp]
        o_g = sig[:, 2 * Hp:3 * Hp]
        g_g = jnp.tanh(g[:, 3 * Hp:])
        c_new = f_g * c_prev + i_g * g_g
        h_new = o_g * jnp.tanh(c_new)
        return h_new, c_new

    def step(t, carry):
        h0, c0, h1, c1 = carry
        # layer 0: only the recurrent matmul is on the serial chain
        g0 = gx0_ref[t] + jnp.dot(h0, whh0, preferred_element_type=jnp.float32)
        h0n, c0n = gates_to_hc(g0, c0)
        # layer 1: single fused matmul over the stacked operand
        g1 = jnp.dot(jnp.concatenate([h0n, h1], axis=1), w1s,
                     preferred_element_type=jnp.float32) + b1
        h1n, c1n = gates_to_hc(g1, c1)
        return (h0n, c0n, h1n, c1n)

    z = jnp.zeros((B, Hp), jnp.float32)
    # T is small & static: unroll so the scheduler can overlap adjacent steps.
    _, _, h1, _ = lax.fori_loop(0, T, step, (z, z, z, z), unroll=True)

    out_ref[...] = (jnp.dot(h1, wfc_ref[...], preferred_element_type=jnp.float32)
                    + bfc_ref[...])


def _prep_params(params, Hp):
    """Repack PyTorch-layout LSTM params: gate order (i,f,o,g), H padded to Hp,
    weights transposed for row-major `act @ W` matmuls."""
    H = params["w_hh_l0"].shape[1]
    O = params["w_fc"].shape[0]

    def pack_w(w):  # (4H, K) rows [i,f,g,o] -> (K, 4Hp) cols [i,f,o,g], gate-padded
        blocks = [w[0:H], w[H:2 * H], w[3 * H:4 * H], w[2 * H:3 * H]]
        padded = [jnp.pad(b, ((0, Hp - H), (0, 0))) for b in blocks]
        return jnp.concatenate(padded, axis=0).T

    def pack_b(b):  # (4H,) -> (1, 4Hp)
        blocks = [b[0:H], b[H:2 * H], b[3 * H:4 * H], b[2 * H:3 * H]]
        padded = [jnp.pad(v, (0, Hp - H)) for v in blocks]
        return jnp.concatenate(padded).reshape(1, 4 * Hp)

    def pad_rows(w):  # (K, 4Hp) -> (Hp, 4Hp), zero rows for padded hidden lanes
        return jnp.pad(w, ((0, Hp - w.shape[0]), (0, 0)))

    wih0 = pack_w(params["w_ih_l0"])                              # (I, 4Hp)
    whh0 = pad_rows(pack_w(params["w_hh_l0"]))                    # (Hp, 4Hp)
    b0 = pack_b(params["b_ih_l0"] + params["b_hh_l0"])            # (1, 4Hp)

    wih1 = pad_rows(pack_w(params["w_ih_l1"]))                    # (Hp, 4Hp)
    whh1 = pad_rows(pack_w(params["w_hh_l1"]))                    # (Hp, 4Hp)
    w1s = jnp.concatenate([wih1, whh1], axis=0)                   # (2Hp, 4Hp)
    b1 = pack_b(params["b_ih_l1"] + params["b_hh_l1"])            # (1, 4Hp)

    wfc = jnp.pad(params["w_fc"].T, ((0, Hp - H), (0, 0)))        # (Hp, O)
    bfc = params["b_fc"].reshape(1, O)
    return wih0, whh0, b0, w1s, b1, wfc, bfc


def lstm_predictor_forward(x, params, Hp=128):
    """x: (B, T, I) float32 (batch_first, like the PyTorch module). Returns (B, O)."""
    B, T, I = x.shape
    O = params["w_fc"].shape[0]
    wih0, whh0, b0, w1s, b1, wfc, bfc = _prep_params(params, Hp)

    # Hoisted layer-0 input projection: one lane-dense matmul over all timesteps,
    # outside the serial recurrence.  The kernel never sees the (T,B,2) array.
    x_tm = jnp.transpose(x, (1, 0, 2)).astype(jnp.float32)        # (T, B, I)
    gx0 = (x_tm.reshape(T * B, I) @ wih0 + b0).reshape(T, B, 4 * Hp)

    vmem = pl.BlockSpec(memory_space=pltpu.MemorySpace.VMEM)
    return pl.pallas_call(
        _lstm_fc_kernel,
        out_shape=jax.ShapeDtypeStruct((B, O), jnp.float32),
        in_specs=[vmem] * 6,
        out_specs=vmem,
    )(gx0, whh0, w1s, b1, wfc, bfc)


def init_params(key, input_size=2, hidden_size=50, output_size=2):
    """Deterministic init mimicking PyTorch's U(-1/sqrt(H), 1/sqrt(H))."""
    H, I, O = hidden_size, input_size, output_size
    k = 1.0 / jnp.sqrt(jnp.float32(H))
    names_shapes = [
        ("w_ih_l0", (4 * H, I)), ("w_hh_l0", (4 * H, H)),
        ("b_ih_l0", (4 * H,)), ("b_hh_l0", (4 * H,)),
        ("w_ih_l1", (4 * H, H)), ("w_hh_l1", (4 * H, H)),
        ("b_ih_l1", (4 * H,)), ("b_hh_l1", (4 * H,)),
        ("w_fc", (O, H)), ("b_fc", (O,)),
    ]
    keys = jax.random.split(key, len(names_shapes))
    return {n: jax.random.uniform(kk, s, jnp.float32, -k, k)
            for (n, s), kk in zip(names_shapes, keys)}


def _reference_forward(x, params):
    """Pure-JAX reference of the PyTorch forward (gate order i,f,g,o)."""
    B, T, I = x.shape
    H = params["w_hh_l0"].shape[1]

    def cell(x_in, h, c, wih, whh, bih, bhh):
        g = x_in @ wih.T + bih + h @ whh.T + bhh
        i_g = jax.nn.sigmoid(g[:, 0 * H:1 * H])
        f_g = jax.nn.sigmoid(g[:, 1 * H:2 * H])
        g_g = jnp.tanh(g[:, 2 * H:3 * H])
        o_g = jax.nn.sigmoid(g[:, 3 * H:4 * H])
        c_n = f_g * c + i_g * g_g
        return o_g * jnp.tanh(c_n), c_n

    h0 = c0 = h1 = c1 = jnp.zeros((B, H), jnp.float32)
    for t in range(T):
        h0, c0 = cell(x[:, t, :], h0, c0, params["w_ih_l0"], params["w_hh_l0"],
                      params["b_ih_l0"], params["b_hh_l0"])
        h1, c1 = cell(h0, h1, c1, params["w_ih_l1"], params["w_hh_l1"],
                      params["b_ih_l1"], params["b_hh_l1"])
    return h1 @ params["w_fc"].T + params["b_fc"]


if __name__ == "__main__":
    key = jax.random.PRNGKey(0)
    kp, kx = jax.random.split(key)

    B, T, I, H, O = 2, 8, 2, 50, 2
    params = init_params(kp, input_size=I, hidden_size=H, output_size=O)
    x = jax.random.normal(kx, (B, T, I), jnp.float32)

    out = lstm_predictor_forward(x, params)
    out = jax.block_until_ready(out)

    ref = _reference_forward(x, params)
    assert out.shape == (B, O)
    assert jnp.allclose(out, ref, atol=1e-5, rtol=1e-5), (out, ref)
    print("KERNEL_OK")
</pallas_src>

<mosaic_0001>
module attributes {stable_mosaic.version = 11 : i64} {
  func.func @_lstm_fc_kernel(%arg0: memref<8x2x512xf32, #tpu.memory_space<vmem>>, %arg1: memref<128x512xf32, #tpu.memory_space<vmem>>, %arg2: memref<256x512xf32, #tpu.memory_space<vmem>>, %arg3: memref<1x512xf32, #tpu.memory_space<vmem>>, %arg4: memref<128x2xf32, #tpu.memory_space<vmem>>, %arg5: memref<1x2xf32, #tpu.memory_space<vmem>>, %arg6: memref<2x2xf32, #tpu.memory_space<vmem>>) attributes {dimension_semantics = [], scalar_prefetch = 0 : i64, scratch_operands = 0 : i64, tpu.core_type = #tpu.core_type<tc>} {
    %c0 = arith.constant 0 : index
    %c0_0 = arith.constant 0 : index
    %0 = vector.load %arg1[%c0, %c0_0] : memref<128x512xf32, #tpu.memory_space<vmem>>, vector<128x512xf32>
    %c0_1 = arith.constant 0 : index
    %c0_2 = arith.constant 0 : index
    %1 = vector.load %arg2[%c0_1, %c0_2] : memref<256x512xf32, #tpu.memory_space<vmem>>, vector<256x512xf32>
    %c0_3 = arith.constant 0 : index
    %c0_4 = arith.constant 0 : index
    %2 = vector.load %arg3[%c0_3, %c0_4] : memref<1x512xf32, #tpu.memory_space<vmem>>, vector<1x512xf32>
    %3 = vector.shape_cast %2 : vector<1x512xf32> to vector<1x512xf32>
    %4 = vector.broadcast %3 : vector<1x512xf32> to vector<2x512xf32>
    %cst = arith.constant 0.000000e+00 : f32
    %5 = vector.broadcast %cst : f32 to vector<2x128xf32>
    %c0_i32 = arith.constant 0 : i32
    %6 = arith.index_cast %c0_i32 : i32 to index
    %c0_5 = arith.constant 0 : index
    %c0_6 = arith.constant 0 : index
    %7 = vector.load %arg0[%6, %c0_5, %c0_6] : memref<8x2x512xf32, #tpu.memory_space<vmem>>, vector<1x2x512xf32>
    %8 = vector.shape_cast %7 : vector<1x2x512xf32> to vector<2x512xf32>
    %cst_7 = arith.constant dense<0.000000e+00> : vector<2x512xf32>
    %9 = tpu.matmul %5, %0, %cst_7 {dimension_numbers = #tpu.dot_dimension_numbers<[1], [0], [0], [1], [0, 0, 1, 1], [], []>} : vector<2x128xf32>, vector<128x512xf32>, vector<2x512xf32> -> vector<2x512xf32>
    %10 = arith.addf %8, %9 : vector<2x512xf32>
    %11 = vector.extract_strided_slice %10 {offsets = [0, 0], sizes = [2, 384], strides = [1, 1]} : vector<2x512xf32> to vector<2x384xf32>
    %12 = arith.negf %11 : vector<2x384xf32>
    %13 = math.exp %12 : vector<2x384xf32>
    %cst_8 = arith.constant 1.000000e+00 : f32
    %14 = vector.broadcast %cst_8 : f32 to vector<2x384xf32>
    %15 = arith.addf %14, %13 : vector<2x384xf32>
    %16 = arith.divf %14, %15 : vector<2x384xf32>
    %17 = vector.extract_strided_slice %16 {offsets = [0, 0], sizes = [2, 128], strides = [1, 1]} : vector<2x384xf32> to vector<2x128xf32>
    %18 = vector.extract_strided_slice %16 {offsets = [0, 128], sizes = [2, 128], strides = [1, 1]} : vector<2x384xf32> to vector<2x128xf32>
    %19 = vector.extract_strided_slice %16 {offsets = [0, 256], sizes = [2, 128], strides = [1, 1]} : vector<2x384xf32> to vector<2x128xf32>
    %20 = vector.extract_strided_slice %10 {offsets = [0, 384], sizes = [2, 128], strides = [1, 1]} : vector<2x512xf32> to vector<2x128xf32>
    %21 = math.tanh %20 : vector<2x128xf32>
    %22 = arith.mulf %18, %5 : vector<2x128xf32>
    %23 = arith.mulf %17, %21 : vector<2x128xf32>
    %24 = arith.addf %22, %23 : vector<2x128xf32>
    %25 = math.tanh %24 : vector<2x128xf32>
    %26 = arith.mulf %19, %25 : vector<2x128xf32>
    %27 = tpu.concatenate %26, %5 in 1 : vector<2x128xf32>, vector<2x128xf32> -> vector<2x256xf32>
    %cst_9 = arith.constant dense<0.000000e+00> : vector<2x512xf32>
    %28 = tpu.matmul %27, %1, %cst_9 {dimension_numbers = #tpu.dot_dimension_numbers<[1], [0], [0], [1], [0, 0, 1, 1], [], []>} : vector<2x256xf32>, vector<256x512xf32>, vector<2x512xf32> -> vector<2x512xf32>
    %29 = arith.addf %28, %4 : vector<2x512xf32>
    %30 = vector.extract_strided_slice %29 {offsets = [0, 0], sizes = [2, 384], strides = [1, 1]} : vector<2x512xf32> to vector<2x384xf32>
    %31 = arith.negf %30 : vector<2x384xf32>
    %32 = math.exp %31 : vector<2x384xf32>
    %cst_10 = arith.constant 1.000000e+00 : f32
    %33 = vector.broadcast %cst_10 : f32 to vector<2x384xf32>
    %34 = arith.addf %33, %32 : vector<2x384xf32>
    %35 = arith.divf %33, %34 : vector<2x384xf32>
    %36 = vector.extract_strided_slice %35 {offsets = [0, 0], sizes = [2, 128], strides = [1, 1]} : vector<2x384xf32> to vector<2x128xf32>
    %37 = vector.extract_strided_slice %35 {offsets = [0, 128], sizes = [2, 128], strides = [1, 1]} : vector<2x384xf32> to vector<2x128xf32>
    %38 = vector.extract_strided_slice %35 {offsets = [0, 256], sizes = [2, 128], strides = [1, 1]} : vector<2x384xf32> to vector<2x128xf32>
    %39 = vector.extract_strided_slice %29 {offsets = [0, 384], sizes = [2, 128], strides = [1, 1]} : vector<2x512xf32> to vector<2x128xf32>
    %40 = math.tanh %39 : vector<2x128xf32>
    %41 = arith.mulf %37, %5 : vector<2x128xf32>
    %42 = arith.mulf %36, %40 : vector<2x128xf32>
    %43 = arith.addf %41, %42 : vector<2x128xf32>
    %44 = math.tanh %43 : vector<2x128xf32>
    %45 = arith.mulf %38, %44 : vector<2x128xf32>
    %c1_i32 = arith.constant 1 : i32
    %46 = arith.index_cast %c1_i32 : i32 to index
    %c0_11 = arith.constant 0 : index
    %c0_12 = arith.constant 0 : index
    %47 = vector.load %arg0[%46, %c0_11, %c0_12] : memref<8x2x512xf32, #tpu.memory_space<vmem>>, vector<1x2x512xf32>
    %48 = vector.shape_cast %47 : vector<1x2x512xf32> to vector<2x512xf32>
    %cst_13 = arith.constant dense<0.000000e+00> : vector<2x512xf32>
    %49 = tpu.matmul %26, %0, %cst_13 {dimension_numbers = #tpu.dot_dimension_numbers<[1], [0], [0], [1], [0, 0, 1, 1], [], []>} : vector<2x128xf32>, vector<128x512xf32>, vector<2x512xf32> -> vector<2x512xf32>
    %50 = arith.addf %48, %49 : vector<2x512xf32>
    %51 = vector.extract_strided_slice %50 {offsets = [0, 0], sizes = [2, 384], strides = [1, 1]} : vector<2x512xf32> to vector<2x384xf32>
    %52 = arith.negf %51 : vector<2x384xf32>
    %53 = math.exp %52 : vector<2x384xf32>
    %cst_14 = arith.constant 1.000000e+00 : f32
    %54 = vector.broadcast %cst_14 : f32 to vector<2x384xf32>
    %55 = arith.addf %54, %53 : vector<2x384xf32>
    %56 = arith.divf %54, %55 : vector<2x384xf32>
    %57 = vector.extract_strided_slice %56 {offsets = [0, 0], sizes = [2, 128], strides = [1, 1]} : vector<2x384xf32> to vector<2x128xf32>
    %58 = vector.extract_strided_slice %56 {offsets = [0, 128], sizes = [2, 128], strides = [1, 1]} : vector<2x384xf32> to vector<2x128xf32>
    %59 = vector.extract_strided_slice %56 {offsets = [0, 256], sizes = [2, 128], strides = [1, 1]} : vector<2x384xf32> to vector<2x128xf32>
    %60 = vector.extract_strided_slice %50 {offsets = [0, 384], sizes = [2, 128], strides = [1, 1]} : vector<2x512xf32> to vector<2x128xf32>
    %61 = math.tanh %60 : vector<2x128xf32>
    %62 = arith.mulf %58, %24 : vector<2x128xf32>
    %63 = arith.mulf %57, %61 : vector<2x128xf32>
    %64 = arith.addf %62, %63 : vector<2x128xf32>
    %65 = math.tanh %64 : vector<2x128xf32>
    %66 = arith.mulf %59, %65 : vector<2x128xf32>
    %67 = tpu.concatenate %66, %45 in 1 : vector<2x128xf32>, vector<2x128xf32> -> vector<2x256xf32>
    %cst_15 = arith.constant dense<0.000000e+00> : vector<2x512xf32>
    %68 = tpu.matmul %67, %1, %cst_15 {dimension_numbers = #tpu.dot_dimension_numbers<[1], [0], [0], [1], [0, 0, 1, 1], [], []>} : vector<2x256xf32>, vector<256x512xf32>, vector<2x512xf32> -> vector<2x512xf32>
    %69 = arith.addf %68, %4 : vector<2x512xf32>
    %70 = vector.extract_strided_slice %69 {offsets = [0, 0], sizes = [2, 384], strides = [1, 1]} : vector<2x512xf32> to vector<2x384xf32>
    %71 = arith.negf %70 : vector<2x384xf32>
    %72 = math.exp %71 : vector<2x384xf32>
    %cst_16 = arith.constant 1.000000e+00 : f32
    %73 = vector.broadcast %cst_16 : f32 to vector<2x384xf32>
    %74 = arith.addf %73, %72 : vector<2x384xf32>
    %75 = arith.divf %73, %74 : vector<2x384xf32>
    %76 = vector.extract_strided_slice %75 {offsets = [0, 0], sizes = [2, 128], strides = [1, 1]} : vector<2x384xf32> to vector<2x128xf32>
    %77 = vector.extract_strided_slice %75 {offsets = [0, 128], sizes = [2, 128], strides = [1, 1]} : vector<2x384xf32> to vector<2x128xf32>
    %78 = vector.extract_strided_slice %75 {offsets = [0, 256], sizes = [2, 128], strides = [1, 1]} : vector<2x384xf32> to vector<2x128xf32>
    %79 = vector.extract_strided_slice %69 {offsets = [0, 384], sizes = [2, 128], strides = [1, 1]} : vector<2x512xf32> to vector<2x128xf32>
    %80 = math.tanh %79 : vector<2x128xf32>
    %81 = arith.mulf %77, %43 : vector<2x128xf32>
    %82 = arith.mulf %76, %80 : vector<2x128xf32>
    %83 = arith.addf %81, %82 : vector<2x128xf32>
    %84 = math.tanh %83 : vector<2x128xf32>
    %85 = arith.mulf %78, %84 : vector<2x128xf32>
    %c2_i32 = arith.constant 2 : i32
    %86 = arith.index_cast %c2_i32 : i32 to index
    %c0_17 = arith.constant 0 : index
    %c0_18 = arith.constant 0 : index
    %87 = vector.load %arg0[%86, %c0_17, %c0_18] : memref<8x2x512xf32, #tpu.memory_space<vmem>>, vector<1x2x512xf32>
    %88 = vector.shape_cast %87 : vector<1x2x512xf32> to vector<2x512xf32>
    %cst_19 = arith.constant dense<0.000000e+00> : vector<2x512xf32>
    %89 = tpu.matmul %66, %0, %cst_19 {dimension_numbers = #tpu.dot_dimension_numbers<[1], [0], [0], [1], [0, 0, 1, 1], [], []>} : vector<2x128xf32>, vector<128x512xf32>, vector<2x512xf32> -> vector<2x512xf32>
    %90 = arith.addf %88, %89 : vector<2x512xf32>
    %91 = vector.extract_strided_slice %90 {offsets = [0, 0], sizes = [2, 384], strides = [1, 1]} : vector<2x512xf32> to vector<2x384xf32>
    %92 = arith.negf %91 : vector<2x384xf32>
    %93 = math.exp %92 : vector<2x384xf32>
    %cst_20 = arith.constant 1.000000e+00 : f32
    %94 = vector.broadcast %cst_20 : f32 to vector<2x384xf32>
    %95 = arith.addf %94, %93 : vector<2x384xf32>
    %96 = arith.divf %94, %95 : vector<2x384xf32>
    %97 = vector.extract_strided_slice %96 {offsets = [0, 0], sizes = [2, 128], strides = [1, 1]} : vector<2x384xf32> to vector<2x128xf32>
    %98 = vector.extract_strided_slice %96 {offsets = [0, 128], sizes = [2, 128], strides = [1, 1]} : vector<2x384xf32> to vector<2x128xf32>
    %99 = vector.extract_strided_slice %96 {offsets = [0, 256], sizes = [2, 128], strides = [1, 1]} : vector<2x384xf32> to vector<2x128xf32>
    %100 = vector.extract_strided_slice %90 {offsets = [0, 384], sizes = [2, 128], strides = [1, 1]} : vector<2x512xf32> to vector<2x128xf32>
    %101 = math.tanh %100 : vector<2x128xf32>
    %102 = arith.mulf %98, %64 : vector<2x128xf32>
    %103 = arith.mulf %97, %101 : vector<2x128xf32>
    %104 = arith.addf %102, %103 : vector<2x128xf32>
    %105 = math.tanh %104 : vector<2x128xf32>
    %106 = arith.mulf %99, %105 : vector<2x128xf32>
    %107 = tpu.concatenate %106, %85 in 1 : vector<2x128xf32>, vector<2x128xf32> -> vector<2x256xf32>
    %cst_21 = arith.constant dense<0.000000e+00> : vector<2x512xf32>
    %108 = tpu.matmul %107, %1, %cst_21 {dimension_numbers = #tpu.dot_dimension_numbers<[1], [0], [0], [1], [0, 0, 1, 1], [], []>} : vector<2x256xf32>, vector<256x512xf32>, vector<2x512xf32> -> vector<2x512xf32>
    %109 = arith.addf %108, %4 : vector<2x512xf32>
    %110 = vector.extract_strided_slice %109 {offsets = [0, 0], sizes = [2, 384], strides = [1, 1]} : vector<2x512xf32> to vector<2x384xf32>
    %111 = arith.negf %110 : vector<2x384xf32>
    %112 = math.exp %111 : vector<2x384xf32>
    %cst_22 = arith.constant 1.000000e+00 : f32
    %113 = vector.broadcast %cst_22 : f32 to vector<2x384xf32>
    %114 = arith.addf %113, %112 : vector<2x384xf32>
    %115 = arith.divf %113, %114 : vector<2x384xf32>
    %116 = vector.extract_strided_slice %115 {offsets = [0, 0], sizes = [2, 128], strides = [1, 1]} : vector<2x384xf32> to vector<2x128xf32>
    %117 = vector.extract_strided_slice %115 {offsets = [0, 128], sizes = [2, 128], strides = [1, 1]} : vector<2x384xf32> to vector<2x128xf32>
    %118 = vector.extract_strided_slice %115 {offsets = [0, 256], sizes = [2, 128], strides = [1, 1]} : vector<2x384xf32> to vector<2x128xf32>
    %119 = vector.extract_strided_slice %109 {offsets = [0, 384], sizes = [2, 128], strides = [1, 1]} : vector<2x512xf32> to vector<2x128xf32>
    %120 = math.tanh %119 : vector<2x128xf32>
    %121 = arith.mulf %117, %83 : vector<2x128xf32>
    %122 = arith.mulf %116, %120 : vector<2x128xf32>
    %123 = arith.addf %121, %122 : vector<2x128xf32>
    %124 = math.tanh %123 : vector<2x128xf32>
    %125 = arith.mulf %118, %124 : vector<2x128xf32>
    %c3_i32 = arith.constant 3 : i32
    %126 = arith.index_cast %c3_i32 : i32 to index
    %c0_23 = arith.constant 0 : index
    %c0_24 = arith.constant 0 : index
    %127 = vector.load %arg0[%126, %c0_23, %c0_24] : memref<8x2x512xf32, #tpu.memory_space<vmem>>, vector<1x2x512xf32>
    %128 = vector.shape_cast %127 : vector<1x2x512xf32> to vector<2x512xf32>
    %cst_25 = arith.constant dense<0.000000e+00> : vector<2x512xf32>
    %129 = tpu.matmul %106, %0, %cst_25 {dimension_numbers = #tpu.dot_dimension_numbers<[1], [0], [0], [1], [0, 0, 1, 1], [], []>} : vector<2x128xf32>, vector<128x512xf32>, vector<2x512xf32> -> vector<2x512xf32>
    %130 = arith.addf %128, %129 : vector<2x512xf32>
    %131 = vector.extract_strided_slice %130 {offsets = [0, 0], sizes = [2, 384], strides = [1, 1]} : vector<2x512xf32> to vector<2x384xf32>
    %132 = arith.negf %131 : vector<2x384xf32>
    %133 = math.exp %132 : vector<2x384xf32>
    %cst_26 = arith.constant 1.000000e+00 : f32
    %134 = vector.broadcast %cst_26 : f32 to vector<2x384xf32>
    %135 = arith.addf %134, %133 : vector<2x384xf32>
    %136 = arith.divf %134, %135 : vector<2x384xf32>
    %137 = vector.extract_strided_slice %136 {offsets = [0, 0], sizes = [2, 128], strides = [1, 1]} : vector<2x384xf32> to vector<2x128xf32>
    %138 = vector.extract_strided_slice %136 {offsets = [0, 128], sizes = [2, 128], strides = [1, 1]} : vector<2x384xf32> to vector<2x128xf32>
    %139 = vector.extract_strided_slice %136 {offsets = [0, 256], sizes = [2, 128], strides = [1, 1]} : vector<2x384xf32> to vector<2x128xf32>
    %140 = vector.extract_strided_slice %130 {offsets = [0, 384], sizes = [2, 128], strides = [1, 1]} : vector<2x512xf32> to vector<2x128xf32>
    %141 = math.tanh %140 : vector<2x128xf32>
    %142 = arith.mulf %138, %104 : vector<2x128xf32>
    %143 = arith.mulf %137, %141 : vector<2x128xf32>
    %144 = arith.addf %142, %143 : vector<2x128xf32>
    %145 = math.tanh %144 : vector<2x128xf32>
    %146 = arith.mulf %139, %145 : vector<2x128xf32>
    %147 = tpu.concatenate %146, %125 in 1 : vector<2x128xf32>, vector<2x128xf32> -> vector<2x256xf32>
    %cst_27 = arith.constant dense<0.000000e+00> : vector<2x512xf32>
    %148 = tpu.matmul %147, %1, %cst_27 {dimension_numbers = #tpu.dot_dimension_numbers<[1], [0], [0], [1], [0, 0, 1, 1], [], []>} : vector<2x256xf32>, vector<256x512xf32>, vector<2x512xf32> -> vector<2x512xf32>
    %149 = arith.addf %148, %4 : vector<2x512xf32>
    %150 = vector.extract_strided_slice %149 {offsets = [0, 0], sizes = [2, 384], strides = [1, 1]} : vector<2x512xf32> to vector<2x384xf32>
    %151 = arith.negf %150 : vector<2x384xf32>
    %152 = math.exp %151 : vector<2x384xf32>
    %cst_28 = arith.constant 1.000000e+00 : f32
    %153 = vector.broadcast %cst_28 : f32 to vector<2x384xf32>
    %154 = arith.addf %153, %152 : vector<2x384xf32>
    %155 = arith.divf %153, %154 : vector<2x384xf32>
    %156 = vector.extract_strided_slice %155 {offsets = [0, 0], sizes = [2, 128], strides = [1, 1]} : vector<2x384xf32> to vector<2x128xf32>
    %157 = vector.extract_strided_slice %155 {offsets = [0, 128], sizes = [2, 128], strides = [1, 1]} : vector<2x384xf32> to vector<2x128xf32>
    %158 = vector.extract_strided_slice %155 {offsets = [0, 256], sizes = [2, 128], strides = [1, 1]} : vector<2x384xf32> to vector<2x128xf32>
    %159 = vector.extract_strided_slice %149 {offsets = [0, 384], sizes = [2, 128], strides = [1, 1]} : vector<2x512xf32> to vector<2x128xf32>
    %160 = math.tanh %159 : vector<2x128xf32>
    %161 = arith.mulf %157, %123 : vector<2x128xf32>
    %162 = arith.mulf %156, %160 : vector<2x128xf32>
    %163 = arith.addf %161, %162 : vector<2x128xf32>
    %164 = math.tanh %163 : vector<2x128xf32>
    %165 = arith.mulf %158, %164 : vector<2x128xf32>
    %c4_i32 = arith.constant 4 : i32
    %166 = arith.index_cast %c4_i32 : i32 to index
    %c0_29 = arith.constant 0 : index
    %c0_30 = arith.constant 0 : index
    %167 = vector.load %arg0[%166, %c0_29, %c0_30] : memref<8x2x512xf32, #tpu.memory_space<vmem>>, vector<1x2x512xf32>
    %168 = vector.shape_cast %167 : vector<1x2x512xf32> to vector<2x512xf32>
    %cst_31 = arith.constant dense<0.000000e+00> : vector<2x512xf32>
    %169 = tpu.matmul %146, %0, %cst_31 {dimension_numbers = #tpu.dot_dimension_numbers<[1], [0], [0], [1], [0, 0, 1, 1], [], []>} : vector<2x128xf32>, vector<128x512xf32>, vector<2x512xf32> -> vector<2x512xf32>
    %170 = arith.addf %168, %169 : vector<2x512xf32>
    %171 = vector.extract_strided_slice %170 {offsets = [0, 0], sizes = [2, 384], strides = [1, 1]} : vector<2x512xf32> to vector<2x384xf32>
    %172 = arith.negf %171 : vector<2x384xf32>
    %173 = math.exp %172 : vector<2x384xf32>
    %cst_32 = arith.constant 1.000000e+00 : f32
    %174 = vector.broadcast %cst_32 : f32 to vector<2x384xf32>
    %175 = arith.addf %174, %173 : vector<2x384xf32>
    %176 = arith.divf %174, %175 : vector<2x384xf32>
    %177 = vector.extract_strided_slice %176 {offsets = [0, 0], sizes = [2, 128], strides = [1, 1]} : vector<2x384xf32> to vector<2x128xf32>
    %178 = vector.extract_strided_slice %176 {offsets = [0, 128], sizes = [2, 128], strides = [1, 1]} : vector<2x384xf32> to vector<2x128xf32>
    %179 = vector.extract_strided_slice %176 {offsets = [0, 256], sizes = [2, 128], strides = [1, 1]} : vector<2x384xf32> to vector<2x128xf32>
    %180 = vector.extract_strided_slice %170 {offsets = [0, 384], sizes = [2, 128], strides = [1, 1]} : vector<2x512xf32> to vector<2x128xf32>
    %181 = math.tanh %180 : vector<2x128xf32>
    %182 = arith.mulf %178, %144 : vector<2x128xf32>
    %183 = arith.mulf %177, %181 : vector<2x128xf32>
    %184 = arith.addf %182, %183 : vector<2x128xf32>
    %185 = math.tanh %184 : vector<2x128xf32>
    %186 = arith.mulf %179, %185 : vector<2x128xf32>
    %187 = tpu.concatenate %186, %165 in 1 : vector<2x128xf32>, vector<2x128xf32> -> vector<2x256xf32>
    %cst_33 = arith.constant dense<0.000000e+00> : vector<2x512xf32>
    %188 = tpu.matmul %187, %1, %cst_33 {dimension_numbers = #tpu.dot_dimension_numbers<[1], [0], [0], [1], [0, 0, 1, 1], [], []>} : vector<2x256xf32>, vector<256x512xf32>, vector<2x512xf32> -> vector<2x512xf32>
    %189 = arith.addf %188, %4 : vector<2x512xf32>
    %190 = vector.extract_strided_slice %189 {offsets = [0, 0], sizes = [2, 384], strides = [1, 1]} : vector<2x512xf32> to vector<2x384xf32>
    %191 = arith.negf %190 : vector<2x384xf32>
    %192 = math.exp %191 : vector<2x384xf32>
    %cst_34 = arith.constant 1.000000e+00 : f32
    %193 = vector.broadcast %cst_34 : f32 to vector<2x384xf32>
    %194 = arith.addf %193, %192 : vector<2x384xf32>
    %195 = arith.divf %193, %194 : vector<2x384xf32>
    %196 = vector.extract_strided_slice %195 {offsets = [0, 0], sizes = [2, 128], strides = [1, 1]} : vector<2x384xf32> to vector<2x128xf32>
    %197 = vector.extract_strided_slice %195 {offsets = [0, 128], sizes = [2, 128], strides = [1, 1]} : vector<2x384xf32> to vector<2x128xf32>
    %198 = vector.extract_strided_slice %195 {offsets = [0, 256], sizes = [2, 128], strides = [1, 1]} : vector<2x384xf32> to vector<2x128xf32>
    %199 = vector.extract_strided_slice %189 {offsets = [0, 384], sizes = [2, 128], strides = [1, 1]} : vector<2x512xf32> to vector<2x128xf32>
    %200 = math.tanh %199 : vector<2x128xf32>
    %201 = arith.mulf %197, %163 : vector<2x128xf32>
    %202 = arith.mulf %196, %200 : vector<2x128xf32>
    %203 = arith.addf %201, %202 : vector<2x128xf32>
    %204 = math.tanh %203 : vector<2x128xf32>
    %205 = arith.mulf %198, %204 : vector<2x128xf32>
    %c5_i32 = arith.constant 5 : i32
    %206 = arith.index_cast %c5_i32 : i32 to index
    %c0_35 = arith.constant 0 : index
    %c0_36 = arith.constant 0 : index
    %207 = vector.load %arg0[%206, %c0_35, %c0_36] : memref<8x2x512xf32, #tpu.memory_space<vmem>>, vector<1x2x512xf32>
    %208 = vector.shape_cast %207 : vector<1x2x512xf32> to vector<2x512xf32>
    %cst_37 = arith.constant dense<0.000000e+00> : vector<2x512xf32>
    %209 = tpu.matmul %186, %0, %cst_37 {dimension_numbers = #tpu.dot_dimension_numbers<[1], [0], [0], [1], [0, 0, 1, 1], [], []>} : vector<2x128xf32>, vector<128x512xf32>, vector<2x512xf32> -> vector<2x512xf32>
    %210 = arith.addf %208, %209 : vector<2x512xf32>
    %211 = vector.extract_strided_slice %210 {offsets = [0, 0], sizes = [2, 384], strides = [1, 1]} : vector<2x512xf32> to vector<2x384xf32>
    %212 = arith.negf %211 : vector<2x384xf32>
    %213 = math.exp %212 : vector<2x384xf32>
    %cst_38 = arith.constant 1.000000e+00 : f32
    %214 = vector.broadcast %cst_38 : f32 to vector<2x384xf32>
    %215 = arith.addf %214, %213 : vector<2x384xf32>
    %216 = arith.divf %214, %215 : vector<2x384xf32>
    %217 = vector.extract_strided_slice %216 {offsets = [0, 0], sizes = [2, 128], strides = [1, 1]} : vector<2x384xf32> to vector<2x128xf32>
    %218 = vector.extract_strided_slice %216 {offsets = [0, 128], sizes = [2, 128], strides = [1, 1]} : vector<2x384xf32> to vector<2x128xf32>
    %219 = vector.extract_strided_slice %216 {offsets = [0, 256], sizes = [2, 128], strides = [1, 1]} : vector<2x384xf32> to vector<2x128xf32>
    %220 = vector.extract_strided_slice %210 {offsets = [0, 384], sizes = [2, 128], strides = [1, 1]} : vector<2x512xf32> to vector<2x128xf32>
    %221 = math.tanh %220 : vector<2x128xf32>
    %222 = arith.mulf %218, %184 : vector<2x128xf32>
    %223 = arith.mulf %217, %221 : vector<2x128xf32>
    %224 = arith.addf %222, %223 : vector<2x128xf32>
    %225 = math.tanh %224 : vector<2x128xf32>
    %226 = arith.mulf %219, %225 : vector<2x128xf32>
    %227 = tpu.concatenate %226, %205 in 1 : vector<2x128xf32>, vector<2x128xf32> -> vector<2x256xf32>
    %cst_39 = arith.constant dense<0.000000e+00> : vector<2x512xf32>
    %228 = tpu.matmul %227, %1, %cst_39 {dimension_numbers = #tpu.dot_dimension_numbers<[1], [0], [0], [1], [0, 0, 1, 1], [], []>} : vector<2x256xf32>, vector<256x512xf32>, vector<2x512xf32> -> vector<2x512xf32>
    %229 = arith.addf %228, %4 : vector<2x512xf32>
    %230 = vector.extract_strided_slice %229 {offsets = [0, 0], sizes = [2, 384], strides = [1, 1]} : vector<2x512xf32> to vector<2x384xf32>
    %231 = arith.negf %230 : vector<2x384xf32>
    %232 = math.exp %231 : vector<2x384xf32>
    %cst_40 = arith.constant 1.000000e+00 : f32
    %233 = vector.broadcast %cst_40 : f32 to vector<2x384xf32>
    %234 = arith.addf %233, %232 : vector<2x384xf32>
    %235 = arith.divf %233, %234 : vector<2x384xf32>
    %236 = vector.extract_strided_slice %235 {offsets = [0, 0], sizes = [2, 128], strides = [1, 1]} : vector<2x384xf32> to vector<2x128xf32>
    %237 = vector.extract_strided_slice %235 {offsets = [0, 128], sizes = [2, 128], strides = [1, 1]} : vector<2x384xf32> to vector<2x128xf32>
    %238 = vector.extract_strided_slice %235 {offsets = [0, 256], sizes = [2, 128], strides = [1, 1]} : vector<2x384xf32> to vector<2x128xf32>
    %239 = vector.extract_strided_slice %229 {offsets = [0, 384], sizes = [2, 128], strides = [1, 1]} : vector<2x512xf32> to vector<2x128xf32>
    %240 = math.tanh %239 : vector<2x128xf32>
    %241 = arith.mulf %237, %203 : vector<2x128xf32>
    %242 = arith.mulf %236, %240 : vector<2x128xf32>
    %243 = arith.addf %241, %242 : vector<2x128xf32>
    %244 = math.tanh %243 : vector<2x128xf32>
    %245 = arith.mulf %238, %244 : vector<2x128xf32>
    %c6_i32 = arith.constant 6 : i32
    %246 = arith.index_cast %c6_i32 : i32 to index
    %c0_41 = arith.constant 0 : index
    %c0_42 = arith.constant 0 : index
    %247 = vector.load %arg0[%246, %c0_41, %c0_42] : memref<8x2x512xf32, #tpu.memory_space<vmem>>, vector<1x2x512xf32>
    %248 = vector.shape_cast %247 : vector<1x2x512xf32> to vector<2x512xf32>
    %cst_43 = arith.constant dense<0.000000e+00> : vector<2x512xf32>
    %249 = tpu.matmul %226, %0, %cst_43 {dimension_numbers = #tpu.dot_dimension_numbers<[1], [0], [0], [1], [0, 0, 1, 1], [], []>} : vector<2x128xf32>, vector<128x512xf32>, vector<2x512xf32> -> vector<2x512xf32>
    %250 = arith.addf %248, %249 : vector<2x512xf32>
    %251 = vector.extract_strided_slice %250 {offsets = [0, 0], sizes = [2, 384], strides = [1, 1]} : vector<2x512xf32> to vector<2x384xf32>
    %252 = arith.negf %251 : vector<2x384xf32>
    %253 = math.exp %252 : vector<2x384xf32>
    %cst_44 = arith.constant 1.000000e+00 : f32
    %254 = vector.broadcast %cst_44 : f32 to vector<2x384xf32>
    %255 = arith.addf %254, %253 : vector<2x384xf32>
    %256 = arith.divf %254, %255 : vector<2x384xf32>
    %257 = vector.extract_strided_slice %256 {offsets = [0, 0], sizes = [2, 128], strides = [1, 1]} : vector<2x384xf32> to vector<2x128xf32>
    %258 = vector.extract_strided_slice %256 {offsets = [0, 128], sizes = [2, 128], strides = [1, 1]} : vector<2x384xf32> to vector<2x128xf32>
    %259 = vector.extract_strided_slice %256 {offsets = [0, 256], sizes = [2, 128], strides = [1, 1]} : vector<2x384xf32> to vector<2x128xf32>
    %260 = vector.extract_strided_slice %250 {offsets = [0, 384], sizes = [2, 128], strides = [1, 1]} : vector<2x512xf32> to vector<2x128xf32>
    %261 = math.tanh %260 : vector<2x128xf32>
    %262 = arith.mulf %258, %224 : vector<2x128xf32>
    %263 = arith.mulf %257, %261 : vector<2x128xf32>
    %264 = arith.addf %262, %263 : vector<2x128xf32>
    %265 = math.tanh %264 : vector<2x128xf32>
    %266 = arith.mulf %259, %265 : vector<2x128xf32>
    %267 = tpu.concatenate %266, %245 in 1 : vector<2x128xf32>, vector<2x128xf32> -> vector<2x256xf32>
    %cst_45 = arith.constant dense<0.000000e+00> : vector<2x512xf32>
    %268 = tpu.matmul %267, %1, %cst_45 {dimension_numbers = #tpu.dot_dimension_numbers<[1], [0], [0], [1], [0, 0, 1, 1], [], []>} : vector<2x256xf32>, vector<256x512xf32>, vector<2x512xf32> -> vector<2x512xf32>
    %269 = arith.addf %268, %4 : vector<2x512xf32>
    %270 = vector.extract_strided_slice %269 {offsets = [0, 0], sizes = [2, 384], strides = [1, 1]} : vector<2x512xf32> to vector<2x384xf32>
    %271 = arith.negf %270 : vector<2x384xf32>
    %272 = math.exp %271 : vector<2x384xf32>
    %cst_46 = arith.constant 1.000000e+00 : f32
    %273 = vector.broadcast %cst_46 : f32 to vector<2x384xf32>
    %274 = arith.addf %273, %272 : vector<2x384xf32>
    %275 = arith.divf %273, %274 : vector<2x384xf32>
    %276 = vector.extract_strided_slice %275 {offsets = [0, 0], sizes = [2, 128], strides = [1, 1]} : vector<2x384xf32> to vector<2x128xf32>
    %277 = vector.extract_strided_slice %275 {offsets = [0, 128], sizes = [2, 128], strides = [1, 1]} : vector<2x384xf32> to vector<2x128xf32>
    %278 = vector.extract_strided_slice %275 {offsets = [0, 256], sizes = [2, 128], strides = [1, 1]} : vector<2x384xf32> to vector<2x128xf32>
    %279 = vector.extract_strided_slice %269 {offsets = [0, 384], sizes = [2, 128], strides = [1, 1]} : vector<2x512xf32> to vector<2x128xf32>
    %280 = math.tanh %279 : vector<2x128xf32>
    %281 = arith.mulf %277, %243 : vector<2x128xf32>
    %282 = arith.mulf %276, %280 : vector<2x128xf32>
    %283 = arith.addf %281, %282 : vector<2x128xf32>
    %284 = math.tanh %283 : vector<2x128xf32>
    %285 = arith.mulf %278, %284 : vector<2x128xf32>
    %c7_i32 = arith.constant 7 : i32
    %286 = arith.index_cast %c7_i32 : i32 to index
    %c0_47 = arith.constant 0 : index
    %c0_48 = arith.constant 0 : index
    %287 = vector.load %arg0[%286, %c0_47, %c0_48] : memref<8x2x512xf32, #tpu.memory_space<vmem>>, vector<1x2x512xf32>
    %288 = vector.shape_cast %287 : vector<1x2x512xf32> to vector<2x512xf32>
    %cst_49 = arith.constant dense<0.000000e+00> : vector<2x512xf32>
    %289 = tpu.matmul %266, %0, %cst_49 {dimension_numbers = #tpu.dot_dimension_numbers<[1], [0], [0], [1], [0, 0, 1, 1], [], []>} : vector<2x128xf32>, vector<128x512xf32>, vector<2x512xf32> -> vector<2x512xf32>
    %290 = arith.addf %288, %289 : vector<2x512xf32>
    %291 = vector.extract_strided_slice %290 {offsets = [0, 0], sizes = [2, 384], strides = [1, 1]} : vector<2x512xf32> to vector<2x384xf32>
    %292 = arith.negf %291 : vector<2x384xf32>
    %293 = math.exp %292 : vector<2x384xf32>
    %cst_50 = arith.constant 1.000000e+00 : f32
    %294 = vector.broadcast %cst_50 : f32 to vector<2x384xf32>
    %295 = arith.addf %294, %293 : vector<2x384xf32>
    %296 = arith.divf %294, %295 : vector<2x384xf32>
    %297 = vector.extract_strided_slice %296 {offsets = [0, 0], sizes = [2, 128], strides = [1, 1]} : vector<2x384xf32> to vector<2x128xf32>
    %298 = vector.extract_strided_slice %296 {offsets = [0, 128], sizes = [2, 128], strides = [1, 1]} : vector<2x384xf32> to vector<2x128xf32>
    %299 = vector.extract_strided_slice %296 {offsets = [0, 256], sizes = [2, 128], strides = [1, 1]} : vector<2x384xf32> to vector<2x128xf32>
    %300 = vector.extract_strided_slice %290 {offsets = [0, 384], sizes = [2, 128], strides = [1, 1]} : vector<2x512xf32> to vector<2x128xf32>
    %301 = math.tanh %300 : vector<2x128xf32>
    %302 = arith.mulf %298, %264 : vector<2x128xf32>
    %303 = arith.mulf %297, %301 : vector<2x128xf32>
    %304 = arith.addf %302, %303 : vector<2x128xf32>
    %305 = math.tanh %304 : vector<2x128xf32>
    %306 = arith.mulf %299, %305 : vector<2x128xf32>
    %307 = tpu.concatenate %306, %285 in 1 : vector<2x128xf32>, vector<2x128xf32> -> vector<2x256xf32>
    %cst_51 = arith.constant dense<0.000000e+00> : vector<2x512xf32>
    %308 = tpu.matmul %307, %1, %cst_51 {dimension_numbers = #tpu.dot_dimension_numbers<[1], [0], [0], [1], [0, 0, 1, 1], [], []>} : vector<2x256xf32>, vector<256x512xf32>, vector<2x512xf32> -> vector<2x512xf32>
    %309 = arith.addf %308, %4 : vector<2x512xf32>
    %310 = vector.extract_strided_slice %309 {offsets = [0, 0], sizes = [2, 384], strides = [1, 1]} : vector<2x512xf32> to vector<2x384xf32>
    %311 = arith.negf %310 : vector<2x384xf32>
    %312 = math.exp %311 : vector<2x384xf32>
    %cst_52 = arith.constant 1.000000e+00 : f32
    %313 = vector.broadcast %cst_52 : f32 to vector<2x384xf32>
    %314 = arith.addf %313, %312 : vector<2x384xf32>
    %315 = arith.divf %313, %314 : vector<2x384xf32>
    %316 = vector.extract_strided_slice %315 {offsets = [0, 0], sizes = [2, 128], strides = [1, 1]} : vector<2x384xf32> to vector<2x128xf32>
    %317 = vector.extract_strided_slice %315 {offsets = [0, 128], sizes = [2, 128], strides = [1, 1]} : vector<2x384xf32> to vector<2x128xf32>
    %318 = vector.extract_strided_slice %315 {offsets = [0, 256], sizes = [2, 128], strides = [1, 1]} : vector<2x384xf32> to vector<2x128xf32>
    %319 = vector.extract_strided_slice %309 {offsets = [0, 384], sizes = [2, 128], strides = [1, 1]} : vector<2x512xf32> to vector<2x128xf32>
    %320 = math.tanh %319 : vector<2x128xf32>
    %321 = arith.mulf %317, %283 : vector<2x128xf32>
    %322 = arith.mulf %316, %320 : vector<2x128xf32>
    %323 = arith.addf %321, %322 : vector<2x128xf32>
    %324 = math.tanh %323 : vector<2x128xf32>
    %325 = arith.mulf %318, %324 : vector<2x128xf32>
    %c8_i32 = arith.constant 8 : i32
    %c0_53 = arith.constant 0 : index
    %c0_54 = arith.constant 0 : index
    %326 = vector.load %arg4[%c0_53, %c0_54] : memref<128x2xf32, #tpu.memory_space<vmem>>, vector<128x2xf32>
    %cst_55 = arith.constant dense<0.000000e+00> : vector<2x2xf32>
    %327 = tpu.matmul %325, %326, %cst_55 {dimension_numbers = #tpu.dot_dimension_numbers<[1], [0], [0], [1], [0, 0, 1, 1], [], []>} : vector<2x128xf32>, vector<128x2xf32>, vector<2x2xf32> -> vector<2x2xf32>
    %c0_56 = arith.constant 0 : index
    %c0_57 = arith.constant 0 : index
    %328 = vector.load %arg5[%c0_56, %c0_57] : memref<1x2xf32, #tpu.memory_space<vmem>>, vector<1x2xf32>
    %329 = vector.broadcast %328 : vector<1x2xf32> to vector<2x2xf32>
    %330 = arith.addf %327, %329 : vector<2x2xf32>
    %c0_58 = arith.constant 0 : index
    %c0_59 = arith.constant 0 : index
    %331 = vector.load %arg6[%c0_58, %c0_59] : memref<2x2xf32, #tpu.memory_space<vmem>>, vector<2x2xf32>
    tpu.vector_store %arg6[%c0_58, %c0_59], %330 {strides = array<i32>} : memref<2x2xf32, #tpu.memory_space<vmem>>, vector<2x2xf32>,
    return
  }
}

</mosaic_0001>

<llo_original>
// kernel: tpu_custom_call.1
$region0: #{tpu_custom_call.1}
  #allocation0 [shape = 'u32[]', space=smem, size = 0x4, offset = 0x4, fixed_abs, tag = 'smem constant byte address 0x4 - core index']
  #allocation1 [shape = 'u32[144,128]{1,0:T(1,128)}', space=vmem, size = 0x12000, scoped, tag = 'internal scratch']
  %s0 = inlined_call_operand.vmem [shape: f32[8,2,512], index: 0, kind: input, shape index: {}]
  %s1 = inlined_call_operand.hbm [shape: f32[128,512], index: 1, kind: input, shape index: {}]
  %s2 = inlined_call_operand.hbm [shape: f32[256,512], index: 2, kind: input, shape index: {}]
  %s3 = inlined_call_operand.vmem [shape: f32[1,512], index: 3, kind: input, shape index: {}]
  %s4 = inlined_call_operand.vmem [shape: f32[128,2], index: 4, kind: input, shape index: {}]
  %s5 = inlined_call_operand.vmem [shape: f32[1,2], index: 5, kind: input, shape index: {}]
  %s6 = inlined_call_operand.hbm [shape: f32[2,2], index: 6, kind: output, shape index: {}]
  %s7 = sld [smem:[#allocation0]]
  $region42: #{tpu_custom_call.1} parent=0
    _
  %s9 = ssub.s32 1, %s7
  %s10 = scalar_select 0, %s9, %s7
  $region1: #{tpu_custom_call.1} parent=0
    #allocation2 [shape = 'u8[262144]{0}', space=vmem, size = 0x40000, scoped, tag = 'input window, operand 1, single buffered']
    #allocation3 [shape = 's32[1]{0}', space=sflag, size = 0x4, scoped, tag = 'scoped memory for tpu_custom_call.1']
    #allocation4 [shape = 's32[1]{0}', space=sflag, size = 0x4, scoped, tag = 'scoped memory for tpu_custom_call.1']
    #allocation5 [shape = 'u8[524288]{0}', space=vmem, size = 0x80000, scoped, tag = 'input window, operand 2, single buffered']
    #allocation6 [shape = 's32[1]{0}', space=sflag, size = 0x4, scoped, tag = 'scoped memory for tpu_custom_call.1']
    #allocation7 [shape = 'u8[1024]{0}', space=vmem, size = 0x400, scoped, tag = 'output window, operand 0, single buffered']
    %11 = vsyncpa [#allocation3], 0
    %12 = vsyncpa [#allocation6], 0
    %13 = vsyncpa [#allocation4], 0
    // Predicated region
    $region2: #{tpu_custom_call.1} parent=1 // pred_check
      _
    $region3: #{tpu_custom_call.1} parent=1 // pred_check_branch
      %15 = sbr.rel (0) target = $region5
    $region4: #{tpu_custom_call.1} parent=1 // pred_region
      _
    $region5: #{tpu_custom_call.1} parent=1 // pred_fallthru
      _
    // Predicated region
    $region6: #{tpu_custom_call.1} parent=1 // pred_check
      _
    $region7: #{tpu_custom_call.1} parent=1 // pred_check_branch
      %17 = sbr.rel (0) target = $region9
    $region8: #{tpu_custom_call.1} parent=1 // pred_region
      %s19 = ssub.s32 8192, 8192
      %20 = vsyncadd [#allocation3], %s19
      %s21 = sshll.u32 [#allocation2], 4
      %s22 = int_to_ptr.vmem [resolvable:$true] %s21
      %27 = dma.hbm_to_vmem [thread:$0]  %s1, 8192, %s22, [#allocation3], 512, 512, 32
    $region9: #{tpu_custom_call.1} parent=1 // pred_fallthru
      _
    // Predicated region
    $region10: #{tpu_custom_call.1} parent=1 // pred_check
      _
    $region11: #{tpu_custom_call.1} parent=1 // pred_check_branch
      %29 = sbr.rel (0) target = $region13
    $region12: #{tpu_custom_call.1} parent=1 // pred_region
      %s31 = ssub.s32 16384, 16384
      %32 = vsyncadd [#allocation6], %s31
      %s33 = sshll.u32 [#allocation5], 4
      %s34 = int_to_ptr.vmem [resolvable:$true] %s33
      %39 = dma.hbm_to_vmem [thread:$0]  %s2, 16384, %s34, [#allocation6], 512, 512, 32
    $region13: #{tpu_custom_call.1} parent=1 // pred_fallthru
      _
    // Predicated region
    $region14: #{tpu_custom_call.1} parent=1 // pred_check
      _
    $region15: #{tpu_custom_call.1} parent=1 // pred_check_branch
      %41 = sbr.rel (0) target = $region17
    $region16: #{tpu_custom_call.1} parent=1 // pred_region
      _
    $region17: #{tpu_custom_call.1} parent=1 // pred_fallthru
      _
    // Predicated region
    $region18: #{tpu_custom_call.1} parent=1 // pred_check
      _
    $region19: #{tpu_custom_call.1} parent=1 // pred_check_branch
      %43 = sbr.rel (0) target = $region21
    $region20: #{tpu_custom_call.1} parent=1 // pred_region
      _
    $region21: #{tpu_custom_call.1} parent=1 // pred_fallthru
      _
    // Predicated region
    $region22: #{tpu_custom_call.1} parent=1 // pred_check
      _
    $region23: #{tpu_custom_call.1} parent=1 // pred_check_branch
      %45 = sbr.rel (0) target = $region25
    $region24: #{tpu_custom_call.1} parent=1 // pred_region
      _
    $region25: #{tpu_custom_call.1} parent=1 // pred_fallthru
      _
    // Predicated region
    $region26: #{tpu_custom_call.1} parent=1 // pred_check
      _
    $region27: #{tpu_custom_call.1} parent=1 // pred_check_branch
      %47 = sbr.rel (0) target = $region29
    $region28: #{tpu_custom_call.1} parent=1 // pred_region
      %48 = dma.done [#allocation3], 8192
    $region29: #{tpu_custom_call.1} parent=1 // pred_fallthru
      _
    // Predicated region
    $region30: #{tpu_custom_call.1} parent=1 // pred_check
      _
    $region31: #{tpu_custom_call.1} parent=1 // pred_check_branch
      %50 = sbr.rel (0) target = $region33
    $region32: #{tpu_custom_call.1} parent=1 // pred_region
      %51 = dma.done [#allocation6], 16384
    $region33: #{tpu_custom_call.1} parent=1 // pred_fallthru
      _
    %v52 = vld [vmem:[#allocation2] sm:$0xff]
    %v53 = vld [vmem:[#allocation2 + $0x8] sm:$0xff]
    %v54 = vld [vmem:[#allocation2 + $0x10] sm:$0xff]
    %v55 = vld [vmem:[#allocation2 + $0x18] sm:$0xff]
    %v56 = vld [vmem:[#allocation2 + $0x20] sm:$0xff]
    %v57 = vld [vmem:[#allocation2 + $0x28] sm:$0xff]
    %v58 = vld [vmem:[#allocation2 + $0x30] sm:$0xff]
    %v59 = vld [vmem:[#allocation2 + $0x38] sm:$0xff]
    %v60 = vld [vmem:[#allocation2 + $0x40] sm:$0xff]
    %v61 = vld [vmem:[#allocation2 + $0x48] sm:$0xff]
    %v62 = vld [vmem:[#allocation2 + $0x50] sm:$0xff]
    %v63 = vld [vmem:[#allocation2 + $0x58] sm:$0xff]
    %v64 = vld [vmem:[#allocation2 + $0x60] sm:$0xff]
    %v65 = vld [vmem:[#allocation2 + $0x68] sm:$0xff]
    %v66 = vld [vmem:[#allocation2 + $0x70] sm:$0xff]
    %v67 = vld [vmem:[#allocation2 + $0x78] sm:$0xff]
    %v68 = vld [vmem:[#allocation2 + $0x80] sm:$0xff]
    %v69 = vld [vmem:[#allocation2 + $0x88] sm:$0xff]
    %v70 = vld [vmem:[#allocation2 + $0x90] sm:$0xff]
    %v71 = vld [vmem:[#allocation2 + $0x98] sm:$0xff]
    %v72 = vld [vmem:[#allocation2 + $0xa0] sm:$0xff]
    %v73 = vld [vmem:[#allocation2 + $0xa8] sm:$0xff]
    %v74 = vld [vmem:[#allocation2 + $0xb0] sm:$0xff]
    %v75 = vld [vmem:[#allocation2 + $0xb8] sm:$0xff]
    %v76 = vld [vmem:[#allocation2 + $0xc0] sm:$0xff]
    %v77 = vld [vmem:[#allocation2 + $0xc8] sm:$0xff]
    %v78 = vld [vmem:[#allocation2 + $0xd0] sm:$0xff]
    %v79 = vld [vmem:[#allocation2 + $0xd8] sm:$0xff]
    %v80 = vld [vmem:[#allocation2 + $0xe0] sm:$0xff]
    %v81 = vld [vmem:[#allocation2 + $0xe8] sm:$0xff]
    %v82 = vld [vmem:[#allocation2 + $0xf0] sm:$0xff]
    %v83 = vld [vmem:[#allocation2 + $0xf8] sm:$0xff]
    %v84 = vld [vmem:[#allocation2 + $0x100] sm:$0xff]
    %v85 = vld [vmem:[#allocation2 + $0x108] sm:$0xff]
    %v86 = vld [vmem:[#allocation2 + $0x110] sm:$0xff]
    %v87 = vld [vmem:[#allocation2 + $0x118] sm:$0xff]
    %v88 = vld [vmem:[#allocation2 + $0x120] sm:$0xff]
    %v89 = vld [vmem:[#allocation2 + $0x128] sm:$0xff]
    %v90 = vld [vmem:[#allocation2 + $0x130] sm:$0xff]
    %v91 = vld [vmem:[#allocation2 + $0x138] sm:$0xff]
    %v92 = vld [vmem:[#allocation2 + $0x140] sm:$0xff]
    %v93 = vld [vmem:[#allocation2 + $0x148] sm:$0xff]
    %v94 = vld [vmem:[#allocation2 + $0x150] sm:$0xff]
    %v95 = vld [vmem:[#allocation2 + $0x158] sm:$0xff]
    %v96 = vld [vmem:[#allocation2 + $0x160] sm:$0xff]
    %v97 = vld [vmem:[#allocation2 + $0x168] sm:$0xff]
    %v98 = vld [vmem:[#allocation2 + $0x170] sm:$0xff]
    %v99 = vld [vmem:[#allocation2 + $0x178] sm:$0xff]
    %v100 = vld [vmem:[#allocation2 + $0x180] sm:$0xff]
    %v101 = vld [vmem:[#allocation2 + $0x188] sm:$0xff]
    %v102 = vld [vmem:[#allocation2 + $0x190] sm:$0xff]
    %v103 = vld [vmem:[#allocation2 + $0x198] sm:$0xff]
    %v104 = vld [vmem:[#allocation2 + $0x1a0] sm:$0xff]
    %v105 = vld [vmem:[#allocation2 + $0x1a8] sm:$0xff]
    %v106 = vld [vmem:[#allocation2 + $0x1b0] sm:$0xff]
    %v107 = vld [vmem:[#allocation2 + $0x1b8] sm:$0xff]
    %v108 = vld [vmem:[#allocation2 + $0x1c0] sm:$0xff]
    %v109 = vld [vmem:[#allocation2 + $0x1c8] sm:$0xff]
    %v110 = vld [vmem:[#allocation2 + $0x1d0] sm:$0xff]
    %v111 = vld [vmem:[#allocation2 + $0x1d8] sm:$0xff]
    %v112 = vld [vmem:[#allocation2 + $0x1e0] sm:$0xff]
    %v113 = vld [vmem:[#allocation2 + $0x1e8] sm:$0xff]
    %v114 = vld [vmem:[#allocation2 + $0x1f0] sm:$0xff]
    %v115 = vld [vmem:[#allocation2 + $0x1f8] sm:$0xff]
    %v116 = vld [vmem:[#allocation5] sm:$0xff]
    %v117 = vld [vmem:[#allocation5 + $0x8] sm:$0xff]
    %v118 = vld [vmem:[#allocation5 + $0x10] sm:$0xff]
    %v119 = vld [vmem:[#allocation5 + $0x18] sm:$0xff]
    %v120 = vld [vmem:[#allocation5 + $0x20] sm:$0xff]
    %v121 = vld [vmem:[#allocation5 + $0x28] sm:$0xff]
    %v122 = vld [vmem:[#allocation5 + $0x30] sm:$0xff]
    %v123 = vld [vmem:[#allocation5 + $0x38] sm:$0xff]
    %v124 = vld [vmem:[#allocation5 + $0x40] sm:$0xff]
    %v125 = vld [vmem:[#allocation5 + $0x48] sm:$0xff]
    %v126 = vld [vmem:[#allocation5 + $0x50] sm:$0xff]
    %v127 = vld [vmem:[#allocation5 + $0x58] sm:$0xff]
    %v128 = vld [vmem:[#allocation5 + $0x60] sm:$0xff]
    %v129 = vld [vmem:[#allocation5 + $0x68] sm:$0xff]
    %v130 = vld [vmem:[#allocation5 + $0x70] sm:$0xff]
    %v131 = vld [vmem:[#allocation5 + $0x78] sm:$0xff]
    %v132 = vld [vmem:[#allocation5 + $0x80] sm:$0xff]
    %v133 = vld [vmem:[#allocation5 + $0x88] sm:$0xff]
    %v134 = vld [vmem:[#allocation5 + $0x90] sm:$0xff]
    %v135 = vld [vmem:[#allocation5 + $0x98] sm:$0xff]
    %v136 = vld [vmem:[#allocation5 + $0xa0] sm:$0xff]
    %v137 = vld [vmem:[#allocation5 + $0xa8] sm:$0xff]
    %v138 = vld [vmem:[#allocation5 + $0xb0] sm:$0xff]
    %v139 = vld [vmem:[#allocation5 + $0xb8] sm:$0xff]
    %v140 = vld [vmem:[#allocation5 + $0xc0] sm:$0xff]
    %v141 = vld [vmem:[#allocation5 + $0xc8] sm:$0xff]
    %v142 = vld [vmem:[#allocation5 + $0xd0] sm:$0xff]
    %v143 = vld [vmem:[#allocation5 + $0xd8] sm:$0xff]
    %v144 = vld [vmem:[#allocation5 + $0xe0] sm:$0xff]
    %v145 = vld [vmem:[#allocation5 + $0xe8] sm:$0xff]
    %v146 = vld [vmem:[#allocation5 + $0xf0] sm:$0xff]
    %v147 = vld [vmem:[#allocation5 + $0xf8] sm:$0xff]
    %v148 = vld [vmem:[#allocation5 + $0x100] sm:$0xff]
    %v149 = vld [vmem:[#allocation5 + $0x108] sm:$0xff]
    %v150 = vld [vmem:[#allocation5 + $0x110] sm:$0xff]
    %v151 = vld [vmem:[#allocation5 + $0x118] sm:$0xff]
    %v152 = vld [vmem:[#allocation5 + $0x120] sm:$0xff]
    %v153 = vld [vmem:[#allocation5 + $0x128] sm:$0xff]
    %v154 = vld [vmem:[#allocation5 + $0x130] sm:$0xff]
    %v155 = vld [vmem:[#allocation5 + $0x138] sm:$0xff]
    %v156 = vld [vmem:[#allocation5 + $0x140] sm:$0xff]
    %v157 = vld [vmem:[#allocation5 + $0x148] sm:$0xff]
    %v158 = vld [vmem:[#allocation5 + $0x150] sm:$0xff]
    %v159 = vld [vmem:[#allocation5 + $0x158] sm:$0xff]
    %v160 = vld [vmem:[#allocation5 + $0x160] sm:$0xff]
    %v161 = vld [vmem:[#allocation5 + $0x168] sm:$0xff]
    %v162 = vld [vmem:[#allocation5 + $0x170] sm:$0xff]
    %v163 = vld [vmem:[#allocation5 + $0x178] sm:$0xff]
    %v164 = vld [vmem:[#allocation5 + $0x180] sm:$0xff]
    %v165 = vld [vmem:[#allocation5 + $0x188] sm:$0xff]
    %v166 = vld [vmem:[#allocation5 + $0x190] sm:$0xff]
    %v167 = vld [vmem:[#allocation5 + $0x198] sm:$0xff]
    %v168 = vld [vmem:[#allocation5 + $0x1a0] sm:$0xff]
    %v169 = vld [vmem:[#allocation5 + $0x1a8] sm:$0xff]
    %v170 = vld [vmem:[#allocation5 + $0x1b0] sm:$0xff]
    %v171 = vld [vmem:[#allocation5 + $0x1b8] sm:$0xff]
    %v172 = vld [vmem:[#allocation5 + $0x1c0] sm:$0xff]
    %v173 = vld [vmem:[#allocation5 + $0x1c8] sm:$0xff]
    %v174 = vld [vmem:[#allocation5 + $0x1d0] sm:$0xff]
    %v175 = vld [vmem:[#allocation5 + $0x1d8] sm:$0xff]
    %v176 = vld [vmem:[#allocation5 + $0x1e0] sm:$0xff]
    %v177 = vld [vmem:[#allocation5 + $0x1e8] sm:$0xff]
    %v178 = vld [vmem:[#allocation5 + $0x1f0] sm:$0xff]
    %v179 = vld [vmem:[#allocation5 + $0x1f8] sm:$0xff]
    %v180 = vld [vmem:[#allocation5 + $0x200] sm:$0xff]
    %v181 = vld [vmem:[#allocation5 + $0x208] sm:$0xff]
    %v182 = vld [vmem:[#allocation5 + $0x210] sm:$0xff]
    %v183 = vld [vmem:[#allocation5 + $0x218] sm:$0xff]
    %v184 = vld [vmem:[#allocation5 + $0x220] sm:$0xff]
    %v185 = vld [vmem:[#allocation5 + $0x228] sm:$0xff]
    %v186 = vld [vmem:[#allocation5 + $0x230] sm:$0xff]
    %v187 = vld [vmem:[#allocation5 + $0x238] sm:$0xff]
    %v188 = vld [vmem:[#allocation5 + $0x240] sm:$0xff]
    %v189 = vld [vmem:[#allocation5 + $0x248] sm:$0xff]
    %v190 = vld [vmem:[#allocation5 + $0x250] sm:$0xff]
    %v191 = vld [vmem:[#allocation5 + $0x258] sm:$0xff]
    %v192 = vld [vmem:[#allocation5 + $0x260] sm:$0xff]
    %v193 = vld [vmem:[#allocation5 + $0x268] sm:$0xff]
    %v194 = vld [vmem:[#allocation5 + $0x270] sm:$0xff]
    %v195 = vld [vmem:[#allocation5 + $0x278] sm:$0xff]
    %v196 = vld [vmem:[#allocation5 + $0x280] sm:$0xff]
    %v197 = vld [vmem:[#allocation5 + $0x288] sm:$0xff]
    %v198 = vld [vmem:[#allocation5 + $0x290] sm:$0xff]
    %v199 = vld [vmem:[#allocation5 + $0x298] sm:$0xff]
    %v200 = vld [vmem:[#allocation5 + $0x2a0] sm:$0xff]
    %v201 = vld [vmem:[#allocation5 + $0x2a8] sm:$0xff]
    %v202 = vld [vmem:[#allocation5 + $0x2b0] sm:$0xff]
    %v203 = vld [vmem:[#allocation5 + $0x2b8] sm:$0xff]
    %v204 = vld [vmem:[#allocation5 + $0x2c0] sm:$0xff]
    %v205 = vld [vmem:[#allocation5 + $0x2c8] sm:$0xff]
    %v206 = vld [vmem:[#allocation5 + $0x2d0] sm:$0xff]
    %v207 = vld [vmem:[#allocation5 + $0x2d8] sm:$0xff]
    %v208 = vld [vmem:[#allocation5 + $0x2e0] sm:$0xff]
    %v209 = vld [vmem:[#allocation5 + $0x2e8] sm:$0xff]
    %v210 = vld [vmem:[#allocation5 + $0x2f0] sm:$0xff]
    %v211 = vld [vmem:[#allocation5 + $0x2f8] sm:$0xff]
    %v212 = vld [vmem:[#allocation5 + $0x300] sm:$0xff]
    %v213 = vld [vmem:[#allocation5 + $0x308] sm:$0xff]
    %v214 = vld [vmem:[#allocation5 + $0x310] sm:$0xff]
    %v215 = vld [vmem:[#allocation5 + $0x318] sm:$0xff]
    %v216 = vld [vmem:[#allocation5 + $0x320] sm:$0xff]
    %v217 = vld [vmem:[#allocation5 + $0x328] sm:$0xff]
    %v218 = vld [vmem:[#allocation5 + $0x330] sm:$0xff]
    %v219 = vld [vmem:[#allocation5 + $0x338] sm:$0xff]
    %v220 = vld [vmem:[#allocation5 + $0x340] sm:$0xff]
    %v221 = vld [vmem:[#allocation5 + $0x348] sm:$0xff]
    %v222 = vld [vmem:[#allocation5 + $0x350] sm:$0xff]
    %v223 = vld [vmem:[#allocation5 + $0x358] sm:$0xff]
    %v224 = vld [vmem:[#allocation5 + $0x360] sm:$0xff]
    %v225 = vld [vmem:[#allocation5 + $0x368] sm:$0xff]
    %v226 = vld [vmem:[#allocation5 + $0x370] sm:$0xff]
    %v227 = vld [vmem:[#allocation5 + $0x378] sm:$0xff]
    %v228 = vld [vmem:[#allocation5 + $0x380] sm:$0xff]
    %v229 = vld [vmem:[#allocation5 + $0x388] sm:$0xff]
    %v230 = vld [vmem:[#allocation5 + $0x390] sm:$0xff]
    %v231 = vld [vmem:[#allocation5 + $0x398] sm:$0xff]
    %v232 = vld [vmem:[#allocation5 + $0x3a0] sm:$0xff]
    %v233 = vld [vmem:[#allocation5 + $0x3a8] sm:$0xff]
    %v234 = vld [vmem:[#allocation5 + $0x3b0] sm:$0xff]
    %v235 = vld [vmem:[#allocation5 + $0x3b8] sm:$0xff]
    %v236 = vld [vmem:[#allocation5 + $0x3c0] sm:$0xff]
    %v237 = vld [vmem:[#allocation5 + $0x3c8] sm:$0xff]
    %v238 = vld [vmem:[#allocation5 + $0x3d0] sm:$0xff]
    %v239 = vld [vmem:[#allocation5 + $0x3d8] sm:$0xff]
    %v240 = vld [vmem:[#allocation5 + $0x3e0] sm:$0xff]
    %v241 = vld [vmem:[#allocation5 + $0x3e8] sm:$0xff]
    %v242 = vld [vmem:[#allocation5 + $0x3f0] sm:$0xff]
    %v243 = vld [vmem:[#allocation5 + $0x3f8] sm:$0xff]
    %v244 = vld [vmem:[%s3] sm:$0xf]
    %v246 = vlaneseq
    %v247 = vshrl.u32 %v246, 7
    %v248 = vsub.s32 0, %v247
    %v249 = vrot.slane %v244, %v248
    %v250 = vlaneseq
    %v251 = vshrl.u32 %v250, 7
    %v252 = vsub.s32 1, %v251
    %v253 = vrot.slane %v244, %v252
    %v254 = vlaneseq
    %v255 = vshrl.u32 %v254, 7
    %v256 = vsub.s32 2, %v255
    %v257 = vrot.slane %v244, %v256
    %v258 = vlaneseq
    %v259 = vshrl.u32 %v258, 7
    %v260 = vsub.s32 3, %v259
    %v261 = vrot.slane %v244, %v260
    %v266 = vld [vmem:[%s0] sm:$0xff]
    %267 = vmatprep.subr.mxu0 %v113
    %268 = vmatpush1.msra.mxu0 %v112
    %269 = vmatprep.subr.mxu0 %v109
    %270 = vmatpush1.msra.mxu0 %v108
    %271 = vmatprep.subr.mxu0 %v105
    %272 = vmatpush1.msra.mxu0 %v104
    %273 = vmatprep.subr.mxu0 %v101
    %274 = vmatpush1.msra.mxu0 %v100
    %275 = vmatprep.subr.mxu0 %v97
    %276 = vmatpush1.msra.mxu0 %v96
    %277 = vmatprep.subr.mxu0 %v93
    %278 = vmatpush1.msra.mxu0 %v92
    %279 = vmatprep.subr.mxu0 %v89
    %280 = vmatpush1.msra.mxu0 %v88
    %281 = vmatprep.subr.mxu0 %v85
    %282 = vmatpush1.msra.mxu0 %v84
    %283 = vmatprep.subr.mxu0 %v81
    %284 = vmatpush1.msra.mxu0 %v80
    %285 = vmatprep.subr.mxu0 %v77
    %286 = vmatpush1.msra.mxu0 %v76
    %287 = vmatprep.subr.mxu0 %v73
    %288 = vmatpush1.msra.mxu0 %v72
    %289 = vmatprep.subr.mxu0 %v69
    %290 = vmatpush1.msra.mxu0 %v68
    %291 = vmatprep.subr.mxu0 %v65
    %292 = vmatpush1.msra.mxu0 %v64
    %293 = vmatprep.subr.mxu0 %v61
    %294 = vmatpush1.msra.mxu0 %v60
    %295 = vmatprep.subr.mxu0 %v57
    %296 = vmatpush1.msra.mxu0 %v56
    %297 = vmatprep.subr.mxu0 %v53
    %298 = vmatpush1.msra.mxu0 %v52
    %299 = vmatprep.subr.mxu0 0.0
    %300 = vmatpush2.msra.mxu0 0.0
    %301 = vmatprep.subr.mxu0 0.0
    %302 = vmatpush2.msra.mxu0 0.0
    %303 = vmatprep.subr.mxu0 0.0
    %304 = vmatpush2.msra.mxu0 0.0
    %305 = vmatprep.subr.mxu0 0.0
    %306 = vmatpush2.msra.mxu0 0.0
    %307 = vmatprep.subr.mxu0 0.0
    %308 = vmatpush2.msra.mxu0 0.0
    %309 = vmatprep.subr.mxu0 0.0
    %310 = vmatpush2.msra.mxu0 0.0
    %311 = vmatprep.subr.mxu0 0.0
    %312 = vmatpush2.msra.mxu0 0.0
    %313 = vmatprep.subr.mxu0 0.0
    %314 = vmatpush2.msra.mxu0 0.0
    %315 = vmatprep.subr.mxu0 0.0
    %316 = vmatpush2.msra.mxu0 0.0
    %317 = vmatprep.subr.mxu0 0.0
    %318 = vmatpush2.msra.mxu0 0.0
    %319 = vmatprep.subr.mxu0 0.0
    %320 = vmatpush2.msra.mxu0 0.0
    %321 = vmatprep.subr.mxu0 0.0
    %322 = vmatpush2.msra.mxu0 0.0
    %323 = vmatprep.subr.mxu0 0.0
    %324 = vmatpush2.msra.mxu0 0.0
    %325 = vmatprep.subr.mxu0 0.0
    %326 = vmatpush2.msra.mxu0 0.0
    %327 = vmatprep.subr.mxu0 0.0
    %328 = vmatpush2.msra.mxu0 0.0
    %329 = vmatprep.subr.mxu0 0.0
    %330 = vmatpush2.msra.mxu0 0.0
    %331 = vmatprep.mubr.f32.mxu0 0.0
    %332 = vmatmul.mubr.f32.gmra.mxu0 0.0
    %v333 = vpop.f32.mrf.mxu0
    %v334 = vadd.f32 0.0, %v333
    %v335 = vpop.f32.mrf.mxu0
    %v336 = vadd.f32 0.0, %v335
    %337 = vdwg.mxu0
    %338 = vmatprep.subr.mxu0 %v115
    %339 = vmatpush1.msra.mxu0 %v114
    %340 = vmatprep.subr.mxu0 %v111
    %341 = vmatpush1.msra.mxu0 %v110
    %342 = vmatprep.subr.mxu0 %v107
    %343 = vmatpush1.msra.mxu0 %v106
    %344 = vmatprep.subr.mxu0 %v103
    %345 = vmatpush1.msra.mxu0 %v102
    %346 = vmatprep.subr.mxu0 %v99
    %347 = vmatpush1.msra.mxu0 %v98
    %348 = vmatprep.subr.mxu0 %v95
    %349 = vmatpush1.msra.mxu0 %v94
    %350 = vmatprep.subr.mxu0 %v91
    %351 = vmatpush1.msra.mxu0 %v90
    %352 = vmatprep.subr.mxu0 %v87
    %353 = vmatpush1.msra.mxu0 %v86
    %354 = vmatprep.subr.mxu0 %v83
    %355 = vmatpush1.msra.mxu0 %v82
    %356 = vmatprep.subr.mxu0 %v79
    %357 = vmatpush1.msra.mxu0 %v78
    %358 = vmatprep.subr.mxu0 %v75
    %359 = vmatpush1.msra.mxu0 %v74
    %360 = vmatprep.subr.mxu0 %v71
    %361 = vmatpush1.msra.mxu0 %v70
    %362 = vmatprep.subr.mxu0 %v67
    %363 = vmatpush1.msra.mxu0 %v66
    %364 = vmatprep.subr.mxu0 %v63
    %365 = vmatpush1.msra.mxu0 %v62
    %366 = vmatprep.subr.mxu0 %v59
    %367 = vmatpush1.msra.mxu0 %v58
    %368 = vmatprep.subr.mxu0 %v55
    %369 = vmatpush1.msra.mxu0 %v54
    %370 = vmatprep.subr.mxu0 0.0
    %371 = vmatpush2.msra.mxu0 0.0
    %372 = vmatprep.subr.mxu0 0.0
    %373 = vmatpush2.msra.mxu0 0.0
    %374 = vmatprep.subr.mxu0 0.0
    %375 = vmatpush2.msra.mxu0 0.0
    %376 = vmatprep.subr.mxu0 0.0
    %377 = vmatpush2.msra.mxu0 0.0
    %378 = vmatprep.subr.mxu0 0.0
    %379 = vmatpush2.msra.mxu0 0.0
    %380 = vmatprep.subr.mxu0 0.0
    %381 = vmatpush2.msra.mxu0 0.0
    %382 = vmatprep.subr.mxu0 0.0
    %383 = vmatpush2.msra.mxu0 0.0
    %384 = vmatprep.subr.mxu0 0.0
    %385 = vmatpush2.msra.mxu0 0.0
    %386 = vmatprep.subr.mxu0 0.0
    %387 = vmatpush2.msra.mxu0 0.0
    %388 = vmatprep.subr.mxu0 0.0
    %389 = vmatpush2.msra.mxu0 0.0
    %390 = vmatprep.subr.mxu0 0.0
    %391 = vmatpush2.msra.mxu0 0.0
    %392 = vmatprep.subr.mxu0 0.0
    %393 = vmatpush2.msra.mxu0 0.0
    %394 = vmatprep.subr.mxu0 0.0
    %395 = vmatpush2.msra.mxu0 0.0
    %396 = vmatprep.subr.mxu0 0.0
    %397 = vmatpush2.msra.mxu0 0.0
    %398 = vmatprep.subr.mxu0 0.0
    %399 = vmatpush2.msra.mxu0 0.0
    %400 = vmatprep.subr.mxu0 0.0
    %401 = vmatpush2.msra.mxu0 0.0
    %402 = vmatprep.mubr.f32.mxu0 0.0
    %403 = vmatmul.mubr.f32.gmra.mxu0 0.0
    %v404 = vpop.f32.mrf.mxu0
    %v405 = vadd.f32 0.0, %v404
    %v406 = vpop.f32.mrf.mxu0
    %v407 = vadd.f32 0.0, %v406
    %408 = vdwg.mxu0
    %v413 = vcombine.low %v334, %v336
    %v414 = vcombine.low %v405, %v407
    %v416 = vunpack.c.l.s4 1983009808
    %v417 = vunpack.c.0.s8 %v416
    %v418 = vlaneseq
    %v419 = vshrl.u32 %v418, 7
    %v420 = vsub.s32 %v417, %v419
    %v421 = vrot.slane %v413, %v420
    %v423 = vunpack.c.l.s4 1983009808
    %v424 = vunpack.c.0.s8 %v423
    %v425 = vlaneseq
    %v426 = vshrl.u32 %v425, 7
    %v427 = vsub.s32 %v424, %v426
    %v428 = vrot.slane %v414, %v427
    %v429 = vcombine.low %v421, %v428
    %v431 = vadd.f32 %v266, %v429
    %v432 = vxor.u32 %v431, 2147483648
    %v433 = vmul.f32 %v432, 1.442695
    %v434 = vpow.pop %v433
    %v435 = vadd.f32 %v434, 1.0
    %v436 = vrcp.pop %v435
    %v437 = vmul.f32 1.0, %v436
    %v439 = vrot.slane %v431, 6
    %v441 = vtanh.pop %v439
    %v443 = vrot.slane %v437, 2
    %v445 = vmul.f32 %v443, 0.0
    %v446 = vmul.f32 %v437, %v441
    %v447 = vadd.f32 %v445, %v446
    %v448 = vtanh.pop %v447
    %v449 = vrot.slane %v437, 4
    %v451 = vmul.f32 %v449, %v448
    %452 = vmatprep.subr.mxu0 %v177
    %453 = vmatpush1.msra.mxu0 %v176
    %454 = vmatprep.subr.mxu0 %v173
    %455 = vmatpush1.msra.mxu0 %v172
    %456 = vmatprep.subr.mxu0 %v169
    %457 = vmatpush1.msra.mxu0 %v168
    %458 = vmatprep.subr.mxu0 %v165
    %459 = vmatpush1.msra.mxu0 %v164
    %460 = vmatprep.subr.mxu0 %v161
    %461 = vmatpush1.msra.mxu0 %v160
    %462 = vmatprep.subr.mxu0 %v157
    %463 = vmatpush1.msra.mxu0 %v156
    %464 = vmatprep.subr.mxu0 %v153
    %465 = vmatpush1.msra.mxu0 %v152
    %466 = vmatprep.subr.mxu0 %v149
    %467 = vmatpush1.msra.mxu0 %v148
    %468 = vmatprep.subr.mxu0 %v145
    %469 = vmatpush1.msra.mxu0 %v144
    %470 = vmatprep.subr.mxu0 %v141
    %471 = vmatpush1.msra.mxu0 %v140
    %472 = vmatprep.subr.mxu0 %v137
    %473 = vmatpush1.msra.mxu0 %v136
    %474 = vmatprep.subr.mxu0 %v133
    %475 = vmatpush1.msra.mxu0 %v132
    %476 = vmatprep.subr.mxu0 %v129
    %477 = vmatpush1.msra.mxu0 %v128
    %478 = vmatprep.subr.mxu0 %v125
    %479 = vmatpush1.msra.mxu0 %v124
    %480 = vmatprep.subr.mxu0 %v121
    %481 = vmatpush1.msra.mxu0 %v120
    %482 = vmatprep.subr.mxu0 %v117
    %483 = vmatpush1.msra.mxu0 %v116
    %484 = vmatprep.subr.mxu0 %v241
    %485 = vmatpush2.msra.mxu0 %v240
    %486 = vmatprep.subr.mxu0 %v237
    %487 = vmatpush2.msra.mxu0 %v236
    %488 = vmatprep.subr.mxu0 %v233
    %489 = vmatpush2.msra.mxu0 %v232
    %490 = vmatprep.subr.mxu0 %v229
    %491 = vmatpush2.msra.mxu0 %v228
    %492 = vmatprep.subr.mxu0 %v225
    %493 = vmatpush2.msra.mxu0 %v224
    %494 = vmatprep.subr.mxu0 %v221
    %495 = vmatpush2.msra.mxu0 %v220
    %496 = vmatprep.subr.mxu0 %v217
    %497 = vmatpush2.msra.mxu0 %v216
    %498 = vmatprep.subr.mxu0 %v213
    %499 = vmatpush2.msra.mxu0 %v212
    %500 = vmatprep.subr.mxu0 %v209
    %501 = vmatpush2.msra.mxu0 %v208
    %502 = vmatprep.subr.mxu0 %v205
    %503 = vmatpush2.msra.mxu0 %v204
    %504 = vmatprep.subr.mxu0 %v201
    %505 = vmatpush2.msra.mxu0 %v200
    %506 = vmatprep.subr.mxu0 %v197
    %507 = vmatpush2.msra.mxu0 %v196
    %508 = vmatprep.subr.mxu0 %v193
    %509 = vmatpush2.msra.mxu0 %v192
    %510 = vmatprep.subr.mxu0 %v189
    %511 = vmatpush2.msra.mxu0 %v188
    %512 = vmatprep.subr.mxu0 %v185
    %513 = vmatpush2.msra.mxu0 %v184
    %514 = vmatprep.subr.mxu0 %v181
    %515 = vmatpush2.msra.mxu0 %v180
    %516 = vmatprep.mubr.f32.mxu0 0.0
    %517 = vmatmul.mubr.f32.gmra.mxu0 %v451
    %v518 = vpop.f32.mrf.mxu0
    %v519 = vadd.f32 %v249, %v518
    %v520 = vpop.f32.mrf.mxu0
    %v521 = vadd.f32 %v253, %v520
    %522 = vdwg.mxu0
    %523 = vmatprep.subr.mxu0 %v179
    %524 = vmatpush1.msra.mxu0 %v178
    %525 = vmatprep.subr.mxu0 %v175
    %526 = vmatpush1.msra.mxu0 %v174
    %527 = vmatprep.subr.mxu0 %v171
    %528 = vmatpush1.msra.mxu0 %v170
    %529 = vmatprep.subr.mxu0 %v167
    %530 = vmatpush1.msra.mxu0 %v166
    %531 = vmatprep.subr.mxu0 %v163
    %532 = vmatpush1.msra.mxu0 %v162
    %533 = vmatprep.subr.mxu0 %v159
    %534 = vmatpush1.msra.mxu0 %v158
    %535 = vmatprep.subr.mxu0 %v155
    %536 = vmatpush1.msra.mxu0 %v154
    %537 = vmatprep.subr.mxu0 %v151
    %538 = vmatpush1.msra.mxu0 %v150
    %539 = vmatprep.subr.mxu0 %v147
    %540 = vmatpush1.msra.mxu0 %v146
    %541 = vmatprep.subr.mxu0 %v143
    %542 = vmatpush1.msra.mxu0 %v142
    %543 = vmatprep.subr.mxu0 %v139
    %544 = vmatpush1.msra.mxu0 %v138
    %545 = vmatprep.subr.mxu0 %v135
    %546 = vmatpush1.msra.mxu0 %v134
    %547 = vmatprep.subr.mxu0 %v131
    %548 = vmatpush1.msra.mxu0 %v130
    %549 = vmatprep.subr.mxu0 %v127
    %550 = vmatpush1.msra.mxu0 %v126
    %551 = vmatprep.subr.mxu0 %v123
    %552 = vmatpush1.msra.mxu0 %v122
    %553 = vmatprep.subr.mxu0 %v119
    %554 = vmatpush1.msra.mxu0 %v118
    %555 = vmatprep.subr.mxu0 %v243
    %556 = vmatpush2.msra.mxu0 %v242
    %557 = vmatprep.subr.mxu0 %v239
    %558 = vmatpush2.msra.mxu0 %v238
    %559 = vmatprep.subr.mxu0 %v235
    %560 = vmatpush2.msra.mxu0 %v234
    %561 = vmatprep.subr.mxu0 %v231
    %562 = vmatpush2.msra.mxu0 %v230
    %563 = vmatprep.subr.mxu0 %v227
    %564 = vmatpush2.msra.mxu0 %v226
    %565 = vmatprep.subr.mxu0 %v223
    %566 = vmatpush2.msra.mxu0 %v222
    %567 = vmatprep.subr.mxu0 %v219
    %568 = vmatpush2.msra.mxu0 %v218
    %569 = vmatprep.subr.mxu0 %v215
    %570 = vmatpush2.msra.mxu0 %v214
    %571 = vmatprep.subr.mxu0 %v211
    %572 = vmatpush2.msra.mxu0 %v210
    %573 = vmatprep.subr.mxu0 %v207
    %574 = vmatpush2.msra.mxu0 %v206
    %575 = vmatprep.subr.mxu0 %v203
    %576 = vmatpush2.msra.mxu0 %v202
    %577 = vmatprep.subr.mxu0 %v199
    %578 = vmatpush2.msra.mxu0 %v198
    %579 = vmatprep.subr.mxu0 %v195
    %580 = vmatpush2.msra.mxu0 %v194
    %581 = vmatprep.subr.mxu0 %v191
    %582 = vmatpush2.msra.mxu0 %v190
    %583 = vmatprep.subr.mxu0 %v187
    %584 = vmatpush2.msra.mxu0 %v186
    %585 = vmatprep.subr.mxu0 %v183
    %586 = vmatpush2.msra.mxu0 %v182
    %587 = vmatprep.mubr.f32.mxu0 0.0
    %588 = vmatmul.mubr.f32.gmra.mxu0 %v451
    %v589 = vpop.f32.mrf.mxu0
    %v590 = vadd.f32 %v257, %v589
    %v591 = vpop.f32.mrf.mxu0
    %v592 = vadd.f32 %v261, %v591
    %593 = vdwg.mxu0
    %v594 = vxor.u32 %v519, 2147483648
    %v595 = vxor.u32 %v521, 2147483648
    %v596 = vxor.u32 %v590, 2147483648
    %v597 = vmul.f32 %v594, 1.442695
    %v598 = vpow.pop %v597
    %v599 = vmul.f32 %v595, 1.442695
    %v600 = vpow.pop %v599
    %v601 = vmul.f32 %v596, 1.442695
    %v602 = vpow.pop %v601
    %v603 = vadd.f32 %v598, 1.0
    %v604 = vadd.f32 %v600, 1.0
    %v605 = vadd.f32 %v602, 1.0
    %v606 = vrcp.pop %v603
    %v607 = vmul.f32 1.0, %v606
    %v608 = vrcp.pop %v604
    %v609 = vmul.f32 1.0, %v608
    %v610 = vrcp.pop %v605
    %v611 = vmul.f32 1.0, %v610
    %v612 = vtanh.pop %v592
    %v613 = vmul.f32 %v609, 0.0
    %v614 = vmul.f32 %v607, %v612
    %v615 = vadd.f32 %v613, %v614
    %v616 = vtanh.pop %v615
    %v617 = vmul.f32 %v611, %v616
    %s618 = scalar_lea.vmem %s0, 8
    %v619 = vld [vmem:[%s618] sm:$0xff]
    %620 = vmatprep.subr.mxu0 %v113
    %621 = vmatpush1.msra.mxu0 %v112
    %622 = vmatprep.subr.mxu0 %v109
    %623 = vmatpush1.msra.mxu0 %v108
    %624 = vmatprep.subr.mxu0 %v105
    %625 = vmatpush1.msra.mxu0 %v104
    %626 = vmatprep.subr.mxu0 %v101
    %627 = vmatpush1.msra.mxu0 %v100
    %628 = vmatprep.subr.mxu0 %v97
    %629 = vmatpush1.msra.mxu0 %v96
    %630 = vmatprep.subr.mxu0 %v93
    %631 = vmatpush1.msra.mxu0 %v92
    %632 = vmatprep.subr.mxu0 %v89
    %633 = vmatpush1.msra.mxu0 %v88
    %634 = vmatprep.subr.mxu0 %v85
    %635 = vmatpush1.msra.mxu0 %v84
    %636 = vmatprep.subr.mxu0 %v81
    %637 = vmatpush1.msra.mxu0 %v80
    %638 = vmatprep.subr.mxu0 %v77
    %639 = vmatpush1.msra.mxu0 %v76
    %640 = vmatprep.subr.mxu0 %v73
    %641 = vmatpush1.msra.mxu0 %v72
    %642 = vmatprep.subr.mxu0 %v69
    %643 = vmatpush1.msra.mxu0 %v68
    %644 = vmatprep.subr.mxu0 %v65
    %645 = vmatpush1.msra.mxu0 %v64
    %646 = vmatprep.subr.mxu0 %v61
    %647 = vmatpush1.msra.mxu0 %v60
    %648 = vmatprep.subr.mxu0 %v57
    %649 = vmatpush1.msra.mxu0 %v56
    %650 = vmatprep.subr.mxu0 %v53
    %651 = vmatpush1.msra.mxu0 %v52
    %652 = vmatprep.subr.mxu0 0.0
    %653 = vmatpush2.msra.mxu0 0.0
    %654 = vmatprep.subr.mxu0 0.0
    %655 = vmatpush2.msra.mxu0 0.0
    %656 = vmatprep.subr.mxu0 0.0
    %657 = vmatpush2.msra.mxu0 0.0
    %658 = vmatprep.subr.mxu0 0.0
    %659 = vmatpush2.msra.mxu0 0.0
    %660 = vmatprep.subr.mxu0 0.0
    %661 = vmatpush2.msra.mxu0 0.0
    %662 = vmatprep.subr.mxu0 0.0
    %663 = vmatpush2.msra.mxu0 0.0
    %664 = vmatprep.subr.mxu0 0.0
    %665 = vmatpush2.msra.mxu0 0.0
    %666 = vmatprep.subr.mxu0 0.0
    %667 = vmatpush2.msra.mxu0 0.0
    %668 = vmatprep.subr.mxu0 0.0
    %669 = vmatpush2.msra.mxu0 0.0
    %670 = vmatprep.subr.mxu0 0.0
    %671 = vmatpush2.msra.mxu0 0.0
    %672 = vmatprep.subr.mxu0 0.0
    %673 = vmatpush2.msra.mxu0 0.0
    %674 = vmatprep.subr.mxu0 0.0
    %675 = vmatpush2.msra.mxu0 0.0
    %676 = vmatprep.subr.mxu0 0.0
    %677 = vmatpush2.msra.mxu0 0.0
    %678 = vmatprep.subr.mxu0 0.0
    %679 = vmatpush2.msra.mxu0 0.0
    %680 = vmatprep.subr.mxu0 0.0
    %681 = vmatpush2.msra.mxu0 0.0
    %682 = vmatprep.subr.mxu0 0.0
    %683 = vmatpush2.msra.mxu0 0.0
    %684 = vmatprep.mubr.f32.mxu0 0.0
    %685 = vmatmul.mubr.f32.gmra.mxu0 %v451
    %v686 = vpop.f32.mrf.mxu0
    %v687 = vadd.f32 0.0, %v686
    %v688 = vpop.f32.mrf.mxu0
    %v689 = vadd.f32 0.0, %v688
    %690 = vdwg.mxu0
    %691 = vmatprep.subr.mxu0 %v115
    %692 = vmatpush1.msra.mxu0 %v114
    %693 = vmatprep.subr.mxu0 %v111
    %694 = vmatpush1.msra.mxu0 %v110
    %695 = vmatprep.subr.mxu0 %v107
    %696 = vmatpush1.msra.mxu0 %v106
    %697 = vmatprep.subr.mxu0 %v103
    %698 = vmatpush1.msra.mxu0 %v102
    %699 = vmatprep.subr.mxu0 %v99
    %700 = vmatpush1.msra.mxu0 %v98
    %701 = vmatprep.subr.mxu0 %v95
    %702 = vmatpush1.msra.mxu0 %v94
    %703 = vmatprep.subr.mxu0 %v91
    %704 = vmatpush1.msra.mxu0 %v90
    %705 = vmatprep.subr.mxu0 %v87
    %706 = vmatpush1.msra.mxu0 %v86
    %707 = vmatprep.subr.mxu0 %v83
    %708 = vmatpush1.msra.mxu0 %v82
    %709 = vmatprep.subr.mxu0 %v79
    %710 = vmatpush1.msra.mxu0 %v78
    %711 = vmatprep.subr.mxu0 %v75
    %712 = vmatpush1.msra.mxu0 %v74
    %713 = vmatprep.subr.mxu0 %v71
    %714 = vmatpush1.msra.mxu0 %v70
    %715 = vmatprep.subr.mxu0 %v67
    %716 = vmatpush1.msra.mxu0 %v66
    %717 = vmatprep.subr.mxu0 %v63
    %718 = vmatpush1.msra.mxu0 %v62
    %719 = vmatprep.subr.mxu0 %v59
    %720 = vmatpush1.msra.mxu0 %v58
    %721 = vmatprep.subr.mxu0 %v55
    %722 = vmatpush1.msra.mxu0 %v54
    %723 = vmatprep.subr.mxu0 0.0
    %724 = vmatpush2.msra.mxu0 0.0
    %725 = vmatprep.subr.mxu0 0.0
    %726 = vmatpush2.msra.mxu0 0.0
    %727 = vmatprep.subr.mxu0 0.0
    %728 = vmatpush2.msra.mxu0 0.0
    %729 = vmatprep.subr.mxu0 0.0
    %730 = vmatpush2.msra.mxu0 0.0
    %731 = vmatprep.subr.mxu0 0.0
    %732 = vmatpush2.msra.mxu0 0.0
    %733 = vmatprep.subr.mxu0 0.0
    %734 = vmatpush2.msra.mxu0 0.0
    %735 = vmatprep.subr.mxu0 0.0
    %736 = vmatpush2.msra.mxu0 0.0
    %737 = vmatprep.subr.mxu0 0.0
    %738 = vmatpush2.msra.mxu0 0.0
    %739 = vmatprep.subr.mxu0 0.0
    %740 = vmatpush2.msra.mxu0 0.0
    %741 = vmatprep.subr.mxu0 0.0
    %742 = vmatpush2.msra.mxu0 0.0
    %743 = vmatprep.subr.mxu0 0.0
    %744 = vmatpush2.msra.mxu0 0.0
    %745 = vmatprep.subr.mxu0 0.0
    %746 = vmatpush2.msra.mxu0 0.0
    %747 = vmatprep.subr.mxu0 0.0
    %748 = vmatpush2.msra.mxu0 0.0
    %749 = vmatprep.subr.mxu0 0.0
    %750 = vmatpush2.msra.mxu0 0.0
    %751 = vmatprep.subr.mxu0 0.0
    %752 = vmatpush2.msra.mxu0 0.0
    %753 = vmatprep.subr.mxu0 0.0
    %754 = vmatpush2.msra.mxu0 0.0
    %755 = vmatprep.mubr.f32.mxu0 0.0
    %756 = vmatmul.mubr.f32.gmra.mxu0 %v451
    %v757 = vpop.f32.mrf.mxu0
    %v758 = vadd.f32 0.0, %v757
    %v759 = vpop.f32.mrf.mxu0
    %v760 = vadd.f32 0.0, %v759
    %761 = vdwg.mxu0
    %v766 = vcombine.low %v687, %v689
    %v767 = vcombine.low %v758, %v760
    %v769 = vunpack.c.l.s4 1983009808
    %v770 = vunpack.c.0.s8 %v769
    %v771 = vlaneseq
    %v772 = vshrl.u32 %v771, 7
    %v773 = vsub.s32 %v770, %v772
    %v774 = vrot.slane %v766, %v773
    %v776 = vunpack.c.l.s4 1983009808
    %v777 = vunpack.c.0.s8 %v776
    %v778 = vlaneseq
    %v779 = vshrl.u32 %v778, 7
    %v780 = vsub.s32 %v777, %v779
    %v781 = vrot.slane %v767, %v780
    %v782 = vcombine.low %v774, %v781
    %v784 = vadd.f32 %v619, %v782
    %v785 = vxor.u32 %v784, 2147483648
    %v786 = vmul.f32 %v785, 1.442695
    %v787 = vpow.pop %v786
    %v788 = vadd.f32 %v787, 1.0
    %v789 = vrcp.pop %v788
    %v790 = vmul.f32 1.0, %v789
    %v792 = vrot.slane %v784, 6
    %v794 = vtanh.pop %v792
    %v796 = vrot.slane %v790, 2
    %v798 = vmul.f32 %v796, %v447
    %v799 = vmul.f32 %v790, %v794
    %v800 = vadd.f32 %v798, %v799
    %v801 = vtanh.pop %v800
    %v802 = vrot.slane %v790, 4
    %v804 = vmul.f32 %v802, %v801
    %805 = vmatprep.subr.mxu0 %v177
    %806 = vmatpush1.msra.mxu0 %v176
    %807 = vmatprep.subr.mxu0 %v173
    %808 = vmatpush1.msra.mxu0 %v172
    %809 = vmatprep.subr.mxu0 %v169
    %810 = vmatpush1.msra.mxu0 %v168
    %811 = vmatprep.subr.mxu0 %v165
    %812 = vmatpush1.msra.mxu0 %v164
    %813 = vmatprep.subr.mxu0 %v161
    %814 = vmatpush1.msra.mxu0 %v160
    %815 = vmatprep.subr.mxu0 %v157
    %816 = vmatpush1.msra.mxu0 %v156
    %817 = vmatprep.subr.mxu0 %v153
    %818 = vmatpush1.msra.mxu0 %v152
    %819 = vmatprep.subr.mxu0 %v149
    %820 = vmatpush1.msra.mxu0 %v148
    %821 = vmatprep.subr.mxu0 %v145
    %822 = vmatpush1.msra.mxu0 %v144
    %823 = vmatprep.subr.mxu0 %v141
    %824 = vmatpush1.msra.mxu0 %v140
    %825 = vmatprep.subr.mxu0 %v137
    %826 = vmatpush1.msra.mxu0 %v136
    %827 = vmatprep.subr.mxu0 %v133
    %828 = vmatpush1.msra.mxu0 %v132
    %829 = vmatprep.subr.mxu0 %v129
    %830 = vmatpush1.msra.mxu0 %v128
    %831 = vmatprep.subr.mxu0 %v125
    %832 = vmatpush1.msra.mxu0 %v124
    %833 = vmatprep.subr.mxu0 %v121
    %834 = vmatpush1.msra.mxu0 %v120
    %835 = vmatprep.subr.mxu0 %v117
    %836 = vmatpush1.msra.mxu0 %v116
    %837 = vmatprep.subr.mxu0 %v241
    %838 = vmatpush2.msra.mxu0 %v240
    %839 = vmatprep.subr.mxu0 %v237
    %840 = vmatpush2.msra.mxu0 %v236
    %841 = vmatprep.subr.mxu0 %v233
    %842 = vmatpush2.msra.mxu0 %v232
    %843 = vmatprep.subr.mxu0 %v229
    %844 = vmatpush2.msra.mxu0 %v228
    %845 = vmatprep.subr.mxu0 %v225
    %846 = vmatpush2.msra.mxu0 %v224
    %847 = vmatprep.subr.mxu0 %v221
    %848 = vmatpush2.msra.mxu0 %v220
    %849 = vmatprep.subr.mxu0 %v217
    %850 = vmatpush2.msra.mxu0 %v216
    %851 = vmatprep.subr.mxu0 %v213
    %852 = vmatpush2.msra.mxu0 %v212
    %853 = vmatprep.subr.mxu0 %v209
    %854 = vmatpush2.msra.mxu0 %v208
    %855 = vmatprep.subr.mxu0 %v205
    %856 = vmatpush2.msra.mxu0 %v204
    %857 = vmatprep.subr.mxu0 %v201
    %858 = vmatpush2.msra.mxu0 %v200
    %859 = vmatprep.subr.mxu0 %v197
    %860 = vmatpush2.msra.mxu0 %v196
    %861 = vmatprep.subr.mxu0 %v193
    %862 = vmatpush2.msra.mxu0 %v192
    %863 = vmatprep.subr.mxu0 %v189
    %864 = vmatpush2.msra.mxu0 %v188
    %865 = vmatprep.subr.mxu0 %v185
    %866 = vmatpush2.msra.mxu0 %v184
    %867 = vmatprep.subr.mxu0 %v181
    %868 = vmatpush2.msra.mxu0 %v180
    %869 = vmatprep.mubr.f32.mxu0 %v617
    %870 = vmatmul.mubr.f32.gmra.mxu0 %v804
    %v871 = vpop.f32.mrf.mxu0
    %v872 = vadd.f32 %v249, %v871
    %v873 = vpop.f32.mrf.mxu0
    %v874 = vadd.f32 %v253, %v873
    %875 = vdwg.mxu0
    %876 = vmatprep.subr.mxu0 %v179
    %877 = vmatpush1.msra.mxu0 %v178
    %878 = vmatprep.subr.mxu0 %v175
    %879 = vmatpush1.msra.mxu0 %v174
    %880 = vmatprep.subr.mxu0 %v171
    %881 = vmatpush1.msra.mxu0 %v170
    %882 = vmatprep.subr.mxu0 %v167
    %883 = vmatpush1.msra.mxu0 %v166
    %884 = vmatprep.subr.mxu0 %v163
    %885 = vmatpush1.msra.mxu0 %v162
    %886 = vmatprep.subr.mxu0 %v159
    %887 = vmatpush1.msra.mxu0 %v158
    %888 = vmatprep.subr.mxu0 %v155
    %889 = vmatpush1.msra.mxu0 %v154
    %890 = vmatprep.subr.mxu0 %v151
    %891 = vmatpush1.msra.mxu0 %v150
    %892 = vmatprep.subr.mxu0 %v147
    %893 = vmatpush1.msra.mxu0 %v146
    %894 = vmatprep.subr.mxu0 %v143
    %895 = vmatpush1.msra.mxu0 %v142
    %896 = vmatprep.subr.mxu0 %v139
    %897 = vmatpush1.msra.mxu0 %v138
    %898 = vmatprep.subr.mxu0 %v135
    %899 = vmatpush1.msra.mxu0 %v134
    %900 = vmatprep.subr.mxu0 %v131
    %901 = vmatpush1.msra.mxu0 %v130
    %902 = vmatprep.subr.mxu0 %v127
    %903 = vmatpush1.msra.mxu0 %v126
    %904 = vmatprep.subr.mxu0 %v123
    %905 = vmatpush1.msra.mxu0 %v122
    %906 = vmatprep.subr.mxu0 %v119
    %907 = vmatpush1.msra.mxu0 %v118
    %908 = vmatprep.subr.mxu0 %v243
    %909 = vmatpush2.msra.mxu0 %v242
    %910 = vmatprep.subr.mxu0 %v239
    %911 = vmatpush2.msra.mxu0 %v238
    %912 = vmatprep.subr.mxu0 %v235
    %913 = vmatpush2.msra.mxu0 %v234
    %914 = vmatprep.subr.mxu0 %v231
    %915 = vmatpush2.msra.mxu0 %v230
    %916 = vmatprep.subr.mxu0 %v227
    %917 = vmatpush2.msra.mxu0 %v226
    %918 = vmatprep.subr.mxu0 %v223
    %919 = vmatpush2.msra.mxu0 %v222
    %920 = vmatprep.subr.mxu0 %v219
    %921 = vmatpush2.msra.mxu0 %v218
    %922 = vmatprep.subr.mxu0 %v215
    %923 = vmatpush2.msra.mxu0 %v214
    %924 = vmatprep.subr.mxu0 %v211
    %925 = vmatpush2.msra.mxu0 %v210
    %926 = vmatprep.subr.mxu0 %v207
    %927 = vmatpush2.msra.mxu0 %v206
    %928 = vmatprep.subr.mxu0 %v203
    %929 = vmatpush2.msra.mxu0 %v202
    %930 = vmatprep.subr.mxu0 %v199
    %931 = vmatpush2.msra.mxu0 %v198
    %932 = vmatprep.subr.mxu0 %v195
    %933 = vmatpush2.msra.mxu0 %v194
    %934 = vmatprep.subr.mxu0 %v191
    %935 = vmatpush2.msra.mxu0 %v190
    %936 = vmatprep.subr.mxu0 %v187
    %937 = vmatpush2.msra.mxu0 %v186
    %938 = vmatprep.subr.mxu0 %v183
    %939 = vmatpush2.msra.mxu0 %v182
    %940 = vmatprep.mubr.f32.mxu0 %v617
    %941 = vmatmul.mubr.f32.gmra.mxu0 %v804
    %v942 = vpop.f32.mrf.mxu0
    %v943 = vadd.f32 %v257, %v942
    %v944 = vpop.f32.mrf.mxu0
    %v945 = vadd.f32 %v261, %v944
    %946 = vdwg.mxu0
    %v947 = vxor.u32 %v872, 2147483648
    %v948 = vxor.u32 %v874, 2147483648
    %v949 = vxor.u32 %v943, 2147483648
    %v950 = vmul.f32 %v947, 1.442695
    %v951 = vpow.pop %v950
    %v952 = vmul.f32 %v948, 1.442695
    %v953 = vpow.pop %v952
    %v954 = vmul.f32 %v949, 1.442695
    %v955 = vpow.pop %v954
    %v956 = vadd.f32 %v951, 1.0
    %v957 = vadd.f32 %v953, 1.0
    %v958 = vadd.f32 %v955, 1.0
    %v959 = vrcp.pop %v956
    %v960 = vmul.f32 1.0, %v959
    %v961 = vrcp.pop %v957
    %v962 = vmul.f32 1.0, %v961
    %v963 = vrcp.pop %v958
    %v964 = vmul.f32 1.0, %v963
    %v965 = vtanh.pop %v945
    %v966 = vmul.f32 %v962, %v615
    %v967 = vmul.f32 %v960, %v965
    %v968 = vadd.f32 %v966, %v967
    %v969 = vtanh.pop %v968
    %v970 = vmul.f32 %v964, %v969
    %s971 = scalar_lea.vmem %s0, 16
    %v972 = vld [vmem:[%s971] sm:$0xff]
    %973 = vmatprep.subr.mxu0 %v113
    %974 = vmatpush1.msra.mxu0 %v112
    %975 = vmatprep.subr.mxu0 %v109
    %976 = vmatpush1.msra.mxu0 %v108
    %977 = vmatprep.subr.mxu0 %v105
    %978 = vmatpush1.msra.mxu0 %v104
    %979 = vmatprep.subr.mxu0 %v101
    %980 = vmatpush1.msra.mxu0 %v100
    %981 = vmatprep.subr.mxu0 %v97
    %982 = vmatpush1.msra.mxu0 %v96
    %983 = vmatprep.subr.mxu0 %v93
    %984 = vmatpush1.msra.mxu0 %v92
    %985 = vmatprep.subr.mxu0 %v89
    %986 = vmatpush1.msra.mxu0 %v88
    %987 = vmatprep.subr.mxu0 %v85
    %988 = vmatpush1.msra.mxu0 %v84
    %989 = vmatprep.subr.mxu0 %v81
    %990 = vmatpush1.msra.mxu0 %v80
    %991 = vmatprep.subr.mxu0 %v77
    %992 = vmatpush1.msra.mxu0 %v76
    %993 = vmatprep.subr.mxu0 %v73
    %994 = vmatpush1.msra.mxu0 %v72
    %995 = vmatprep.subr.mxu0 %v69
    %996 = vmatpush1.msra.mxu0 %v68
    %997 = vmatprep.subr.mxu0 %v65
    %998 = vmatpush1.msra.mxu0 %v64
    %999 = vmatprep.subr.mxu0 %v61
    %1000 = vmatpush1.msra.mxu0 %v60
    %1001 = vmatprep.subr.mxu0 %v57
    %1002 = vmatpush1.msra.mxu0 %v56
    %1003 = vmatprep.subr.mxu0 %v53
    %1004 = vmatpush1.msra.mxu0 %v52
    %1005 = vmatprep.subr.mxu0 0.0
    %1006 = vmatpush2.msra.mxu0 0.0
    %1007 = vmatprep.subr.mxu0 0.0
    %1008 = vmatpush2.msra.mxu0 0.0
    %1009 = vmatprep.subr.mxu0 0.0
    %1010 = vmatpush2.msra.mxu0 0.0
    %1011 = vmatprep.subr.mxu0 0.0
    %1012 = vmatpush2.msra.mxu0 0.0
    %1013 = vmatprep.subr.mxu0 0.0
    %1014 = vmatpush2.msra.mxu0 0.0
    %1015 = vmatprep.subr.mxu0 0.0
    %1016 = vmatpush2.msra.mxu0 0.0
    %1017 = vmatprep.subr.mxu0 0.0
    %1018 = vmatpush2.msra.mxu0 0.0
    %1019 = vmatprep.subr.mxu0 0.0
    %1020 = vmatpush2.msra.mxu0 0.0
    %1021 = vmatprep.subr.mxu0 0.0
    %1022 = vmatpush2.msra.mxu0 0.0
    %1023 = vmatprep.subr.mxu0 0.0
    %1024 = vmatpush2.msra.mxu0 0.0
    %1025 = vmatprep.subr.mxu0 0.0
    %1026 = vmatpush2.msra.mxu0 0.0
    %1027 = vmatprep.subr.mxu0 0.0
    %1028 = vmatpush2.msra.mxu0 0.0
    %1029 = vmatprep.subr.mxu0 0.0
    %1030 = vmatpush2.msra.mxu0 0.0
    %1031 = vmatprep.subr.mxu0 0.0
    %1032 = vmatpush2.msra.mxu0 0.0
    %1033 = vmatprep.subr.mxu0 0.0
    %1034 = vmatpush2.msra.mxu0 0.0
    %1035 = vmatprep.subr.mxu0 0.0
    %1036 = vmatpush2.msra.mxu0 0.0
    %1037 = vmatprep.mubr.f32.mxu0 0.0
    %1038 = vmatmul.mubr.f32.gmra.mxu0 %v804
    %v1039 = vpop.f32.mrf.mxu0
    %v1040 = vadd.f32 0.0, %v1039
    %v1041 = vpop.f32.mrf.mxu0
    %v1042 = vadd.f32 0.0, %v1041
    %1043 = vdwg.mxu0
    %1044 = vmatprep.subr.mxu0 %v115
    %1045 = vmatpush1.msra.mxu0 %v114
    %1046 = vmatprep.subr.mxu0 %v111
    %1047 = vmatpush1.msra.mxu0 %v110
    %1048 = vmatprep.subr.mxu0 %v107
    %1049 = vmatpush1.msra.mxu0 %v106
    %1050 = vmatprep.subr.mxu0 %v103
    %1051 = vmatpush1.msra.mxu0 %v102
    %1052 = vmatprep.subr.mxu0 %v99
    %1053 = vmatpush1.msra.mxu0 %v98
    %1054 = vmatprep.subr.mxu0 %v95
    %1055 = vmatpush1.msra.mxu0 %v94
    %1056 = vmatprep.subr.mxu0 %v91
    %1057 = vmatpush1.msra.mxu0 %v90
    %1058 = vmatprep.subr.mxu0 %v87
    %1059 = vmatpush1.msra.mxu0 %v86
    %1060 = vmatprep.subr.mxu0 %v83
    %1061 = vmatpush1.msra.mxu0 %v82
    %1062 = vmatprep.subr.mxu0 %v79
    %1063 = vmatpush1.msra.mxu0 %v78
    %1064 = vmatprep.subr.mxu0 %v75
    %1065 = vmatpush1.msra.mxu0 %v74
    %1066 = vmatprep.subr.mxu0 %v71
    %1067 = vmatpush1.msra.mxu0 %v70
    %1068 = vmatprep.subr.mxu0 %v67
    %1069 = vmatpush1.msra.mxu0 %v66
    %1070 = vmatprep.subr.mxu0 %v63
    %1071 = vmatpush1.msra.mxu0 %v62
    %1072 = vmatprep.subr.mxu0 %v59
    %1073 = vmatpush1.msra.mxu0 %v58
    %1074 = vmatprep.subr.mxu0 %v55
    %1075 = vmatpush1.msra.mxu0 %v54
    %1076 = vmatprep.subr.mxu0 0.0
    %1077 = vmatpush2.msra.mxu0 0.0
    %1078 = vmatprep.subr.mxu0 0.0
    %1079 = vmatpush2.msra.mxu0 0.0
    %1080 = vmatprep.subr.mxu0 0.0
    %1081 = vmatpush2.msra.mxu0 0.0
    %1082 = vmatprep.subr.mxu0 0.0
    %1083 = vmatpush2.msra.mxu0 0.0
    %1084 = vmatprep.subr.mxu0 0.0
    %1085 = vmatpush2.msra.mxu0 0.0
    %1086 = vmatprep.subr.mxu0 0.0
    %1087 = vmatpush2.msra.mxu0 0.0
    %1088 = vmatprep.subr.mxu0 0.0
    %1089 = vmatpush2.msra.mxu0 0.0
    %1090 = vmatprep.subr.mxu0 0.0
    %1091 = vmatpush2.msra.mxu0 0.0
    %1092 = vmatprep.subr.mxu0 0.0
    %1093 = vmatpush2.msra.mxu0 0.0
    %1094 = vmatprep.subr.mxu0 0.0
    %1095 = vmatpush2.msra.mxu0 0.0
    %1096 = vmatprep.subr.mxu0 0.0
    %1097 = vmatpush2.msra.mxu0 0.0
    %1098 = vmatprep.subr.mxu0 0.0
    %1099 = vmatpush2.msra.mxu0 0.0
    %1100 = vmatprep.subr.mxu0 0.0
    %1101 = vmatpush2.msra.mxu0 0.0
    %1102 = vmatprep.subr.mxu0 0.0
    %1103 = vmatpush2.msra.mxu0 0.0
    %1104 = vmatprep.subr.mxu0 0.0
    %1105 = vmatpush2.msra.mxu0 0.0
    %1106 = vmatprep.subr.mxu0 0.0
    %1107 = vmatpush2.msra.mxu0 0.0
    %1108 = vmatprep.mubr.f32.mxu0 0.0
    %1109 = vmatmul.mubr.f32.gmra.mxu0 %v804
    %v1110 = vpop.f32.mrf.mxu0
    %v1111 = vadd.f32 0.0, %v1110
    %v1112 = vpop.f32.mrf.mxu0
    %v1113 = vadd.f32 0.0, %v1112
    %1114 = vdwg.mxu0
    %v1119 = vcombine.low %v1040, %v1042
    %v1120 = vcombine.low %v1111, %v1113
    %v1122 = vunpack.c.l.s4 1983009808
    %v1123 = vunpack.c.0.s8 %v1122
    %v1124 = vlaneseq
    %v1125 = vshrl.u32 %v1124, 7
    %v1126 = vsub.s32 %v1123, %v1125
    %v1127 = vrot.slane %v1119, %v1126
    %v1129 = vunpack.c.l.s4 1983009808
    %v1130 = vunpack.c.0.s8 %v1129
    %v1131 = vlaneseq
    %v1132 = vshrl.u32 %v1131, 7
    %v1133 = vsub.s32 %v1130, %v1132
    %v1134 = vrot.slane %v1120, %v1133
    %v1135 = vcombine.low %v1127, %v1134
    %v1137 = vadd.f32 %v972, %v1135
    %v1138 = vxor.u32 %v1137, 2147483648
    %v1139 = vmul.f32 %v1138, 1.442695
    %v1140 = vpow.pop %v1139
    %v1141 = vadd.f32 %v1140, 1.0
    %v1142 = vrcp.pop %v1141
    %v1143 = vmul.f32 1.0, %v1142
    %v1145 = vrot.slane %v1137, 6
    %v1147 = vtanh.pop %v1145
    %v1149 = vrot.slane %v1143, 2
    %v1151 = vmul.f32 %v1149, %v800
    %v1152 = vmul.f32 %v1143, %v1147
    %v1153 = vadd.f32 %v1151, %v1152
    %v1154 = vtanh.pop %v1153
    %v1155 = vrot.slane %v1143, 4
    %v1157 = vmul.f32 %v1155, %v1154
    %1158 = vmatprep.subr.mxu0 %v177
    %1159 = vmatpush1.msra.mxu0 %v176
    %1160 = vmatprep.subr.mxu0 %v173
    %1161 = vmatpush1.msra.mxu0 %v172
    %1162 = vmatprep.subr.mxu0 %v169
    %1163 = vmatpush1.msra.mxu0 %v168
    %1164 = vmatprep.subr.mxu0 %v165
    %1165 = vmatpush1.msra.mxu0 %v164
    %1166 = vmatprep.subr.mxu0 %v161
    %1167 = vmatpush1.msra.mxu0 %v160
    %1168 = vmatprep.subr.mxu0 %v157
    %1169 = vmatpush1.msra.mxu0 %v156
    %1170 = vmatprep.subr.mxu0 %v153
    %1171 = vmatpush1.msra.mxu0 %v152
    %1172 = vmatprep.subr.mxu0 %v149
    %1173 = vmatpush1.msra.mxu0 %v148
    %1174 = vmatprep.subr.mxu0 %v145
    %1175 = vmatpush1.msra.mxu0 %v144
    %1176 = vmatprep.subr.mxu0 %v141
    %1177 = vmatpush1.msra.mxu0 %v140
    %1178 = vmatprep.subr.mxu0 %v137
    %1179 = vmatpush1.msra.mxu0 %v136
    %1180 = vmatprep.subr.mxu0 %v133
    %1181 = vmatpush1.msra.mxu0 %v132
    %1182 = vmatprep.subr.mxu0 %v129
    %1183 = vmatpush1.msra.mxu0 %v128
    %1184 = vmatprep.subr.mxu0 %v125
    %1185 = vmatpush1.msra.mxu0 %v124
    %1186 = vmatprep.subr.mxu0 %v121
    %1187 = vmatpush1.msra.mxu0 %v120
    %1188 = vmatprep.subr.mxu0 %v117
    %1189 = vmatpush1.msra.mxu0 %v116
    %1190 = vmatprep.subr.mxu0 %v241
    %1191 = vmatpush2.msra.mxu0 %v240
    %1192 = vmatprep.subr.mxu0 %v237
    %1193 = vmatpush2.msra.mxu0 %v236
    %1194 = vmatprep.subr.mxu0 %v233
    %1195 = vmatpush2.msra.mxu0 %v232
    %1196 = vmatprep.subr.mxu0 %v229
    %1197 = vmatpush2.msra.mxu0 %v228
    %1198 = vmatprep.subr.mxu0 %v225
    %1199 = vmatpush2.msra.mxu0 %v224
    %1200 = vmatprep.subr.mxu0 %v221
    %1201 = vmatpush2.msra.mxu0 %v220
    %1202 = vmatprep.subr.mxu0 %v217
    %1203 = vmatpush2.msra.mxu0 %v216
    %1204 = vmatprep.subr.mxu0 %v213
    %1205 = vmatpush2.msra.mxu0 %v212
    %1206 = vmatprep.subr.mxu0 %v209
    %1207 = vmatpush2.msra.mxu0 %v208
    %1208 = vmatprep.subr.mxu0 %v205
    %1209 = vmatpush2.msra.mxu0 %v204
    %1210 = vmatprep.subr.mxu0 %v201
    %1211 = vmatpush2.msra.mxu0 %v200
    %1212 = vmatprep.subr.mxu0 %v197
    %1213 = vmatpush2.msra.mxu0 %v196
    %1214 = vmatprep.subr.mxu0 %v193
    %1215 = vmatpush2.msra.mxu0 %v192
    %1216 = vmatprep.subr.mxu0 %v189
    %1217 = vmatpush2.msra.mxu0 %v188
    %1218 = vmatprep.subr.mxu0 %v185
    %1219 = vmatpush2.msra.mxu0 %v184
    %1220 = vmatprep.subr.mxu0 %v181
    %1221 = vmatpush2.msra.mxu0 %v180
    %1222 = vmatprep.mubr.f32.mxu0 %v970
    %1223 = vmatmul.mubr.f32.gmra.mxu0 %v1157
    %v1224 = vpop.f32.mrf.mxu0
    %v1225 = vadd.f32 %v249, %v1224
    %v1226 = vpop.f32.mrf.mxu0
    %v1227 = vadd.f32 %v253, %v1226
    %1228 = vdwg.mxu0
    %1229 = vmatprep.subr.mxu0 %v179
    %1230 = vmatpush1.msra.mxu0 %v178
    %1231 = vmatprep.subr.mxu0 %v175
    %1232 = vmatpush1.msra.mxu0 %v174
    %1233 = vmatprep.subr.mxu0 %v171
    %1234 = vmatpush1.msra.mxu0 %v170
    %1235 = vmatprep.subr.mxu0 %v167
    %1236 = vmatpush1.msra.mxu0 %v166
    %1237 = vmatprep.subr.mxu0 %v163
    %1238 = vmatpush1.msra.mxu0 %v162
    %1239 = vmatprep.subr.mxu0 %v159
    %1240 = vmatpush1.msra.mxu0 %v158
    %1241 = vmatprep.subr.mxu0 %v155
    %1242 = vmatpush1.msra.mxu0 %v154
    %1243 = vmatprep.subr.mxu0 %v151
    %1244 = vmatpush1.msra.mxu0 %v150
    %1245 = vmatprep.subr.mxu0 %v147
    %1246 = vmatpush1.msra.mxu0 %v146
    %1247 = vmatprep.subr.mxu0 %v143
    %1248 = vmatpush1.msra.mxu0 %v142
    %1249 = vmatprep.subr.mxu0 %v139
    %1250 = vmatpush1.msra.mxu0 %v138
    %1251 = vmatprep.subr.mxu0 %v135
    %1252 = vmatpush1.msra.mxu0 %v134
    %1253 = vmatprep.subr.mxu0 %v131
    %1254 = vmatpush1.msra.mxu0 %v130
    %1255 = vmatprep.subr.mxu0 %v127
    %1256 = vmatpush1.msra.mxu0 %v126
    %1257 = vmatprep.subr.mxu0 %v123
    %1258 = vmatpush1.msra.mxu0 %v122
    %1259 = vmatprep.subr.mxu0 %v119
    %1260 = vmatpush1.msra.mxu0 %v118
    %1261 = vmatprep.subr.mxu0 %v243
    %1262 = vmatpush2.msra.mxu0 %v242
    %1263 = vmatprep.subr.mxu0 %v239
    %1264 = vmatpush2.msra.mxu0 %v238
    %1265 = vmatprep.subr.mxu0 %v235
    %1266 = vmatpush2.msra.mxu0 %v234
    %1267 = vmatprep.subr.mxu0 %v231
    %1268 = vmatpush2.msra.mxu0 %v230
    %1269 = vmatprep.subr.mxu0 %v227
    %1270 = vmatpush2.msra.mxu0 %v226
    %1271 = vmatprep.subr.mxu0 %v223
    %1272 = vmatpush2.msra.mxu0 %v222
    %1273 = vmatprep.subr.mxu0 %v219
    %1274 = vmatpush2.msra.mxu0 %v218
    %1275 = vmatprep.subr.mxu0 %v215
    %1276 = vmatpush2.msra.mxu0 %v214
    %1277 = vmatprep.subr.mxu0 %v211
    %1278 = vmatpush2.msra.mxu0 %v210
    %1279 = vmatprep.subr.mxu0 %v207
    %1280 = vmatpush2.msra.mxu0 %v206
    %1281 = vmatprep.subr.mxu0 %v203
    %1282 = vmatpush2.msra.mxu0 %v202
    %1283 = vmatprep.subr.mxu0 %v199
    %1284 = vmatpush2.msra.mxu0 %v198
    %1285 = vmatprep.subr.mxu0 %v195
    %1286 = vmatpush2.msra.mxu0 %v194
    %1287 = vmatprep.subr.mxu0 %v191
    %1288 = vmatpush2.msra.mxu0 %v190
    %1289 = vmatprep.subr.mxu0 %v187
    %1290 = vmatpush2.msra.mxu0 %v186
    %1291 = vmatprep.subr.mxu0 %v183
    %1292 = vmatpush2.msra.mxu0 %v182
    %1293 = vmatprep.mubr.f32.mxu0 %v970
    %1294 = vmatmul.mubr.f32.gmra.mxu0 %v1157
    %v1295 = vpop.f32.mrf.mxu0
    %v1296 = vadd.f32 %v257, %v1295
    %v1297 = vpop.f32.mrf.mxu0
    %v1298 = vadd.f32 %v261, %v1297
    %1299 = vdwg.mxu0
    %v1300 = vxor.u32 %v1225, 2147483648
    %v1301 = vxor.u32 %v1227, 2147483648
    %v1302 = vxor.u32 %v1296, 2147483648
    %v1303 = vmul.f32 %v1300, 1.442695
    %v1304 = vpow.pop %v1303
    %v1305 = vmul.f32 %v1301, 1.442695
    %v1306 = vpow.pop %v1305
    %v1307 = vmul.f32 %v1302, 1.442695
    %v1308 = vpow.pop %v1307
    %v1309 = vadd.f32 %v1304, 1.0
    %v1310 = vadd.f32 %v1306, 1.0
    %v1311 = vadd.f32 %v1308, 1.0
    %v1312 = vrcp.pop %v1309
    %v1313 = vmul.f32 1.0, %v1312
    %v1314 = vrcp.pop %v1310
    %v1315 = vmul.f32 1.0, %v1314
    %v1316 = vrcp.pop %v1311
    %v1317 = vmul.f32 1.0, %v1316
    %v1318 = vtanh.pop %v1298
    %v1319 = vmul.f32 %v1315, %v968
    %v1320 = vmul.f32 %v1313, %v1318
    %v1321 = vadd.f32 %v1319, %v1320
    %v1322 = vtanh.pop %v1321
    %v1323 = vmul.f32 %v1317, %v1322
    %s1324 = scalar_lea.vmem %s0, 24
    %v1325 = vld [vmem:[%s1324] sm:$0xff]
    %1326 = vmatprep.subr.mxu0 %v113
    %1327 = vmatpush1.msra.mxu0 %v112
    %1328 = vmatprep.subr.mxu0 %v109
    %1329 = vmatpush1.msra.mxu0 %v108
    %1330 = vmatprep.subr.mxu0 %v105
    %1331 = vmatpush1.msra.mxu0 %v104
    %1332 = vmatprep.subr.mxu0 %v101
    %1333 = vmatpush1.msra.mxu0 %v100
    %1334 = vmatprep.subr.mxu0 %v97
    %1335 = vmatpush1.msra.mxu0 %v96
    %1336 = vmatprep.subr.mxu0 %v93
    %1337 = vmatpush1.msra.mxu0 %v92
    %1338 = vmatprep.subr.mxu0 %v89
    %1339 = vmatpush1.msra.mxu0 %v88
    %1340 = vmatprep.subr.mxu0 %v85
    %1341 = vmatpush1.msra.mxu0 %v84
    %1342 = vmatprep.subr.mxu0 %v81
    %1343 = vmatpush1.msra.mxu0 %v80
    %1344 = vmatprep.subr.mxu0 %v77
    %1345 = vmatpush1.msra.mxu0 %v76
    %1346 = vmatprep.subr.mxu0 %v73
    %1347 = vmatpush1.msra.mxu0 %v72
    %1348 = vmatprep.subr.mxu0 %v69
    %1349 = vmatpush1.msra.mxu0 %v68
    %1350 = vmatprep.subr.mxu0 %v65
    %1351 = vmatpush1.msra.mxu0 %v64
    %1352 = vmatprep.subr.mxu0 %v61
    %1353 = vmatpush1.msra.mxu0 %v60
    %1354 = vmatprep.subr.mxu0 %v57
    %1355 = vmatpush1.msra.mxu0 %v56
    %1356 = vmatprep.subr.mxu0 %v53
    %1357 = vmatpush1.msra.mxu0 %v52
    %1358 = vmatprep.subr.mxu0 0.0
    %1359 = vmatpush2.msra.mxu0 0.0
    %1360 = vmatprep.subr.mxu0 0.0
    %1361 = vmatpush2.msra.mxu0 0.0
    %1362 = vmatprep.subr.mxu0 0.0
    %1363 = vmatpush2.msra.mxu0 0.0
    %1364 = vmatprep.subr.mxu0 0.0
    %1365 = vmatpush2.msra.mxu0 0.0
    %1366 = vmatprep.subr.mxu0 0.0
    %1367 = vmatpush2.msra.mxu0 0.0
    %1368 = vmatprep.subr.mxu0 0.0
    %1369 = vmatpush2.msra.mxu0 0.0
    %1370 = vmatprep.subr.mxu0 0.0
    %1371 = vmatpush2.msra.mxu0 0.0
    %1372 = vmatprep.subr.mxu0 0.0
    %1373 = vmatpush2.msra.mxu0 0.0
    %1374 = vmatprep.subr.mxu0 0.0
    %1375 = vmatpush2.msra.mxu0 0.0
    %1376 = vmatprep.subr.mxu0 0.0
    %1377 = vmatpush2.msra.mxu0 0.0
    %1378 = vmatprep.subr.mxu0 0.0
    %1379 = vmatpush2.msra.mxu0 0.0
    %1380 = vmatprep.subr.mxu0 0.0
    %1381 = vmatpush2.msra.mxu0 0.0
    %1382 = vmatprep.subr.mxu0 0.0
    %1383 = vmatpush2.msra.mxu0 0.0
    %1384 = vmatprep.subr.mxu0 0.0
    %1385 = vmatpush2.msra.mxu0 0.0
    %1386 = vmatprep.subr.mxu0 0.0
    %1387 = vmatpush2.msra.mxu0 0.0
    %1388 = vmatprep.subr.mxu0 0.0
    %1389 = vmatpush2.msra.mxu0 0.0
    %1390 = vmatprep.mubr.f32.mxu0 0.0
    %1391 = vmatmul.mubr.f32.gmra.mxu0 %v1157
    %v1392 = vpop.f32.mrf.mxu0
    %v1393 = vadd.f32 0.0, %v1392
    %v1394 = vpop.f32.mrf.mxu0
    %v1395 = vadd.f32 0.0, %v1394
    %1396 = vdwg.mxu0
    %1397 = vmatprep.subr.mxu0 %v115
    %1398 = vmatpush1.msra.mxu0 %v114
    %1399 = vmatprep.subr.mxu0 %v111
    %1400 = vmatpush1.msra.mxu0 %v110
    %1401 = vmatprep.subr.mxu0 %v107
    %1402 = vmatpush1.msra.mxu0 %v106
    %1403 = vmatprep.subr.mxu0 %v103
    %1404 = vmatpush1.msra.mxu0 %v102
    %1405 = vmatprep.subr.mxu0 %v99
    %1406 = vmatpush1.msra.mxu0 %v98
    %1407 = vmatprep.subr.mxu0 %v95
    %1408 = vmatpush1.msra.mxu0 %v94
    %1409 = vmatprep.subr.mxu0 %v91
    %1410 = vmatpush1.msra.mxu0 %v90
    %1411 = vmatprep.subr.mxu0 %v87
    %1412 = vmatpush1.msra.mxu0 %v86
    %1413 = vmatprep.subr.mxu0 %v83
    %1414 = vmatpush1.msra.mxu0 %v82
    %1415 = vmatprep.subr.mxu0 %v79
    %1416 = vmatpush1.msra.mxu0 %v78
    %1417 = vmatprep.subr.mxu0 %v75
    %1418 = vmatpush1.msra.mxu0 %v74
    %1419 = vmatprep.subr.mxu0 %v71
    %1420 = vmatpush1.msra.mxu0 %v70
    %1421 = vmatprep.subr.mxu0 %v67
    %1422 = vmatpush1.msra.mxu0 %v66
    %1423 = vmatprep.subr.mxu0 %v63
    %1424 = vmatpush1.msra.mxu0 %v62
    %1425 = vmatprep.subr.mxu0 %v59
    %1426 = vmatpush1.msra.mxu0 %v58
    %1427 = vmatprep.subr.mxu0 %v55
    %1428 = vmatpush1.msra.mxu0 %v54
    %1429 = vmatprep.subr.mxu0 0.0
    %1430 = vmatpush2.msra.mxu0 0.0
    %1431 = vmatprep.subr.mxu0 0.0
    %1432 = vmatpush2.msra.mxu0 0.0
    %1433 = vmatprep.subr.mxu0 0.0
    %1434 = vmatpush2.msra.mxu0 0.0
    %1435 = vmatprep.subr.mxu0 0.0
    %1436 = vmatpush2.msra.mxu0 0.0
    %1437 = vmatprep.subr.mxu0 0.0
    %1438 = vmatpush2.msra.mxu0 0.0
    %1439 = vmatprep.subr.mxu0 0.0
    %1440 = vmatpush2.msra.mxu0 0.0
    %1441 = vmatprep.subr.mxu0 0.0
    %1442 = vmatpush2.msra.mxu0 0.0
    %1443 = vmatprep.subr.mxu0 0.0
    %1444 = vmatpush2.msra.mxu0 0.0
    %1445 = vmatprep.subr.mxu0 0.0
    %1446 = vmatpush2.msra.mxu0 0.0
    %1447 = vmatprep.subr.mxu0 0.0
    %1448 = vmatpush2.msra.mxu0 0.0
    %1449 = vmatprep.subr.mxu0 0.0
    %1450 = vmatpush2.msra.mxu0 0.0
    %1451 = vmatprep.subr.mxu0 0.0
    %1452 = vmatpush2.msra.mxu0 0.0
    %1453 = vmatprep.subr.mxu0 0.0
    %1454 = vmatpush2.msra.mxu0 0.0
    %1455 = vmatprep.subr.mxu0 0.0
    %1456 = vmatpush2.msra.mxu0 0.0
    %1457 = vmatprep.subr.mxu0 0.0
    %1458 = vmatpush2.msra.mxu0 0.0
    %1459 = vmatprep.subr.mxu0 0.0
    %1460 = vmatpush2.msra.mxu0 0.0
    %1461 = vmatprep.mubr.f32.mxu0 0.0
    %1462 = vmatmul.mubr.f32.gmra.mxu0 %v1157
    %v1463 = vpop.f32.mrf.mxu0
    %v1464 = vadd.f32 0.0, %v1463
    %v1465 = vpop.f32.mrf.mxu0
    %v1466 = vadd.f32 0.0, %v1465
    %1467 = vdwg.mxu0
    %v1472 = vcombine.low %v1393, %v1395
    %v1473 = vcombine.low %v1464, %v1466
    %v1475 = vunpack.c.l.s4 1983009808
    %v1476 = vunpack.c.0.s8 %v1475
    %v1477 = vlaneseq
    %v1478 = vshrl.u32 %v1477, 7
    %v1479 = vsub.s32 %v1476, %v1478
    %v1480 = vrot.slane %v1472, %v1479
    %v1482 = vunpack.c.l.s4 1983009808
    %v1483 = vunpack.c.0.s8 %v1482
    %v1484 = vlaneseq
    %v1485 = vshrl.u32 %v1484, 7
    %v1486 = vsub.s32 %v1483, %v1485
    %v1487 = vrot.slane %v1473, %v1486
    %v1488 = vcombine.low %v1480, %v1487
    %v1490 = vadd.f32 %v1325, %v1488
    %v1491 = vxor.u32 %v1490, 2147483648
    %v1492 = vmul.f32 %v1491, 1.442695
    %v1493 = vpow.pop %v1492
    %v1494 = vadd.f32 %v1493, 1.0
    %v1495 = vrcp.pop %v1494
    %v1496 = vmul.f32 1.0, %v1495
    %v1498 = vrot.slane %v1490, 6
    %v1500 = vtanh.pop %v1498
    %v1502 = vrot.slane %v1496, 2
    %v1504 = vmul.f32 %v1502, %v1153
    %v1505 = vmul.f32 %v1496, %v1500
    %v1506 = vadd.f32 %v1504, %v1505
    %v1507 = vtanh.pop %v1506
    %v1508 = vrot.slane %v1496, 4
    %v1510 = vmul.f32 %v1508, %v1507
    %1511 = vmatprep.subr.mxu0 %v177
    %1512 = vmatpush1.msra.mxu0 %v176
    %1513 = vmatprep.subr.mxu0 %v173
    %1514 = vmatpush1.msra.mxu0 %v172
    %1515 = vmatprep.subr.mxu0 %v169
    %1516 = vmatpush1.msra.mxu0 %v168
    %1517 = vmatprep.subr.mxu0 %v165
    %1518 = vmatpush1.msra.mxu0 %v164
    %1519 = vmatprep.subr.mxu0 %v161
    %1520 = vmatpush1.msra.mxu0 %v160
    %1521 = vmatprep.subr.mxu0 %v157
    %1522 = vmatpush1.msra.mxu0 %v156
    %1523 = vmatprep.subr.mxu0 %v153
    %1524 = vmatpush1.msra.mxu0 %v152
    %1525 = vmatprep.subr.mxu0 %v149
    %1526 = vmatpush1.msra.mxu0 %v148
    %1527 = vmatprep.subr.mxu0 %v145
    %1528 = vmatpush1.msra.mxu0 %v144
    %1529 = vmatprep.subr.mxu0 %v141
    %1530 = vmatpush1.msra.mxu0 %v140
    %1531 = vmatprep.subr.mxu0 %v137
    %1532 = vmatpush1.msra.mxu0 %v136
    %1533 = vmatprep.subr.mxu0 %v133
    %1534 = vmatpush1.msra.mxu0 %v132
    %1535 = vmatprep.subr.mxu0 %v129
    %1536 = vmatpush1.msra.mxu0 %v128
    %1537 = vmatprep.subr.mxu0 %v125
    %1538 = vmatpush1.msra.mxu0 %v124
    %1539 = vmatprep.subr.mxu0 %v121
    %1540 = vmatpush1.msra.mxu0 %v120
    %1541 = vmatprep.subr.mxu0 %v117
    %1542 = vmatpush1.msra.mxu0 %v116
    %1543 = vmatprep.subr.mxu0 %v241
    %1544 = vmatpush2.msra.mxu0 %v240
    %1545 = vmatprep.subr.mxu0 %v237
    %1546 = vmatpush2.msra.mxu0 %v236
    %1547 = vmatprep.subr.mxu0 %v233
    %1548 = vmatpush2.msra.mxu0 %v232
    %1549 = vmatprep.subr.mxu0 %v229
    %1550 = vmatpush2.msra.mxu0 %v228
    %1551 = vmatprep.subr.mxu0 %v225
    %1552 = vmatpush2.msra.mxu0 %v224
    %1553 = vmatprep.subr.mxu0 %v221
    %1554 = vmatpush2.msra.mxu0 %v220
    %1555 = vmatprep.subr.mxu0 %v217
    %1556 = vmatpush2.msra.mxu0 %v216
    %1557 = vmatprep.subr.mxu0 %v213
    %1558 = vmatpush2.msra.mxu0 %v212
    %1559 = vmatprep.subr.mxu0 %v209
    %1560 = vmatpush2.msra.mxu0 %v208
    %1561 = vmatprep.subr.mxu0 %v205
    %1562 = vmatpush2.msra.mxu0 %v204
    %1563 = vmatprep.subr.mxu0 %v201
    %1564 = vmatpush2.msra.mxu0 %v200
    %1565 = vmatprep.subr.mxu0 %v197
    %1566 = vmatpush2.msra.mxu0 %v196
    %1567 = vmatprep.subr.mxu0 %v193
    %1568 = vmatpush2.msra.mxu0 %v192
    %1569 = vmatprep.subr.mxu0 %v189
    %1570 = vmatpush2.msra.mxu0 %v188
    %1571 = vmatprep.subr.mxu0 %v185
    %1572 = vmatpush2.msra.mxu0 %v184
    %1573 = vmatprep.subr.mxu0 %v181
    %1574 = vmatpush2.msra.mxu0 %v180
    %1575 = vmatprep.mubr.f32.mxu0 %v1323
    %1576 = vmatmul.mubr.f32.gmra.mxu0 %v1510
    %v1577 = vpop.f32.mrf.mxu0
    %v1578 = vadd.f32 %v249, %v1577
    %v1579 = vpop.f32.mrf.mxu0
    %v1580 = vadd.f32 %v253, %v1579
    %1581 = vdwg.mxu0
    %1582 = vmatprep.subr.mxu0 %v179
    %1583 = vmatpush1.msra.mxu0 %v178
    %1584 = vmatprep.subr.mxu0 %v175
    %1585 = vmatpush1.msra.mxu0 %v174
    %1586 = vmatprep.subr.mxu0 %v171
    %1587 = vmatpush1.msra.mxu0 %v170
    %1588 = vmatprep.subr.mxu0 %v167
    %1589 = vmatpush1.msra.mxu0 %v166
    %1590 = vmatprep.subr.mxu0 %v163
    %1591 = vmatpush1.msra.mxu0 %v162
    %1592 = vmatprep.subr.mxu0 %v159
    %1593 = vmatpush1.msra.mxu0 %v158
    %1594 = vmatprep.subr.mxu0 %v155
    %1595 = vmatpush1.msra.mxu0 %v154
    %1596 = vmatprep.subr.mxu0 %v151
    %1597 = vmatpush1.msra.mxu0 %v150
    %1598 = vmatprep.subr.mxu0 %v147
    %1599 = vmatpush1.msra.mxu0 %v146
    %1600 = vmatprep.subr.mxu0 %v143
    %1601 = vmatpush1.msra.mxu0 %v142
    %1602 = vmatprep.subr.mxu0 %v139
    %1603 = vmatpush1.msra.mxu0 %v138
    %1604 = vmatprep.subr.mxu0 %v135
    %1605 = vmatpush1.msra.mxu0 %v134
    %1606 = vmatprep.subr.mxu0 %v131
    %1607 = vmatpush1.msra.mxu0 %v130
    %1608 = vmatprep.subr.mxu0 %v127
    %1609 = vmatpush1.msra.mxu0 %v126
    %1610 = vmatprep.subr.mxu0 %v123
    %1611 = vmatpush1.msra.mxu0 %v122
    %1612 = vmatprep.subr.mxu0 %v119
    %1613 = vmatpush1.msra.mxu0 %v118
    %1614 = vmatprep.subr.mxu0 %v243
    %1615 = vmatpush2.msra.mxu0 %v242
    %1616 = vmatprep.subr.mxu0 %v239
    %1617 = vmatpush2.msra.mxu0 %v238
    %1618 = vmatprep.subr.mxu0 %v235
    %1619 = vmatpush2.msra.mxu0 %v234
    %1620 = vmatprep.subr.mxu0 %v231
    %1621 = vmatpush2.msra.mxu0 %v230
    %1622 = vmatprep.subr.mxu0 %v227
    %1623 = vmatpush2.msra.mxu0 %v226
    %1624 = vmatprep.subr.mxu0 %v223
    %1625 = vmatpush2.msra.mxu0 %v222
    %1626 = vmatprep.subr.mxu0 %v219
    %1627 = vmatpush2.msra.mxu0 %v218
    %1628 = vmatprep.subr.mxu0 %v215
    %1629 = vmatpush2.msra.mxu0 %v214
    %1630 = vmatprep.subr.mxu0 %v211
    %1631 = vmatpush2.msra.mxu0 %v210
    %1632 = vmatprep.subr.mxu0 %v207
    %1633 = vmatpush2.msra.mxu0 %v206
    %1634 = vmatprep.subr.mxu0 %v203
    %1635 = vmatpush2.msra.mxu0 %v202
    %1636 = vmatprep.subr.mxu0 %v199
    %1637 = vmatpush2.msra.mxu0 %v198
    %1638 = vmatprep.subr.mxu0 %v195
    %1639 = vmatpush2.msra.mxu0 %v194
    %1640 = vmatprep.subr.mxu0 %v191
    %1641 = vmatpush2.msra.mxu0 %v190
    %1642 = vmatprep.subr.mxu0 %v187
    %1643 = vmatpush2.msra.mxu0 %v186
    %1644 = vmatprep.subr.mxu0 %v183
    %1645 = vmatpush2.msra.mxu0 %v182
    %1646 = vmatprep.mubr.f32.mxu0 %v1323
    %1647 = vmatmul.mubr.f32.gmra.mxu0 %v1510
    %v1648 = vpop.f32.mrf.mxu0
    %v1649 = vadd.f32 %v257, %v1648
    %v1650 = vpop.f32.mrf.mxu0
    %v1651 = vadd.f32 %v261, %v1650
    %1652 = vdwg.mxu0
    %v1653 = vxor.u32 %v1578, 2147483648
    %v1654 = vxor.u32 %v1580, 2147483648
    %v1655 = vxor.u32 %v1649, 2147483648
    %v1656 = vmul.f32 %v1653, 1.442695
    %v1657 = vpow.pop %v1656
    %v1658 = vmul.f32 %v1654, 1.442695
    %v1659 = vpow.pop %v1658
    %v1660 = vmul.f32 %v1655, 1.442695
    %v1661 = vpow.pop %v1660
    %v1662 = vadd.f32 %v1657, 1.0
    %v1663 = vadd.f32 %v1659, 1.0
    %v1664 = vadd.f32 %v1661, 1.0
    %v1665 = vrcp.pop %v1662
    %v1666 = vmul.f32 1.0, %v1665
    %v1667 = vrcp.pop %v1663
    %v1668 = vmul.f32 1.0, %v1667
    %v1669 = vrcp.pop %v1664
    %v1670 = vmul.f32 1.0, %v1669
    %v1671 = vtanh.pop %v1651
    %v1672 = vmul.f32 %v1668, %v1321
    %v1673 = vmul.f32 %v1666, %v1671
    %v1674 = vadd.f32 %v1672, %v1673
    %v1675 = vtanh.pop %v1674
    %v1676 = vmul.f32 %v1670, %v1675
    %s1677 = scalar_lea.vmem %s0, 32
    %v1678 = vld [vmem:[%s1677] sm:$0xff]
    %1679 = vmatprep.subr.mxu0 %v113
    %1680 = vmatpush1.msra.mxu0 %v112
    %1681 = vmatprep.subr.mxu0 %v109
    %1682 = vmatpush1.msra.mxu0 %v108
    %1683 = vmatprep.subr.mxu0 %v105
    %1684 = vmatpush1.msra.mxu0 %v104
    %1685 = vmatprep.subr.mxu0 %v101
    %1686 = vmatpush1.msra.mxu0 %v100
    %1687 = vmatprep.subr.mxu0 %v97
    %1688 = vmatpush1.msra.mxu0 %v96
    %1689 = vmatprep.subr.mxu0 %v93
    %1690 = vmatpush1.msra.mxu0 %v92
    %1691 = vmatprep.subr.mxu0 %v89
    %1692 = vmatpush1.msra.mxu0 %v88
    %1693 = vmatprep.subr.mxu0 %v85
    %1694 = vmatpush1.msra.mxu0 %v84
    %1695 = vmatprep.subr.mxu0 %v81
    %1696 = vmatpush1.msra.mxu0 %v80
    %1697 = vmatprep.subr.mxu0 %v77
    %1698 = vmatpush1.msra.mxu0 %v76
    %1699 = vmatprep.subr.mxu0 %v73
    %1700 = vmatpush1.msra.mxu0 %v72
    %1701 = vmatprep.subr.mxu0 %v69
    %1702 = vmatpush1.msra.mxu0 %v68
    %1703 = vmatprep.subr.mxu0 %v65
    %1704 = vmatpush1.msra.mxu0 %v64
    %1705 = vmatprep.subr.mxu0 %v61
    %1706 = vmatpush1.msra.mxu0 %v60
    %1707 = vmatprep.subr.mxu0 %v57
    %1708 = vmatpush1.msra.mxu0 %v56
    %1709 = vmatprep.subr.mxu0 %v53
    %1710 = vmatpush1.msra.mxu0 %v52
    %1711 = vmatprep.subr.mxu0 0.0
    %1712 = vmatpush2.msra.mxu0 0.0
    %1713 = vmatprep.subr.mxu0 0.0
    %1714 = vmatpush2.msra.mxu0 0.0
    %1715 = vmatprep.subr.mxu0 0.0
    %1716 = vmatpush2.msra.mxu0 0.0
    %1717 = vmatprep.subr.mxu0 0.0
    %1718 = vmatpush2.msra.mxu0 0.0
    %1719 = vmatprep.subr.mxu0 0.0
    %1720 = vmatpush2.msra.mxu0 0.0
    %1721 = vmatprep.subr.mxu0 0.0
    %1722 = vmatpush2.msra.mxu0 0.0
    %1723 = vmatprep.subr.mxu0 0.0
    %1724 = vmatpush2.msra.mxu0 0.0
    %1725 = vmatprep.subr.mxu0 0.0
    %1726 = vmatpush2.msra.mxu0 0.0
    %1727 = vmatprep.subr.mxu0 0.0
    %1728 = vmatpush2.msra.mxu0 0.0
    %1729 = vmatprep.subr.mxu0 0.0
    %1730 = vmatpush2.msra.mxu0 0.0
    %1731 = vmatprep.subr.mxu0 0.0
    %1732 = vmatpush2.msra.mxu0 0.0
    %1733 = vmatprep.subr.mxu0 0.0
    %1734 = vmatpush2.msra.mxu0 0.0
    %1735 = vmatprep.subr.mxu0 0.0
    %1736 = vmatpush2.msra.mxu0 0.0
    %1737 = vmatprep.subr.mxu0 0.0
    %1738 = vmatpush2.msra.mxu0 0.0
    %1739 = vmatprep.subr.mxu0 0.0
    %1740 = vmatpush2.msra.mxu0 0.0
    %1741 = vmatprep.subr.mxu0 0.0
    %1742 = vmatpush2.msra.mxu0 0.0
    %1743 = vmatprep.mubr.f32.mxu0 0.0
    %1744 = vmatmul.mubr.f32.gmra.mxu0 %v1510
    %v1745 = vpop.f32.mrf.mxu0
    %v1746 = vadd.f32 0.0, %v1745
    %v1747 = vpop.f32.mrf.mxu0
    %v1748 = vadd.f32 0.0, %v1747
    %1749 = vdwg.mxu0
    %1750 = vmatprep.subr.mxu0 %v115
    %1751 = vmatpush1.msra.mxu0 %v114
    %1752 = vmatprep.subr.mxu0 %v111
    %1753 = vmatpush1.msra.mxu0 %v110
    %1754 = vmatprep.subr.mxu0 %v107
    %1755 = vmatpush1.msra.mxu0 %v106
    %1756 = vmatprep.subr.mxu0 %v103
    %1757 = vmatpush1.msra.mxu0 %v102
    %1758 = vmatprep.subr.mxu0 %v99
    %1759 = vmatpush1.msra.mxu0 %v98
    %1760 = vmatprep.subr.mxu0 %v95
    %1761 = vmatpush1.msra.mxu0 %v94
    %1762 = vmatprep.subr.mxu0 %v91
    %1763 = vmatpush1.msra.mxu0 %v90
    %1764 = vmatprep.subr.mxu0 %v87
    %1765 = vmatpush1.msra.mxu0 %v86
    %1766 = vmatprep.subr.mxu0 %v83
    %1767 = vmatpush1.msra.mxu0 %v82
    %1768 = vmatprep.subr.mxu0 %v79
    %1769 = vmatpush1.msra.mxu0 %v78
    %1770 = vmatprep.subr.mxu0 %v75
    %1771 = vmatpush1.msra.mxu0 %v74
    %1772 = vmatprep.subr.mxu0 %v71
    %1773 = vmatpush1.msra.mxu0 %v70
    %1774 = vmatprep.subr.mxu0 %v67
    %1775 = vmatpush1.msra.mxu0 %v66
    %1776 = vmatprep.subr.mxu0 %v63
    %1777 = vmatpush1.msra.mxu0 %v62
    %1778 = vmatprep.subr.mxu0 %v59
    %1779 = vmatpush1.msra.mxu0 %v58
    %1780 = vmatprep.subr.mxu0 %v55
    %1781 = vmatpush1.msra.mxu0 %v54
    %1782 = vmatprep.subr.mxu0 0.0
    %1783 = vmatpush2.msra.mxu0 0.0
    %1784 = vmatprep.subr.mxu0 0.0
    %1785 = vmatpush2.msra.mxu0 0.0
    %1786 = vmatprep.subr.mxu0 0.0
    %1787 = vmatpush2.msra.mxu0 0.0
    %1788 = vmatprep.subr.mxu0 0.0
    %1789 = vmatpush2.msra.mxu0 0.0
    %1790 = vmatprep.subr.mxu0 0.0
    %1791 = vmatpush2.msra.mxu0 0.0
    %1792 = vmatprep.subr.mxu0 0.0
    %1793 = vmatpush2.msra.mxu0 0.0
    %1794 = vmatprep.subr.mxu0 0.0
    %1795 = vmatpush2.msra.mxu0 0.0
    %1796 = vmatprep.subr.mxu0 0.0
    %1797 = vmatpush2.msra.mxu0 0.0
    %1798 = vmatprep.subr.mxu0 0.0
    %1799 = vmatpush2.msra.mxu0 0.0
    %1800 = vmatprep.subr.mxu0 0.0
    %1801 = vmatpush2.msra.mxu0 0.0
    %1802 = vmatprep.subr.mxu0 0.0
    %1803 = vmatpush2.msra.mxu0 0.0
    %1804 = vmatprep.subr.mxu0 0.0
    %1805 = vmatpush2.msra.mxu0 0.0
    %1806 = vmatprep.subr.mxu0 0.0
    %1807 = vmatpush2.msra.mxu0 0.0
    %1808 = vmatprep.subr.mxu0 0.0
    %1809 = vmatpush2.msra.mxu0 0.0
    %1810 = vmatprep.subr.mxu0 0.0
    %1811 = vmatpush2.msra.mxu0 0.0
    %1812 = vmatprep.subr.mxu0 0.0
    %1813 = vmatpush2.msra.mxu0 0.0
    %1814 = vmatprep.mubr.f32.mxu0 0.0
    %1815 = vmatmul.mubr.f32.gmra.mxu0 %v1510
    %v1816 = vpop.f32.mrf.mxu0
    %v1817 = vadd.f32 0.0, %v1816
    %v1818 = vpop.f32.mrf.mxu0
    %v1819 = vadd.f32 0.0, %v1818
    %1820 = vdwg.mxu0
    %v1825 = vcombine.low %v1746, %v1748
    %v1826 = vcombine.low %v1817, %v1819
    %v1828 = vunpack.c.l.s4 1983009808
    %v1829 = vunpack.c.0.s8 %v1828
    %v1830 = vlaneseq
    %v1831 = vshrl.u32 %v1830, 7
    %v1832 = vsub.s32 %v1829, %v1831
    %v1833 = vrot.slane %v1825, %v1832
    %v1835 = vunpack.c.l.s4 1983009808
    %v1836 = vunpack.c.0.s8 %v1835
    %v1837 = vlaneseq
    %v1838 = vshrl.u32 %v1837, 7
    %v1839 = vsub.s32 %v1836, %v1838
    %v1840 = vrot.slane %v1826, %v1839
    %v1841 = vcombine.low %v1833, %v1840
    %v1843 = vadd.f32 %v1678, %v1841
    %v1844 = vxor.u32 %v1843, 2147483648
    %v1845 = vmul.f32 %v1844, 1.442695
    %v1846 = vpow.pop %v1845
    %v1847 = vadd.f32 %v1846, 1.0
    %v1848 = vrcp.pop %v1847
    %v1849 = vmul.f32 1.0, %v1848
    %v1851 = vrot.slane %v1843, 6
    %v1853 = vtanh.pop %v1851
    %v1855 = vrot.slane %v1849, 2
    %v1857 = vmul.f32 %v1855, %v1506
    %v1858 = vmul.f32 %v1849, %v1853
    %v1859 = vadd.f32 %v1857, %v1858
    %v1860 = vtanh.pop %v1859
    %v1861 = vrot.slane %v1849, 4
    %v1863 = vmul.f32 %v1861, %v1860
    %1864 = vmatprep.subr.mxu0 %v177
    %1865 = vmatpush1.msra.mxu0 %v176
    %1866 = vmatprep.subr.mxu0 %v173
    %1867 = vmatpush1.msra.mxu0 %v172
    %1868 = vmatprep.subr.mxu0 %v169
    %1869 = vmatpush1.msra.mxu0 %v168
    %1870 = vmatprep.subr.mxu0 %v165
    %1871 = vmatpush1.msra.mxu0 %v164
    %1872 = vmatprep.subr.mxu0 %v161
    %1873 = vmatpush1.msra.mxu0 %v160
    %1874 = vmatprep.subr.mxu0 %v157
    %1875 = vmatpush1.msra.mxu0 %v156
    %1876 = vmatprep.subr.mxu0 %v153
    %1877 = vmatpush1.msra.mxu0 %v152
    %1878 = vmatprep.subr.mxu0 %v149
    %1879 = vmatpush1.msra.mxu0 %v148
    %1880 = vmatprep.subr.mxu0 %v145
    %1881 = vmatpush1.msra.mxu0 %v144
    %1882 = vmatprep.subr.mxu0 %v141
    %1883 = vmatpush1.msra.mxu0 %v140
    %1884 = vmatprep.subr.mxu0 %v137
    %1885 = vmatpush1.msra.mxu0 %v136
    %1886 = vmatprep.subr.mxu0 %v133
    %1887 = vmatpush1.msra.mxu0 %v132
    %1888 = vmatprep.subr.mxu0 %v129
    %1889 = vmatpush1.msra.mxu0 %v128
    %1890 = vmatprep.subr.mxu0 %v125
    %1891 = vmatpush1.msra.mxu0 %v124
    %1892 = vmatprep.subr.mxu0 %v121
    %1893 = vmatpush1.msra.mxu0 %v120
    %1894 = vmatprep.subr.mxu0 %v117
    %1895 = vmatpush1.msra.mxu0 %v116
    %1896 = vmatprep.subr.mxu0 %v241
    %1897 = vmatpush2.msra.mxu0 %v240
    %1898 = vmatprep.subr.mxu0 %v237
    %1899 = vmatpush2.msra.mxu0 %v236
    %1900 = vmatprep.subr.mxu0 %v233
    %1901 = vmatpush2.msra.mxu0 %v232
    %1902 = vmatprep.subr.mxu0 %v229
    %1903 = vmatpush2.msra.mxu0 %v228
    %1904 = vmatprep.subr.mxu0 %v225
    %1905 = vmatpush2.msra.mxu0 %v224
    %1906 = vmatprep.subr.mxu0 %v221
    %1907 = vmatpush2.msra.mxu0 %v220
    %1908 = vmatprep.subr.mxu0 %v217
    %1909 = vmatpush2.msra.mxu0 %v216
    %1910 = vmatprep.subr.mxu0 %v213
    %1911 = vmatpush2.msra.mxu0 %v212
    %1912 = vmatprep.subr.mxu0 %v209
    %1913 = vmatpush2.msra.mxu0 %v208
    %1914 = vmatprep.subr.mxu0 %v205
    %1915 = vmatpush2.msra.mxu0 %v204
    %1916 = vmatprep.subr.mxu0 %v201
    %1917 = vmatpush2.msra.mxu0 %v200
    %1918 = vmatprep.subr.mxu0 %v197
    %1919 = vmatpush2.msra.mxu0 %v196
    %1920 = vmatprep.subr.mxu0 %v193
    %1921 = vmatpush2.msra.mxu0 %v192
    %1922 = vmatprep.subr.mxu0 %v189
    %1923 = vmatpush2.msra.mxu0 %v188
    %1924 = vmatprep.subr.mxu0 %v185
    %1925 = vmatpush2.msra.mxu0 %v184
    %1926 = vmatprep.subr.mxu0 %v181
    %1927 = vmatpush2.msra.mxu0 %v180
    %1928 = vmatprep.mubr.f32.mxu0 %v1676
    %1929 = vmatmul.mubr.f32.gmra.mxu0 %v1863
    %v1930 = vpop.f32.mrf.mxu0
    %v1931 = vadd.f32 %v249, %v1930
    %v1932 = vpop.f32.mrf.mxu0
    %v1933 = vadd.f32 %v253, %v1932
    %1934 = vdwg.mxu0
    %1935 = vmatprep.subr.mxu0 %v179
    %1936 = vmatpush1.msra.mxu0 %v178
    %1937 = vmatprep.subr.mxu0 %v175
    %1938 = vmatpush1.msra.mxu0 %v174
    %1939 = vmatprep.subr.mxu0 %v171
    %1940 = vmatpush1.msra.mxu0 %v170
    %1941 = vmatprep.subr.mxu0 %v167
    %1942 = vmatpush1.msra.mxu0 %v166
    %1943 = vmatprep.subr.mxu0 %v163
    %1944 = vmatpush1.msra.mxu0 %v162
    %1945 = vmatprep.subr.mxu0 %v159
    %1946 = vmatpush1.msra.mxu0 %v158
    %1947 = vmatprep.subr.mxu0 %v155
    %1948 = vmatpush1.msra.mxu0 %v154
    %1949 = vmatprep.subr.mxu0 %v151
    %1950 = vmatpush1.msra.mxu0 %v150
    %1951 = vmatprep.subr.mxu0 %v147
    %1952 = vmatpush1.msra.mxu0 %v146
    %1953 = vmatprep.subr.mxu0 %v143
    %1954 = vmatpush1.msra.mxu0 %v142
    %1955 = vmatprep.subr.mxu0 %v139
    %1956 = vmatpush1.msra.mxu0 %v138
    %1957 = vmatprep.subr.mxu0 %v135
    %1958 = vmatpush1.msra.mxu0 %v134
    %1959 = vmatprep.subr.mxu0 %v131
    %1960 = vmatpush1.msra.mxu0 %v130
    %1961 = vmatprep.subr.mxu0 %v127
    %1962 = vmatpush1.msra.mxu0 %v126
    %1963 = vmatprep.subr.mxu0 %v123
    %1964 = vmatpush1.msra.mxu0 %v122
    %1965 = vmatprep.subr.mxu0 %v119
    %1966 = vmatpush1.msra.mxu0 %v118
    %1967 = vmatprep.subr.mxu0 %v243
    %1968 = vmatpush2.msra.mxu0 %v242
    %1969 = vmatprep.subr.mxu0 %v239
    %1970 = vmatpush2.msra.mxu0 %v238
    %1971 = vmatprep.subr.mxu0 %v235
    %1972 = vmatpush2.msra.mxu0 %v234
    %1973 = vmatprep.subr.mxu0 %v231
    %1974 = vmatpush2.msra.mxu0 %v230
    %1975 = vmatprep.subr.mxu0 %v227
    %1976 = vmatpush2.msra.mxu0 %v226
    %1977 = vmatprep.subr.mxu0 %v223
    %1978 = vmatpush2.msra.mxu0 %v222
    %1979 = vmatprep.subr.mxu0 %v219
    %1980 = vmatpush2.msra.mxu0 %v218
    %1981 = vmatprep.subr.mxu0 %v215
    %1982 = vmatpush2.msra.mxu0 %v214
    %1983 = vmatprep.subr.mxu0 %v211
    %1984 = vmatpush2.msra.mxu0 %v210
    %1985 = vmatprep.subr.mxu0 %v207
    %1986 = vmatpush2.msra.mxu0 %v206
    %1987 = vmatprep.subr.mxu0 %v203
    %1988 = vmatpush2.msra.mxu0 %v202
    %1989 = vmatprep.subr.mxu0 %v199
    %1990 = vmatpush2.msra.mxu0 %v198
    %1991 = vmatprep.subr.mxu0 %v195
    %1992 = vmatpush2.msra.mxu0 %v194
    %1993 = vmatprep.subr.mxu0 %v191
    %1994 = vmatpush2.msra.mxu0 %v190
    %1995 = vmatprep.subr.mxu0 %v187
    %1996 = vmatpush2.msra.mxu0 %v186
    %1997 = vmatprep.subr.mxu0 %v183
    %1998 = vmatpush2.msra.mxu0 %v182
    %1999 = vmatprep.mubr.f32.mxu0 %v1676
    %2000 = vmatmul.mubr.f32.gmra.mxu0 %v1863
    %v2001 = vpop.f32.mrf.mxu0
    %v2002 = vadd.f32 %v257, %v2001
    %v2003 = vpop.f32.mrf.mxu0
    %v2004 = vadd.f32 %v261, %v2003
    %2005 = vdwg.mxu0
    %v2006 = vxor.u32 %v1931, 2147483648
    %v2007 = vxor.u32 %v1933, 2147483648
    %v2008 = vxor.u32 %v2002, 2147483648
    %v2009 = vmul.f32 %v2006, 1.442695
    %v2010 = vpow.pop %v2009
    %v2011 = vmul.f32 %v2007, 1.442695
    %v2012 = vpow.pop %v2011
    %v2013 = vmul.f32 %v2008, 1.442695
    %v2014 = vpow.pop %v2013
    %v2015 = vadd.f32 %v2010, 1.0
    %v2016 = vadd.f32 %v2012, 1.0
    %v2017 = vadd.f32 %v2014, 1.0
    %v2018 = vrcp.pop %v2015
    %v2019 = vmul.f32 1.0, %v2018
    %v2020 = vrcp.pop %v2016
    %v2021 = vmul.f32 1.0, %v2020
    %v2022 = vrcp.pop %v2017
    %v2023 = vmul.f32 1.0, %v2022
    %v2024 = vtanh.pop %v2004
    %v2025 = vmul.f32 %v2021, %v1674
    %v2026 = vmul.f32 %v2019, %v2024
    %v2027 = vadd.f32 %v2025, %v2026
    %v2028 = vtanh.pop %v2027
    %v2029 = vmul.f32 %v2023, %v2028
    %s2030 = scalar_lea.vmem %s0, 40
    %v2031 = vld [vmem:[%s2030] sm:$0xff]
    %2032 = vmatprep.subr.mxu0 %v113
    %2033 = vmatpush1.msra.mxu0 %v112
    %2034 = vmatprep.subr.mxu0 %v109
    %2035 = vmatpush1.msra.mxu0 %v108
    %2036 = vmatprep.subr.mxu0 %v105
    %2037 = vmatpush1.msra.mxu0 %v104
    %2038 = vmatprep.subr.mxu0 %v101
    %2039 = vmatpush1.msra.mxu0 %v100
    %2040 = vmatprep.subr.mxu0 %v97
    %2041 = vmatpush1.msra.mxu0 %v96
    %2042 = vmatprep.subr.mxu0 %v93
    %2043 = vmatpush1.msra.mxu0 %v92
    %2044 = vmatprep.subr.mxu0 %v89
    %2045 = vmatpush1.msra.mxu0 %v88
    %2046 = vmatprep.subr.mxu0 %v85
    %2047 = vmatpush1.msra.mxu0 %v84
    %2048 = vmatprep.subr.mxu0 %v81
    %2049 = vmatpush1.msra.mxu0 %v80
    %2050 = vmatprep.subr.mxu0 %v77
    %2051 = vmatpush1.msra.mxu0 %v76
    %2052 = vmatprep.subr.mxu0 %v73
    %2053 = vmatpush1.msra.mxu0 %v72
    %2054 = vmatprep.subr.mxu0 %v69
    %2055 = vmatpush1.msra.mxu0 %v68
    %2056 = vmatprep.subr.mxu0 %v65
    %2057 = vmatpush1.msra.mxu0 %v64
    %2058 = vmatprep.subr.mxu0 %v61
    %2059 = vmatpush1.msra.mxu0 %v60
    %2060 = vmatprep.subr.mxu0 %v57
    %2061 = vmatpush1.msra.mxu0 %v56
    %2062 = vmatprep.subr.mxu0 %v53
    %2063 = vmatpush1.msra.mxu0 %v52
    %2064 = vmatprep.subr.mxu0 0.0
    %2065 = vmatpush2.msra.mxu0 0.0
    %2066 = vmatprep.subr.mxu0 0.0
    %2067 = vmatpush2.msra.mxu0 0.0
    %2068 = vmatprep.subr.mxu0 0.0
    %2069 = vmatpush2.msra.mxu0 0.0
    %2070 = vmatprep.subr.mxu0 0.0
    %2071 = vmatpush2.msra.mxu0 0.0
    %2072 = vmatprep.subr.mxu0 0.0
    %2073 = vmatpush2.msra.mxu0 0.0
    %2074 = vmatprep.subr.mxu0 0.0
    %2075 = vmatpush2.msra.mxu0 0.0
    %2076 = vmatprep.subr.mxu0 0.0
    %2077 = vmatpush2.msra.mxu0 0.0
    %2078 = vmatprep.subr.mxu0 0.0
    %2079 = vmatpush2.msra.mxu0 0.0
    %2080 = vmatprep.subr.mxu0 0.0
    %2081 = vmatpush2.msra.mxu0 0.0
    %2082 = vmatprep.subr.mxu0 0.0
    %2083 = vmatpush2.msra.mxu0 0.0
    %2084 = vmatprep.subr.mxu0 0.0
    %2085 = vmatpush2.msra.mxu0 0.0
    %2086 = vmatprep.subr.mxu0 0.0
    %2087 = vmatpush2.msra.mxu0 0.0
    %2088 = vmatprep.subr.mxu0 0.0
    %2089 = vmatpush2.msra.mxu0 0.0
    %2090 = vmatprep.subr.mxu0 0.0
    %2091 = vmatpush2.msra.mxu0 0.0
    %2092 = vmatprep.subr.mxu0 0.0
    %2093 = vmatpush2.msra.mxu0 0.0
    %2094 = vmatprep.subr.mxu0 0.0
    %2095 = vmatpush2.msra.mxu0 0.0
    %2096 = vmatprep.mubr.f32.mxu0 0.0
    %2097 = vmatmul.mubr.f32.gmra.mxu0 %v1863
    %v2098 = vpop.f32.mrf.mxu0
    %v2099 = vadd.f32 0.0, %v2098
    %v2100 = vpop.f32.mrf.mxu0
    %v2101 = vadd.f32 0.0, %v2100
    %2102 = vdwg.mxu0
    %2103 = vmatprep.subr.mxu0 %v115
    %2104 = vmatpush1.msra.mxu0 %v114
    %2105 = vmatprep.subr.mxu0 %v111
    %2106 = vmatpush1.msra.mxu0 %v110
    %2107 = vmatprep.subr.mxu0 %v107
    %2108 = vmatpush1.msra.mxu0 %v106
    %2109 = vmatprep.subr.mxu0 %v103
    %2110 = vmatpush1.msra.mxu0 %v102
    %2111 = vmatprep.subr.mxu0 %v99
    %2112 = vmatpush1.msra.mxu0 %v98
    %2113 = vmatprep.subr.mxu0 %v95
    %2114 = vmatpush1.msra.mxu0 %v94
    %2115 = vmatprep.subr.mxu0 %v91
    %2116 = vmatpush1.msra.mxu0 %v90
    %2117 = vmatprep.subr.mxu0 %v87
    %2118 = vmatpush1.msra.mxu0 %v86
    %2119 = vmatprep.subr.mxu0 %v83
    %2120 = vmatpush1.msra.mxu0 %v82
    %2121 = vmatprep.subr.mxu0 %v79
    %2122 = vmatpush1.msra.mxu0 %v78
    %2123 = vmatprep.subr.mxu0 %v75
    %2124 = vmatpush1.msra.mxu0 %v74
    %2125 = vmatprep.subr.mxu0 %v71
    %2126 = vmatpush1.msra.mxu0 %v70
    %2127 = vmatprep.subr.mxu0 %v67
    %2128 = vmatpush1.msra.mxu0 %v66
    %2129 = vmatprep.subr.mxu0 %v63
    %2130 = vmatpush1.msra.mxu0 %v62
    %2131 = vmatprep.subr.mxu0 %v59
    %2132 = vmatpush1.msra.mxu0 %v58
    %2133 = vmatprep.subr.mxu0 %v55
    %2134 = vmatpush1.msra.mxu0 %v54
    %2135 = vmatprep.subr.mxu0 0.0
    %2136 = vmatpush2.msra.mxu0 0.0
    %2137 = vmatprep.subr.mxu0 0.0
    %2138 = vmatpush2.msra.mxu0 0.0
    %2139 = vmatprep.subr.mxu0 0.0
    %2140 = vmatpush2.msra.mxu0 0.0
    %2141 = vmatprep.subr.mxu0 0.0
    %2142 = vmatpush2.msra.mxu0 0.0
    %2143 = vmatprep.subr.mxu0 0.0
    %2144 = vmatpush2.msra.mxu0 0.0
    %2145 = vmatprep.subr.mxu0 0.0
    %2146 = vmatpush2.msra.mxu0 0.0
    %2147 = vmatprep.subr.mxu0 0.0
    %2148 = vmatpush2.msra.mxu0 0.0
    %2149 = vmatprep.subr.mxu0 0.0
    %2150 = vmatpush2.msra.mxu0 0.0
    %2151 = vmatprep.subr.mxu0 0.0
    %2152 = vmatpush2.msra.mxu0 0.0
    %2153 = vmatprep.subr.mxu0 0.0
    %2154 = vmatpush2.msra.mxu0 0.0
    %2155 = vmatprep.subr.mxu0 0.0
    %2156 = vmatpush2.msra.mxu0 0.0
    %2157 = vmatprep.subr.mxu0 0.0
    %2158 = vmatpush2.msra.mxu0 0.0
    %2159 = vmatprep.subr.mxu0 0.0
    %2160 = vmatpush2.msra.mxu0 0.0
    %2161 = vmatprep.subr.mxu0 0.0
    %2162 = vmatpush2.msra.mxu0 0.0
    %2163 = vmatprep.subr.mxu0 0.0
    %2164 = vmatpush2.msra.mxu0 0.0
    %2165 = vmatprep.subr.mxu0 0.0
    %2166 = vmatpush2.msra.mxu0 0.0
    %2167 = vmatprep.mubr.f32.mxu0 0.0
    %2168 = vmatmul.mubr.f32.gmra.mxu0 %v1863
    %v2169 = vpop.f32.mrf.mxu0
    %v2170 = vadd.f32 0.0, %v2169
    %v2171 = vpop.f32.mrf.mxu0
    %v2172 = vadd.f32 0.0, %v2171
    %2173 = vdwg.mxu0
    %v2178 = vcombine.low %v2099, %v2101
    %v2179 = vcombine.low %v2170, %v2172
    %v2181 = vunpack.c.l.s4 1983009808
    %v2182 = vunpack.c.0.s8 %v2181
    %v2183 = vlaneseq
    %v2184 = vshrl.u32 %v2183, 7
    %v2185 = vsub.s32 %v2182, %v2184
    %v2186 = vrot.slane %v2178, %v2185
    %v2188 = vunpack.c.l.s4 1983009808
    %v2189 = vunpack.c.0.s8 %v2188
    %v2190 = vlaneseq
    %v2191 = vshrl.u32 %v2190, 7
    %v2192 = vsub.s32 %v2189, %v2191
    %v2193 = vrot.slane %v2179, %v2192
    %v2194 = vcombine.low %v2186, %v2193
    %v2196 = vadd.f32 %v2031, %v2194
    %v2197 = vxor.u32 %v2196, 2147483648
    %v2198 = vmul.f32 %v2197, 1.442695
    %v2199 = vpow.pop %v2198
    %v2200 = vadd.f32 %v2199, 1.0
    %v2201 = vrcp.pop %v2200
    %v2202 = vmul.f32 1.0, %v2201
    %v2204 = vrot.slane %v2196, 6
    %v2206 = vtanh.pop %v2204
    %v2208 = vrot.slane %v2202, 2
    %v2210 = vmul.f32 %v2208, %v1859
    %v2211 = vmul.f32 %v2202, %v2206
    %v2212 = vadd.f32 %v2210, %v2211
    %v2213 = vtanh.pop %v2212
    %v2214 = vrot.slane %v2202, 4
    %v2216 = vmul.f32 %v2214, %v2213
    %2217 = vmatprep.subr.mxu0 %v177
    %2218 = vmatpush1.msra.mxu0 %v176
    %2219 = vmatprep.subr.mxu0 %v173
    %2220 = vmatpush1.msra.mxu0 %v172
    %2221 = vmatprep.subr.mxu0 %v169
    %2222 = vmatpush1.msra.mxu0 %v168
    %2223 = vmatprep.subr.mxu0 %v165
    %2224 = vmatpush1.msra.mxu0 %v164
    %2225 = vmatprep.subr.mxu0 %v161
    %2226 = vmatpush1.msra.mxu0 %v160
    %2227 = vmatprep.subr.mxu0 %v157
    %2228 = vmatpush1.msra.mxu0 %v156
    %2229 = vmatprep.subr.mxu0 %v153
    %2230 = vmatpush1.msra.mxu0 %v152
    %2231 = vmatprep.subr.mxu0 %v149
    %2232 = vmatpush1.msra.mxu0 %v148
    %2233 = vmatprep.subr.mxu0 %v145
    %2234 = vmatpush1.msra.mxu0 %v144
    %2235 = vmatprep.subr.mxu0 %v141
    %2236 = vmatpush1.msra.mxu0 %v140
    %2237 = vmatprep.subr.mxu0 %v137
    %2238 = vmatpush1.msra.mxu0 %v136
    %2239 = vmatprep.subr.mxu0 %v133
    %2240 = vmatpush1.msra.mxu0 %v132
    %2241 = vmatprep.subr.mxu0 %v129
    %2242 = vmatpush1.msra.mxu0 %v128
    %2243 = vmatprep.subr.mxu0 %v125
    %2244 = vmatpush1.msra.mxu0 %v124
    %2245 = vmatprep.subr.mxu0 %v121
    %2246 = vmatpush1.msra.mxu0 %v120
    %2247 = vmatprep.subr.mxu0 %v117
    %2248 = vmatpush1.msra.mxu0 %v116
    %2249 = vmatprep.subr.mxu0 %v241
    %2250 = vmatpush2.msra.mxu0 %v240
    %2251 = vmatprep.subr.mxu0 %v237
    %2252 = vmatpush2.msra.mxu0 %v236
    %2253 = vmatprep.subr.mxu0 %v233
    %2254 = vmatpush2.msra.mxu0 %v232
    %2255 = vmatprep.subr.mxu0 %v229
    %2256 = vmatpush2.msra.mxu0 %v228
    %2257 = vmatprep.subr.mxu0 %v225
    %2258 = vmatpush2.msra.mxu0 %v224
    %2259 = vmatprep.subr.mxu0 %v221
    %2260 = vmatpush2.msra.mxu0 %v220
    %2261 = vmatprep.subr.mxu0 %v217
    %2262 = vmatpush2.msra.mxu0 %v216
    %2263 = vmatprep.subr.mxu0 %v213
    %2264 = vmatpush2.msra.mxu0 %v212
    %2265 = vmatprep.subr.mxu0 %v209
    %2266 = vmatpush2.msra.mxu0 %v208
    %2267 = vmatprep.subr.mxu0 %v205
    %2268 = vmatpush2.msra.mxu0 %v204
    %2269 = vmatprep.subr.mxu0 %v201
    %2270 = vmatpush2.msra.mxu0 %v200
    %2271 = vmatprep.subr.mxu0 %v197
    %2272 = vmatpush2.msra.mxu0 %v196
    %2273 = vmatprep.subr.mxu0 %v193
    %2274 = vmatpush2.msra.mxu0 %v192
    %2275 = vmatprep.subr.mxu0 %v189
    %2276 = vmatpush2.msra.mxu0 %v188
    %2277 = vmatprep.subr.mxu0 %v185
    %2278 = vmatpush2.msra.mxu0 %v184
    %2279 = vmatprep.subr.mxu0 %v181
    %2280 = vmatpush2.msra.mxu0 %v180
    %2281 = vmatprep.mubr.f32.mxu0 %v2029
    %2282 = vmatmul.mubr.f32.gmra.mxu0 %v2216
    %v2283 = vpop.f32.mrf.mxu0
    %v2284 = vadd.f32 %v249, %v2283
    %v2285 = vpop.f32.mrf.mxu0
    %v2286 = vadd.f32 %v253, %v2285
    %2287 = vdwg.mxu0
    %2288 = vmatprep.subr.mxu0 %v179
    %2289 = vmatpush1.msra.mxu0 %v178
    %2290 = vmatprep.subr.mxu0 %v175
    %2291 = vmatpush1.msra.mxu0 %v174
    %2292 = vmatprep.subr.mxu0 %v171
    %2293 = vmatpush1.msra.mxu0 %v170
    %2294 = vmatprep.subr.mxu0 %v167
    %2295 = vmatpush1.msra.mxu0 %v166
    %2296 = vmatprep.subr.mxu0 %v163
    %2297 = vmatpush1.msra.mxu0 %v162
    %2298 = vmatprep.subr.mxu0 %v159
    %2299 = vmatpush1.msra.mxu0 %v158
    %2300 = vmatprep.subr.mxu0 %v155
    %2301 = vmatpush1.msra.mxu0 %v154
    %2302 = vmatprep.subr.mxu0 %v151
    %2303 = vmatpush1.msra.mxu0 %v150
    %2304 = vmatprep.subr.mxu0 %v147
    %2305 = vmatpush1.msra.mxu0 %v146
    %2306 = vmatprep.subr.mxu0 %v143
    %2307 = vmatpush1.msra.mxu0 %v142
    %2308 = vmatprep.subr.mxu0 %v139
    %2309 = vmatpush1.msra.mxu0 %v138
    %2310 = vmatprep.subr.mxu0 %v135
    %2311 = vmatpush1.msra.mxu0 %v134
    %2312 = vmatprep.subr.mxu0 %v131
    %2313 = vmatpush1.msra.mxu0 %v130
    %2314 = vmatprep.subr.mxu0 %v127
    %2315 = vmatpush1.msra.mxu0 %v126
    %2316 = vmatprep.subr.mxu0 %v123
    %2317 = vmatpush1.msra.mxu0 %v122
    %2318 = vmatprep.subr.mxu0 %v119
    %2319 = vmatpush1.msra.mxu0 %v118
    %2320 = vmatprep.subr.mxu0 %v243
    %2321 = vmatpush2.msra.mxu0 %v242
    %2322 = vmatprep.subr.mxu0 %v239
    %2323 = vmatpush2.msra.mxu0 %v238
    %2324 = vmatprep.subr.mxu0 %v235
    %2325 = vmatpush2.msra.mxu0 %v234
    %2326 = vmatprep.subr.mxu0 %v231
    %2327 = vmatpush2.msra.mxu0 %v230
    %2328 = vmatprep.subr.mxu0 %v227
    %2329 = vmatpush2.msra.mxu0 %v226
    %2330 = vmatprep.subr.mxu0 %v223
    %2331 = vmatpush2.msra.mxu0 %v222
    %2332 = vmatprep.subr.mxu0 %v219
    %2333 = vmatpush2.msra.mxu0 %v218
    %2334 = vmatprep.subr.mxu0 %v215
    %2335 = vmatpush2.msra.mxu0 %v214
    %2336 = vmatprep.subr.mxu0 %v211
    %2337 = vmatpush2.msra.mxu0 %v210
    %2338 = vmatprep.subr.mxu0 %v207
    %2339 = vmatpush2.msra.mxu0 %v206
    %2340 = vmatprep.subr.mxu0 %v203
    %2341 = vmatpush2.msra.mxu0 %v202
    %2342 = vmatprep.subr.mxu0 %v199
    %2343 = vmatpush2.msra.mxu0 %v198
    %2344 = vmatprep.subr.mxu0 %v195
    %2345 = vmatpush2.msra.mxu0 %v194
    %2346 = vmatprep.subr.mxu0 %v191
    %2347 = vmatpush2.msra.mxu0 %v190
    %2348 = vmatprep.subr.mxu0 %v187
    %2349 = vmatpush2.msra.mxu0 %v186
    %2350 = vmatprep.subr.mxu0 %v183
    %2351 = vmatpush2.msra.mxu0 %v182
    %2352 = vmatprep.mubr.f32.mxu0 %v2029
    %2353 = vmatmul.mubr.f32.gmra.mxu0 %v2216
    %v2354 = vpop.f32.mrf.mxu0
    %v2355 = vadd.f32 %v257, %v2354
    %v2356 = vpop.f32.mrf.mxu0
    %v2357 = vadd.f32 %v261, %v2356
    %2358 = vdwg.mxu0
    %v2359 = vxor.u32 %v2284, 2147483648
    %v2360 = vxor.u32 %v2286, 2147483648
    %v2361 = vxor.u32 %v2355, 2147483648
    %v2362 = vmul.f32 %v2359, 1.442695
    %v2363 = vpow.pop %v2362
    %v2364 = vmul.f32 %v2360, 1.442695
    %v2365 = vpow.pop %v2364
    %v2366 = vmul.f32 %v2361, 1.442695
    %v2367 = vpow.pop %v2366
    %v2368 = vadd.f32 %v2363, 1.0
    %v2369 = vadd.f32 %v2365, 1.0
    %v2370 = vadd.f32 %v2367, 1.0
    %v2371 = vrcp.pop %v2368
    %v2372 = vmul.f32 1.0, %v2371
    %v2373 = vrcp.pop %v2369
    %v2374 = vmul.f32 1.0, %v2373
    %v2375 = vrcp.pop %v2370
    %v2376 = vmul.f32 1.0, %v2375
    %v2377 = vtanh.pop %v2357
    %v2378 = vmul.f32 %v2374, %v2027
    %v2379 = vmul.f32 %v2372, %v2377
    %v2380 = vadd.f32 %v2378, %v2379
    %v2381 = vtanh.pop %v2380
    %v2382 = vmul.f32 %v2376, %v2381
    %s2383 = scalar_lea.vmem %s0, 48
    %v2384 = vld [vmem:[%s2383] sm:$0xff]
    %2385 = vmatprep.subr.mxu0 %v113
    %2386 = vmatpush1.msra.mxu0 %v112
    %2387 = vmatprep.subr.mxu0 %v109
    %2388 = vmatpush1.msra.mxu0 %v108
    %2389 = vmatprep.subr.mxu0 %v105
    %2390 = vmatpush1.msra.mxu0 %v104
    %2391 = vmatprep.subr.mxu0 %v101
    %2392 = vmatpush1.msra.mxu0 %v100
    %2393 = vmatprep.subr.mxu0 %v97
    %2394 = vmatpush1.msra.mxu0 %v96
    %2395 = vmatprep.subr.mxu0 %v93
    %2396 = vmatpush1.msra.mxu0 %v92
    %2397 = vmatprep.subr.mxu0 %v89
    %2398 = vmatpush1.msra.mxu0 %v88
    %2399 = vmatprep.subr.mxu0 %v85
    %2400 = vmatpush1.msra.mxu0 %v84
    %2401 = vmatprep.subr.mxu0 %v81
    %2402 = vmatpush1.msra.mxu0 %v80
    %2403 = vmatprep.subr.mxu0 %v77
    %2404 = vmatpush1.msra.mxu0 %v76
    %2405 = vmatprep.subr.mxu0 %v73
    %2406 = vmatpush1.msra.mxu0 %v72
    %2407 = vmatprep.subr.mxu0 %v69
    %2408 = vmatpush1.msra.mxu0 %v68
    %2409 = vmatprep.subr.mxu0 %v65
    %2410 = vmatpush1.msra.mxu0 %v64
    %2411 = vmatprep.subr.mxu0 %v61
    %2412 = vmatpush1.msra.mxu0 %v60
    %2413 = vmatprep.subr.mxu0 %v57
    %2414 = vmatpush1.msra.mxu0 %v56
    %2415 = vmatprep.subr.mxu0 %v53
    %2416 = vmatpush1.msra.mxu0 %v52
    %2417 = vmatprep.subr.mxu0 0.0
    %2418 = vmatpush2.msra.mxu0 0.0
    %2419 = vmatprep.subr.mxu0 0.0
    %2420 = vmatpush2.msra.mxu0 0.0
    %2421 = vmatprep.subr.mxu0 0.0
    %2422 = vmatpush2.msra.mxu0 0.0
    %2423 = vmatprep.subr.mxu0 0.0
    %2424 = vmatpush2.msra.mxu0 0.0
    %2425 = vmatprep.subr.mxu0 0.0
    %2426 = vmatpush2.msra.mxu0 0.0
    %2427 = vmatprep.subr.mxu0 0.0
    %2428 = vmatpush2.msra.mxu0 0.0
    %2429 = vmatprep.subr.mxu0 0.0
    %2430 = vmatpush2.msra.mxu0 0.0
    %2431 = vmatprep.subr.mxu0 0.0
    %2432 = vmatpush2.msra.mxu0 0.0
    %2433 = vmatprep.subr.mxu0 0.0
    %2434 = vmatpush2.msra.mxu0 0.0
    %2435 = vmatprep.subr.mxu0 0.0
    %2436 = vmatpush2.msra.mxu0 0.0
    %2437 = vmatprep.subr.mxu0 0.0
    %2438 = vmatpush2.msra.mxu0 0.0
    %2439 = vmatprep.subr.mxu0 0.0
    %2440 = vmatpush2.msra.mxu0 0.0
    %2441 = vmatprep.subr.mxu0 0.0
    %2442 = vmatpush2.msra.mxu0 0.0
    %2443 = vmatprep.subr.mxu0 0.0
    %2444 = vmatpush2.msra.mxu0 0.0
    %2445 = vmatprep.subr.mxu0 0.0
    %2446 = vmatpush2.msra.mxu0 0.0
    %2447 = vmatprep.subr.mxu0 0.0
    %2448 = vmatpush2.msra.mxu0 0.0
    %2449 = vmatprep.mubr.f32.mxu0 0.0
    %2450 = vmatmul.mubr.f32.gmra.mxu0 %v2216
    %v2451 = vpop.f32.mrf.mxu0
    %v2452 = vadd.f32 0.0, %v2451
    %v2453 = vpop.f32.mrf.mxu0
    %v2454 = vadd.f32 0.0, %v2453
    %2455 = vdwg.mxu0
    %2456 = vmatprep.subr.mxu0 %v115
    %2457 = vmatpush1.msra.mxu0 %v114
    %2458 = vmatprep.subr.mxu0 %v111
    %2459 = vmatpush1.msra.mxu0 %v110
    %2460 = vmatprep.subr.mxu0 %v107
    %2461 = vmatpush1.msra.mxu0 %v106
    %2462 = vmatprep.subr.mxu0 %v103
    %2463 = vmatpush1.msra.mxu0 %v102
    %2464 = vmatprep.subr.mxu0 %v99
    %2465 = vmatpush1.msra.mxu0 %v98
    %2466 = vmatprep.subr.mxu0 %v95
    %2467 = vmatpush1.msra.mxu0 %v94
    %2468 = vmatprep.subr.mxu0 %v91
    %2469 = vmatpush1.msra.mxu0 %v90
    %2470 = vmatprep.subr.mxu0 %v87
    %2471 = vmatpush1.msra.mxu0 %v86
    %2472 = vmatprep.subr.mxu0 %v83
    %2473 = vmatpush1.msra.mxu0 %v82
    %2474 = vmatprep.subr.mxu0 %v79
    %2475 = vmatpush1.msra.mxu0 %v78
    %2476 = vmatprep.subr.mxu0 %v75
    %2477 = vmatpush1.msra.mxu0 %v74
    %2478 = vmatprep.subr.mxu0 %v71
    %2479 = vmatpush1.msra.mxu0 %v70
    %2480 = vmatprep.subr.mxu0 %v67
    %2481 = vmatpush1.msra.mxu0 %v66
    %2482 = vmatprep.subr.mxu0 %v63
    %2483 = vmatpush1.msra.mxu0 %v62
    %2484 = vmatprep.subr.mxu0 %v59
    %2485 = vmatpush1.msra.mxu0 %v58
    %2486 = vmatprep.subr.mxu0 %v55
    %2487 = vmatpush1.msra.mxu0 %v54
    %2488 = vmatprep.subr.mxu0 0.0
    %2489 = vmatpush2.msra.mxu0 0.0
    %2490 = vmatprep.subr.mxu0 0.0
    %2491 = vmatpush2.msra.mxu0 0.0
    %2492 = vmatprep.subr.mxu0 0.0
    %2493 = vmatpush2.msra.mxu0 0.0
    %2494 = vmatprep.subr.mxu0 0.0
    %2495 = vmatpush2.msra.mxu0 0.0
    %2496 = vmatprep.subr.mxu0 0.0
    %2497 = vmatpush2.msra.mxu0 0.0
    %2498 = vmatprep.subr.mxu0 0.0
    %2499 = vmatpush2.msra.mxu0 0.0
    %2500 = vmatprep.subr.mxu0 0.0
    %2501 = vmatpush2.msra.mxu0 0.0
    %2502 = vmatprep.subr.mxu0 0.0
    %2503 = vmatpush2.msra.mxu0 0.0
    %2504 = vmatprep.subr.mxu0 0.0
    %2505 = vmatpush2.msra.mxu0 0.0
    %2506 = vmatprep.subr.mxu0 0.0
    %2507 = vmatpush2.msra.mxu0 0.0
    %2508 = vmatprep.subr.mxu0 0.0
    %2509 = vmatpush2.msra.mxu0 0.0
    %2510 = vmatprep.subr.mxu0 0.0
    %2511 = vmatpush2.msra.mxu0 0.0
    %2512 = vmatprep.subr.mxu0 0.0
    %2513 = vmatpush2.msra.mxu0 0.0
    %2514 = vmatprep.subr.mxu0 0.0
    %2515 = vmatpush2.msra.mxu0 0.0
    %2516 = vmatprep.subr.mxu0 0.0
    %2517 = vmatpush2.msra.mxu0 0.0
    %2518 = vmatprep.subr.mxu0 0.0
    %2519 = vmatpush2.msra.mxu0 0.0
    %2520 = vmatprep.mubr.f32.mxu0 0.0
    %2521 = vmatmul.mubr.f32.gmra.mxu0 %v2216
    %v2522 = vpop.f32.mrf.mxu0
    %v2523 = vadd.f32 0.0, %v2522
    %v2524 = vpop.f32.mrf.mxu0
    %v2525 = vadd.f32 0.0, %v2524
    %2526 = vdwg.mxu0
    %v2531 = vcombine.low %v2452, %v2454
    %v2532 = vcombine.low %v2523, %v2525
    %v2534 = vunpack.c.l.s4 1983009808
    %v2535 = vunpack.c.0.s8 %v2534
    %v2536 = vlaneseq
    %v2537 = vshrl.u32 %v2536, 7
    %v2538 = vsub.s32 %v2535, %v2537
    %v2539 = vrot.slane %v2531, %v2538
    %v2541 = vunpack.c.l.s4 1983009808
    %v2542 = vunpack.c.0.s8 %v2541
    %v2543 = vlaneseq
    %v2544 = vshrl.u32 %v2543, 7
    %v2545 = vsub.s32 %v2542, %v2544
    %v2546 = vrot.slane %v2532, %v2545
    %v2547 = vcombine.low %v2539, %v2546
    %v2549 = vadd.f32 %v2384, %v2547
    %v2550 = vxor.u32 %v2549, 2147483648
    %v2551 = vmul.f32 %v2550, 1.442695
    %v2552 = vpow.pop %v2551
    %v2553 = vadd.f32 %v2552, 1.0
    %v2554 = vrcp.pop %v2553
    %v2555 = vmul.f32 1.0, %v2554
    %v2557 = vrot.slane %v2549, 6
    %v2559 = vtanh.pop %v2557
    %v2561 = vrot.slane %v2555, 2
    %v2563 = vmul.f32 %v2561, %v2212
    %v2564 = vmul.f32 %v2555, %v2559
    %v2565 = vadd.f32 %v2563, %v2564
    %v2566 = vtanh.pop %v2565
    %v2567 = vrot.slane %v2555, 4
    %v2569 = vmul.f32 %v2567, %v2566
    %2570 = vmatprep.subr.mxu0 %v177
    %2571 = vmatpush1.msra.mxu0 %v176
    %2572 = vmatprep.subr.mxu0 %v173
    %2573 = vmatpush1.msra.mxu0 %v172
    %2574 = vmatprep.subr.mxu0 %v169
    %2575 = vmatpush1.msra.mxu0 %v168
    %2576 = vmatprep.subr.mxu0 %v165
    %2577 = vmatpush1.msra.mxu0 %v164
    %2578 = vmatprep.subr.mxu0 %v161
    %2579 = vmatpush1.msra.mxu0 %v160
    %2580 = vmatprep.subr.mxu0 %v157
    %2581 = vmatpush1.msra.mxu0 %v156
    %2582 = vmatprep.subr.mxu0 %v153
    %2583 = vmatpush1.msra.mxu0 %v152
    %2584 = vmatprep.subr.mxu0 %v149
    %2585 = vmatpush1.msra.mxu0 %v148
    %2586 = vmatprep.subr.mxu0 %v145
    %2587 = vmatpush1.msra.mxu0 %v144
    %2588 = vmatprep.subr.mxu0 %v141
    %2589 = vmatpush1.msra.mxu0 %v140
    %2590 = vmatprep.subr.mxu0 %v137
    %2591 = vmatpush1.msra.mxu0 %v136
    %2592 = vmatprep.subr.mxu0 %v133
    %2593 = vmatpush1.msra.mxu0 %v132
    %2594 = vmatprep.subr.mxu0 %v129
    %2595 = vmatpush1.msra.mxu0 %v128
    %2596 = vmatprep.subr.mxu0 %v125
    %2597 = vmatpush1.msra.mxu0 %v124
    %2598 = vmatprep.subr.mxu0 %v121
    %2599 = vmatpush1.msra.mxu0 %v120
    %2600 = vmatprep.subr.mxu0 %v117
    %2601 = vmatpush1.msra.mxu0 %v116
    %2602 = vmatprep.subr.mxu0 %v241
    %2603 = vmatpush2.msra.mxu0 %v240
    %2604 = vmatprep.subr.mxu0 %v237
    %2605 = vmatpush2.msra.mxu0 %v236
    %2606 = vmatprep.subr.mxu0 %v233
    %2607 = vmatpush2.msra.mxu0 %v232
    %2608 = vmatprep.subr.mxu0 %v229
    %2609 = vmatpush2.msra.mxu0 %v228
    %2610 = vmatprep.subr.mxu0 %v225
    %2611 = vmatpush2.msra.mxu0 %v224
    %2612 = vmatprep.subr.mxu0 %v221
    %2613 = vmatpush2.msra.mxu0 %v220
    %2614 = vmatprep.subr.mxu0 %v217
    %2615 = vmatpush2.msra.mxu0 %v216
    %2616 = vmatprep.subr.mxu0 %v213
    %2617 = vmatpush2.msra.mxu0 %v212
    %2618 = vmatprep.subr.mxu0 %v209
    %2619 = vmatpush2.msra.mxu0 %v208
    %2620 = vmatprep.subr.mxu0 %v205
    %2621 = vmatpush2.msra.mxu0 %v204
    %2622 = vmatprep.subr.mxu0 %v201
    %2623 = vmatpush2.msra.mxu0 %v200
    %2624 = vmatprep.subr.mxu0 %v197
    %2625 = vmatpush2.msra.mxu0 %v196
    %2626 = vmatprep.subr.mxu0 %v193
    %2627 = vmatpush2.msra.mxu0 %v192
    %2628 = vmatprep.subr.mxu0 %v189
    %2629 = vmatpush2.msra.mxu0 %v188
    %2630 = vmatprep.subr.mxu0 %v185
    %2631 = vmatpush2.msra.mxu0 %v184
    %2632 = vmatprep.subr.mxu0 %v181
    %2633 = vmatpush2.msra.mxu0 %v180
    %2634 = vmatprep.mubr.f32.mxu0 %v2382
    %2635 = vmatmul.mubr.f32.gmra.mxu0 %v2569
    %v2636 = vpop.f32.mrf.mxu0
    %v2637 = vadd.f32 %v249, %v2636
    %v2638 = vpop.f32.mrf.mxu0
    %v2639 = vadd.f32 %v253, %v2638
    %2640 = vdwg.mxu0
    %2641 = vmatprep.subr.mxu0 %v179
    %2642 = vmatpush1.msra.mxu0 %v178
    %2643 = vmatprep.subr.mxu0 %v175
    %2644 = vmatpush1.msra.mxu0 %v174
    %2645 = vmatprep.subr.mxu0 %v171
    %2646 = vmatpush1.msra.mxu0 %v170
    %2647 = vmatprep.subr.mxu0 %v167
    %2648 = vmatpush1.msra.mxu0 %v166
    %2649 = vmatprep.subr.mxu0 %v163
    %2650 = vmatpush1.msra.mxu0 %v162
    %2651 = vmatprep.subr.mxu0 %v159
    %2652 = vmatpush1.msra.mxu0 %v158
    %2653 = vmatprep.subr.mxu0 %v155
    %2654 = vmatpush1.msra.mxu0 %v154
    %2655 = vmatprep.subr.mxu0 %v151
    %2656 = vmatpush1.msra.mxu0 %v150
    %2657 = vmatprep.subr.mxu0 %v147
    %2658 = vmatpush1.msra.mxu0 %v146
    %2659 = vmatprep.subr.mxu0 %v143
    %2660 = vmatpush1.msra.mxu0 %v142
    %2661 = vmatprep.subr.mxu0 %v139
    %2662 = vmatpush1.msra.mxu0 %v138
    %2663 = vmatprep.subr.mxu0 %v135
    %2664 = vmatpush1.msra.mxu0 %v134
    %2665 = vmatprep.subr.mxu0 %v131
    %2666 = vmatpush1.msra.mxu0 %v130
    %2667 = vmatprep.subr.mxu0 %v127
    %2668 = vmatpush1.msra.mxu0 %v126
    %2669 = vmatprep.subr.mxu0 %v123
    %2670 = vmatpush1.msra.mxu0 %v122
    %2671 = vmatprep.subr.mxu0 %v119
    %2672 = vmatpush1.msra.mxu0 %v118
    %2673 = vmatprep.subr.mxu0 %v243
    %2674 = vmatpush2.msra.mxu0 %v242
    %2675 = vmatprep.subr.mxu0 %v239
    %2676 = vmatpush2.msra.mxu0 %v238
    %2677 = vmatprep.subr.mxu0 %v235
    %2678 = vmatpush2.msra.mxu0 %v234
    %2679 = vmatprep.subr.mxu0 %v231
    %2680 = vmatpush2.msra.mxu0 %v230
    %2681 = vmatprep.subr.mxu0 %v227
    %2682 = vmatpush2.msra.mxu0 %v226
    %2683 = vmatprep.subr.mxu0 %v223
    %2684 = vmatpush2.msra.mxu0 %v222
    %2685 = vmatprep.subr.mxu0 %v219
    %2686 = vmatpush2.msra.mxu0 %v218
    %2687 = vmatprep.subr.mxu0 %v215
    %2688 = vmatpush2.msra.mxu0 %v214
    %2689 = vmatprep.subr.mxu0 %v211
    %2690 = vmatpush2.msra.mxu0 %v210
    %2691 = vmatprep.subr.mxu0 %v207
    %2692 = vmatpush2.msra.mxu0 %v206
    %2693 = vmatprep.subr.mxu0 %v203
    %2694 = vmatpush2.msra.mxu0 %v202
    %2695 = vmatprep.subr.mxu0 %v199
    %2696 = vmatpush2.msra.mxu0 %v198
    %2697 = vmatprep.subr.mxu0 %v195
    %2698 = vmatpush2.msra.mxu0 %v194
    %2699 = vmatprep.subr.mxu0 %v191
    %2700 = vmatpush2.msra.mxu0 %v190
    %2701 = vmatprep.subr.mxu0 %v187
    %2702 = vmatpush2.msra.mxu0 %v186
    %2703 = vmatprep.subr.mxu0 %v183
    %2704 = vmatpush2.msra.mxu0 %v182
    %2705 = vmatprep.mubr.f32.mxu0 %v2382
    %2706 = vmatmul.mubr.f32.gmra.mxu0 %v2569
    %v2707 = vpop.f32.mrf.mxu0
    %v2708 = vadd.f32 %v257, %v2707
    %v2709 = vpop.f32.mrf.mxu0
    %v2710 = vadd.f32 %v261, %v2709
    %2711 = vdwg.mxu0
    %v2712 = vxor.u32 %v2637, 2147483648
    %v2713 = vxor.u32 %v2639, 2147483648
    %v2714 = vxor.u32 %v2708, 2147483648
    %v2715 = vmul.f32 %v2712, 1.442695
    %v2716 = vpow.pop %v2715
    %v2717 = vmul.f32 %v2713, 1.442695
    %v2718 = vpow.pop %v2717
    %v2719 = vmul.f32 %v2714, 1.442695
    %v2720 = vpow.pop %v2719
    %v2721 = vadd.f32 %v2716, 1.0
    %v2722 = vadd.f32 %v2718, 1.0
    %v2723 = vadd.f32 %v2720, 1.0
    %v2724 = vrcp.pop %v2721
    %v2725 = vmul.f32 1.0, %v2724
    %v2726 = vrcp.pop %v2722
    %v2727 = vmul.f32 1.0, %v2726
    %v2728 = vrcp.pop %v2723
    %v2729 = vmul.f32 1.0, %v2728
    %v2730 = vtanh.pop %v2710
    %v2731 = vmul.f32 %v2727, %v2380
    %v2732 = vmul.f32 %v2725, %v2730
    %v2733 = vadd.f32 %v2731, %v2732
    %v2734 = vtanh.pop %v2733
    %v2735 = vmul.f32 %v2729, %v2734
    %s2736 = scalar_lea.vmem %s0, 56
    %v2737 = vld [vmem:[%s2736] sm:$0xff]
    %2738 = vmatprep.subr.mxu0 %v113
    %2739 = vmatpush1.msra.mxu0 %v112
    %2740 = vmatprep.subr.mxu0 %v109
    %2741 = vmatpush1.msra.mxu0 %v108
    %2742 = vmatprep.subr.mxu0 %v105
    %2743 = vmatpush1.msra.mxu0 %v104
    %2744 = vmatprep.subr.mxu0 %v101
    %2745 = vmatpush1.msra.mxu0 %v100
    %2746 = vmatprep.subr.mxu0 %v97
    %2747 = vmatpush1.msra.mxu0 %v96
    %2748 = vmatprep.subr.mxu0 %v93
    %2749 = vmatpush1.msra.mxu0 %v92
    %2750 = vmatprep.subr.mxu0 %v89
    %2751 = vmatpush1.msra.mxu0 %v88
    %2752 = vmatprep.subr.mxu0 %v85
    %2753 = vmatpush1.msra.mxu0 %v84
    %2754 = vmatprep.subr.mxu0 %v81
    %2755 = vmatpush1.msra.mxu0 %v80
    %2756 = vmatprep.subr.mxu0 %v77
    %2757 = vmatpush1.msra.mxu0 %v76
    %2758 = vmatprep.subr.mxu0 %v73
    %2759 = vmatpush1.msra.mxu0 %v72
    %2760 = vmatprep.subr.mxu0 %v69
    %2761 = vmatpush1.msra.mxu0 %v68
    %2762 = vmatprep.subr.mxu0 %v65
    %2763 = vmatpush1.msra.mxu0 %v64
    %2764 = vmatprep.subr.mxu0 %v61
    %2765 = vmatpush1.msra.mxu0 %v60
    %2766 = vmatprep.subr.mxu0 %v57
    %2767 = vmatpush1.msra.mxu0 %v56
    %2768 = vmatprep.subr.mxu0 %v53
    %2769 = vmatpush1.msra.mxu0 %v52
    %2770 = vmatprep.subr.mxu0 0.0
    %2771 = vmatpush2.msra.mxu0 0.0
    %2772 = vmatprep.subr.mxu0 0.0
    %2773 = vmatpush2.msra.mxu0 0.0
    %2774 = vmatprep.subr.mxu0 0.0
    %2775 = vmatpush2.msra.mxu0 0.0
    %2776 = vmatprep.subr.mxu0 0.0
    %2777 = vmatpush2.msra.mxu0 0.0
    %2778 = vmatprep.subr.mxu0 0.0
    %2779 = vmatpush2.msra.mxu0 0.0
    %2780 = vmatprep.subr.mxu0 0.0
    %2781 = vmatpush2.msra.mxu0 0.0
    %2782 = vmatprep.subr.mxu0 0.0
    %2783 = vmatpush2.msra.mxu0 0.0
    %2784 = vmatprep.subr.mxu0 0.0
    %2785 = vmatpush2.msra.mxu0 0.0
    %2786 = vmatprep.subr.mxu0 0.0
    %2787 = vmatpush2.msra.mxu0 0.0
    %2788 = vmatprep.subr.mxu0 0.0
    %2789 = vmatpush2.msra.mxu0 0.0
    %2790 = vmatprep.subr.mxu0 0.0
    %2791 = vmatpush2.msra.mxu0 0.0
    %2792 = vmatprep.subr.mxu0 0.0
    %2793 = vmatpush2.msra.mxu0 0.0
    %2794 = vmatprep.subr.mxu0 0.0
    %2795 = vmatpush2.msra.mxu0 0.0
    %2796 = vmatprep.subr.mxu0 0.0
    %2797 = vmatpush2.msra.mxu0 0.0
    %2798 = vmatprep.subr.mxu0 0.0
    %2799 = vmatpush2.msra.mxu0 0.0
    %2800 = vmatprep.subr.mxu0 0.0
    %2801 = vmatpush2.msra.mxu0 0.0
    %2802 = vmatprep.mubr.f32.mxu0 0.0
    %2803 = vmatmul.mubr.f32.gmra.mxu0 %v2569
    %v2804 = vpop.f32.mrf.mxu0
    %v2805 = vadd.f32 0.0, %v2804
    %v2806 = vpop.f32.mrf.mxu0
    %v2807 = vadd.f32 0.0, %v2806
    %2808 = vdwg.mxu0
    %2809 = vmatprep.subr.mxu0 %v115
    %2810 = vmatpush1.msra.mxu0 %v114
    %2811 = vmatprep.subr.mxu0 %v111
    %2812 = vmatpush1.msra.mxu0 %v110
    %2813 = vmatprep.subr.mxu0 %v107
    %2814 = vmatpush1.msra.mxu0 %v106
    %2815 = vmatprep.subr.mxu0 %v103
    %2816 = vmatpush1.msra.mxu0 %v102
    %2817 = vmatprep.subr.mxu0 %v99
    %2818 = vmatpush1.msra.mxu0 %v98
    %2819 = vmatprep.subr.mxu0 %v95
    %2820 = vmatpush1.msra.mxu0 %v94
    %2821 = vmatprep.subr.mxu0 %v91
    %2822 = vmatpush1.msra.mxu0 %v90
    %2823 = vmatprep.subr.mxu0 %v87
    %2824 = vmatpush1.msra.mxu0 %v86
    %2825 = vmatprep.subr.mxu0 %v83
    %2826 = vmatpush1.msra.mxu0 %v82
    %2827 = vmatprep.subr.mxu0 %v79
    %2828 = vmatpush1.msra.mxu0 %v78
    %2829 = vmatprep.subr.mxu0 %v75
    %2830 = vmatpush1.msra.mxu0 %v74
    %2831 = vmatprep.subr.mxu0 %v71
    %2832 = vmatpush1.msra.mxu0 %v70
    %2833 = vmatprep.subr.mxu0 %v67
    %2834 = vmatpush1.msra.mxu0 %v66
    %2835 = vmatprep.subr.mxu0 %v63
    %2836 = vmatpush1.msra.mxu0 %v62
    %2837 = vmatprep.subr.mxu0 %v59
    %2838 = vmatpush1.msra.mxu0 %v58
    %2839 = vmatprep.subr.mxu0 %v55
    %2840 = vmatpush1.msra.mxu0 %v54
    %2841 = vmatprep.subr.mxu0 0.0
    %2842 = vmatpush2.msra.mxu0 0.0
    %2843 = vmatprep.subr.mxu0 0.0
    %2844 = vmatpush2.msra.mxu0 0.0
    %2845 = vmatprep.subr.mxu0 0.0
    %2846 = vmatpush2.msra.mxu0 0.0
    %2847 = vmatprep.subr.mxu0 0.0
    %2848 = vmatpush2.msra.mxu0 0.0
    %2849 = vmatprep.subr.mxu0 0.0
    %2850 = vmatpush2.msra.mxu0 0.0
    %2851 = vmatprep.subr.mxu0 0.0
    %2852 = vmatpush2.msra.mxu0 0.0
    %2853 = vmatprep.subr.mxu0 0.0
    %2854 = vmatpush2.msra.mxu0 0.0
    %2855 = vmatprep.subr.mxu0 0.0
    %2856 = vmatpush2.msra.mxu0 0.0
    %2857 = vmatprep.subr.mxu0 0.0
    %2858 = vmatpush2.msra.mxu0 0.0
    %2859 = vmatprep.subr.mxu0 0.0
    %2860 = vmatpush2.msra.mxu0 0.0
    %2861 = vmatprep.subr.mxu0 0.0
    %2862 = vmatpush2.msra.mxu0 0.0
    %2863 = vmatprep.subr.mxu0 0.0
    %2864 = vmatpush2.msra.mxu0 0.0
    %2865 = vmatprep.subr.mxu0 0.0
    %2866 = vmatpush2.msra.mxu0 0.0
    %2867 = vmatprep.subr.mxu0 0.0
    %2868 = vmatpush2.msra.mxu0 0.0
    %2869 = vmatprep.subr.mxu0 0.0
    %2870 = vmatpush2.msra.mxu0 0.0
    %2871 = vmatprep.subr.mxu0 0.0
    %2872 = vmatpush2.msra.mxu0 0.0
    %2873 = vmatprep.mubr.f32.mxu0 0.0
    %2874 = vmatmul.mubr.f32.gmra.mxu0 %v2569
    %v2875 = vpop.f32.mrf.mxu0
    %v2876 = vadd.f32 0.0, %v2875
    %v2877 = vpop.f32.mrf.mxu0
    %v2878 = vadd.f32 0.0, %v2877
    %2879 = vdwg.mxu0
    %v2884 = vcombine.low %v2805, %v2807
    %v2885 = vcombine.low %v2876, %v2878
    %v2887 = vunpack.c.l.s4 1983009808
    %v2888 = vunpack.c.0.s8 %v2887
    %v2889 = vlaneseq
    %v2890 = vshrl.u32 %v2889, 7
    %v2891 = vsub.s32 %v2888, %v2890
    %v2892 = vrot.slane %v2884, %v2891
    %v2894 = vunpack.c.l.s4 1983009808
    %v2895 = vunpack.c.0.s8 %v2894
    %v2896 = vlaneseq
    %v2897 = vshrl.u32 %v2896, 7
    %v2898 = vsub.s32 %v2895, %v2897
    %v2899 = vrot.slane %v2885, %v2898
    %v2900 = vcombine.low %v2892, %v2899
    %v2902 = vadd.f32 %v2737, %v2900
    %v2903 = vxor.u32 %v2902, 2147483648
    %v2904 = vmul.f32 %v2903, 1.442695
    %v2905 = vpow.pop %v2904
    %v2906 = vadd.f32 %v2905, 1.0
    %v2907 = vrcp.pop %v2906
    %v2908 = vmul.f32 1.0, %v2907
    %v2910 = vrot.slane %v2902, 6
    %v2912 = vtanh.pop %v2910
    %v2914 = vrot.slane %v2908, 2
    %v2916 = vmul.f32 %v2914, %v2565
    %v2917 = vmul.f32 %v2908, %v2912
    %v2918 = vadd.f32 %v2916, %v2917
    %v2919 = vtanh.pop %v2918
    %v2920 = vrot.slane %v2908, 4
    %v2922 = vmul.f32 %v2920, %v2919
    %2923 = vmatprep.subr.mxu0 %v177
    %2924 = vmatpush1.msra.mxu0 %v176
    %2925 = vmatprep.subr.mxu0 %v173
    %2926 = vmatpush1.msra.mxu0 %v172
    %2927 = vmatprep.subr.mxu0 %v169
    %2928 = vmatpush1.msra.mxu0 %v168
    %2929 = vmatprep.subr.mxu0 %v165
    %2930 = vmatpush1.msra.mxu0 %v164
    %2931 = vmatprep.subr.mxu0 %v161
    %2932 = vmatpush1.msra.mxu0 %v160
    %2933 = vmatprep.subr.mxu0 %v157
    %2934 = vmatpush1.msra.mxu0 %v156
    %2935 = vmatprep.subr.mxu0 %v153
    %2936 = vmatpush1.msra.mxu0 %v152
    %2937 = vmatprep.subr.mxu0 %v149
    %2938 = vmatpush1.msra.mxu0 %v148
    %2939 = vmatprep.subr.mxu0 %v145
    %2940 = vmatpush1.msra.mxu0 %v144
    %2941 = vmatprep.subr.mxu0 %v141
    %2942 = vmatpush1.msra.mxu0 %v140
    %2943 = vmatprep.subr.mxu0 %v137
    %2944 = vmatpush1.msra.mxu0 %v136
    %2945 = vmatprep.subr.mxu0 %v133
    %2946 = vmatpush1.msra.mxu0 %v132
    %2947 = vmatprep.subr.mxu0 %v129
    %2948 = vmatpush1.msra.mxu0 %v128
    %2949 = vmatprep.subr.mxu0 %v125
    %2950 = vmatpush1.msra.mxu0 %v124
    %2951 = vmatprep.subr.mxu0 %v121
    %2952 = vmatpush1.msra.mxu0 %v120
    %2953 = vmatprep.subr.mxu0 %v117
    %2954 = vmatpush1.msra.mxu0 %v116
    %2955 = vmatprep.subr.mxu0 %v241
    %2956 = vmatpush2.msra.mxu0 %v240
    %2957 = vmatprep.subr.mxu0 %v237
    %2958 = vmatpush2.msra.mxu0 %v236
    %2959 = vmatprep.subr.mxu0 %v233
    %2960 = vmatpush2.msra.mxu0 %v232
    %2961 = vmatprep.subr.mxu0 %v229
    %2962 = vmatpush2.msra.mxu0 %v228
    %2963 = vmatprep.subr.mxu0 %v225
    %2964 = vmatpush2.msra.mxu0 %v224
    %2965 = vmatprep.subr.mxu0 %v221
    %2966 = vmatpush2.msra.mxu0 %v220
    %2967 = vmatprep.subr.mxu0 %v217
    %2968 = vmatpush2.msra.mxu0 %v216
    %2969 = vmatprep.subr.mxu0 %v213
    %2970 = vmatpush2.msra.mxu0 %v212
    %2971 = vmatprep.subr.mxu0 %v209
    %2972 = vmatpush2.msra.mxu0 %v208
    %2973 = vmatprep.subr.mxu0 %v205
    %2974 = vmatpush2.msra.mxu0 %v204
    %2975 = vmatprep.subr.mxu0 %v201
    %2976 = vmatpush2.msra.mxu0 %v200
    %2977 = vmatprep.subr.mxu0 %v197
    %2978 = vmatpush2.msra.mxu0 %v196
    %2979 = vmatprep.subr.mxu0 %v193
    %2980 = vmatpush2.msra.mxu0 %v192
    %2981 = vmatprep.subr.mxu0 %v189
    %2982 = vmatpush2.msra.mxu0 %v188
    %2983 = vmatprep.subr.mxu0 %v185
    %2984 = vmatpush2.msra.mxu0 %v184
    %2985 = vmatprep.subr.mxu0 %v181
    %2986 = vmatpush2.msra.mxu0 %v180
    %2987 = vmatprep.mubr.f32.mxu0 %v2735
    %2988 = vmatmul.mubr.f32.gmra.mxu0 %v2922
    %v2989 = vpop.f32.mrf.mxu0
    %v2990 = vadd.f32 %v249, %v2989
    %v2991 = vpop.f32.mrf.mxu0
    %v2992 = vadd.f32 %v253, %v2991
    %2993 = vdwg.mxu0
    %2994 = vmatprep.subr.mxu0 %v179
    %2995 = vmatpush1.msra.mxu0 %v178
    %2996 = vmatprep.subr.mxu0 %v175
    %2997 = vmatpush1.msra.mxu0 %v174
    %2998 = vmatprep.subr.mxu0 %v171
    %2999 = vmatpush1.msra.mxu0 %v170
    %3000 = vmatprep.subr.mxu0 %v167
    %3001 = vmatpush1.msra.mxu0 %v166
    %3002 = vmatprep.subr.mxu0 %v163
    %3003 = vmatpush1.msra.mxu0 %v162
    %3004 = vmatprep.subr.mxu0 %v159
    %3005 = vmatpush1.msra.mxu0 %v158
    %3006 = vmatprep.subr.mxu0 %v155
    %3007 = vmatpush1.msra.mxu0 %v154
    %3008 = vmatprep.subr.mxu0 %v151
    %3009 = vmatpush1.msra.mxu0 %v150
    %3010 = vmatprep.subr.mxu0 %v147
    %3011 = vmatpush1.msra.mxu0 %v146
    %3012 = vmatprep.subr.mxu0 %v143
    %3013 = vmatpush1.msra.mxu0 %v142
    %3014 = vmatprep.subr.mxu0 %v139
    %3015 = vmatpush1.msra.mxu0 %v138
    %3016 = vmatprep.subr.mxu0 %v135
    %3017 = vmatpush1.msra.mxu0 %v134
    %3018 = vmatprep.subr.mxu0 %v131
    %3019 = vmatpush1.msra.mxu0 %v130
    %3020 = vmatprep.subr.mxu0 %v127
    %3021 = vmatpush1.msra.mxu0 %v126
    %3022 = vmatprep.subr.mxu0 %v123
    %3023 = vmatpush1.msra.mxu0 %v122
    %3024 = vmatprep.subr.mxu0 %v119
    %3025 = vmatpush1.msra.mxu0 %v118
    %3026 = vmatprep.subr.mxu0 %v243
    %3027 = vmatpush2.msra.mxu0 %v242
    %3028 = vmatprep.subr.mxu0 %v239
    %3029 = vmatpush2.msra.mxu0 %v238
    %3030 = vmatprep.subr.mxu0 %v235
    %3031 = vmatpush2.msra.mxu0 %v234
    %3032 = vmatprep.subr.mxu0 %v231
    %3033 = vmatpush2.msra.mxu0 %v230
    %3034 = vmatprep.subr.mxu0 %v227
    %3035 = vmatpush2.msra.mxu0 %v226
    %3036 = vmatprep.subr.mxu0 %v223
    %3037 = vmatpush2.msra.mxu0 %v222
    %3038 = vmatprep.subr.mxu0 %v219
    %3039 = vmatpush2.msra.mxu0 %v218
    %3040 = vmatprep.subr.mxu0 %v215
    %3041 = vmatpush2.msra.mxu0 %v214
    %3042 = vmatprep.subr.mxu0 %v211
    %3043 = vmatpush2.msra.mxu0 %v210
    %3044 = vmatprep.subr.mxu0 %v207
    %3045 = vmatpush2.msra.mxu0 %v206
    %3046 = vmatprep.subr.mxu0 %v203
    %3047 = vmatpush2.msra.mxu0 %v202
    %3048 = vmatprep.subr.mxu0 %v199
    %3049 = vmatpush2.msra.mxu0 %v198
    %3050 = vmatprep.subr.mxu0 %v195
    %3051 = vmatpush2.msra.mxu0 %v194
    %3052 = vmatprep.subr.mxu0 %v191
    %3053 = vmatpush2.msra.mxu0 %v190
    %3054 = vmatprep.subr.mxu0 %v187
    %3055 = vmatpush2.msra.mxu0 %v186
    %3056 = vmatprep.subr.mxu0 %v183
    %3057 = vmatpush2.msra.mxu0 %v182
    %3058 = vmatprep.mubr.f32.mxu0 %v2735
    %3059 = vmatmul.mubr.f32.gmra.mxu0 %v2922
    %v3060 = vpop.f32.mrf.mxu0
    %v3061 = vadd.f32 %v257, %v3060
    %v3062 = vpop.f32.mrf.mxu0
    %v3063 = vadd.f32 %v261, %v3062
    %3064 = vdwg.mxu0
    %v3065 = vxor.u32 %v2990, 2147483648
    %v3066 = vxor.u32 %v2992, 2147483648
    %v3067 = vxor.u32 %v3061, 2147483648
    %v3068 = vmul.f32 %v3065, 1.442695
    %v3069 = vpow.pop %v3068
    %v3070 = vmul.f32 %v3066, 1.442695
    %v3071 = vpow.pop %v3070
    %v3072 = vmul.f32 %v3067, 1.442695
    %v3073 = vpow.pop %v3072
    %v3074 = vadd.f32 %v3069, 1.0
    %v3075 = vadd.f32 %v3071, 1.0
    %v3076 = vadd.f32 %v3073, 1.0
    %v3077 = vrcp.pop %v3074
    %v3078 = vmul.f32 1.0, %v3077
    %v3079 = vrcp.pop %v3075
    %v3080 = vmul.f32 1.0, %v3079
    %v3081 = vrcp.pop %v3076
    %v3082 = vmul.f32 1.0, %v3081
    %v3083 = vtanh.pop %v3063
    %v3084 = vmul.f32 %v3080, %v2733
    %v3085 = vmul.f32 %v3078, %v3083
    %v3086 = vadd.f32 %v3084, %v3085
    %v3087 = vtanh.pop %v3086
    %v3088 = vmul.f32 %v3082, %v3087
    %v3089 = vld [vmem:[%s4] sm:$0xff]
    %v3090 = vld [vmem:[%s4 + $0x8] sm:$0xff]
    %v3091 = vld [vmem:[%s4 + $0x10] sm:$0xff]
    %v3092 = vld [vmem:[%s4 + $0x18] sm:$0xff]
    %v3093 = vld [vmem:[%s4 + $0x20] sm:$0xff]
    %v3094 = vld [vmem:[%s4 + $0x28] sm:$0xff]
    %v3095 = vld [vmem:[%s4 + $0x30] sm:$0xff]
    %v3096 = vld [vmem:[%s4 + $0x38] sm:$0xff]
    %v3097 = vld [vmem:[%s4 + $0x40] sm:$0xff]
    %v3098 = vld [vmem:[%s4 + $0x48] sm:$0xff]
    %v3099 = vld [vmem:[%s4 + $0x50] sm:$0xff]
    %v3100 = vld [vmem:[%s4 + $0x58] sm:$0xff]
    %v3101 = vld [vmem:[%s4 + $0x60] sm:$0xff]
    %v3102 = vld [vmem:[%s4 + $0x68] sm:$0xff]
    %v3103 = vld [vmem:[%s4 + $0x70] sm:$0xff]
    %v3104 = vld [vmem:[%s4 + $0x78] sm:$0xff]
    %v3105 = vld [vmem:[%s5] sm:$0x1]
    %v3107 = vlaneseq
    %v3108 = vshrl.u32 %v3107, 7
    %v3109 = vsub.s32 0, %v3108
    %v3110 = vrot.slane %v3105, %v3109
    %3112 = vmatprep.subr.mxu0 0.0
    %3113 = vmatpush1.msra.mxu0 %v3104
    %3114 = vmatprep.subr.mxu0 0.0
    %3115 = vmatpush1.msra.mxu0 %v3103
    %3116 = vmatprep.subr.mxu0 0.0
    %3117 = vmatpush1.msra.mxu0 %v3102
    %3118 = vmatprep.subr.mxu0 0.0
    %3119 = vmatpush1.msra.mxu0 %v3101
    %3120 = vmatprep.subr.mxu0 0.0
    %3121 = vmatpush1.msra.mxu0 %v3100
    %3122 = vmatprep.subr.mxu0 0.0
    %3123 = vmatpush1.msra.mxu0 %v3099
    %3124 = vmatprep.subr.mxu0 0.0
    %3125 = vmatpush1.msra.mxu0 %v3098
    %3126 = vmatprep.subr.mxu0 0.0
    %3127 = vmatpush1.msra.mxu0 %v3097
    %3128 = vmatprep.subr.mxu0 0.0
    %3129 = vmatpush1.msra.mxu0 %v3096
    %3130 = vmatprep.subr.mxu0 0.0
    %3131 = vmatpush1.msra.mxu0 %v3095
    %3132 = vmatprep.subr.mxu0 0.0
    %3133 = vmatpush1.msra.mxu0 %v3094
    %3134 = vmatprep.subr.mxu0 0.0
    %3135 = vmatpush1.msra.mxu0 %v3093
    %3136 = vmatprep.subr.mxu0 0.0
    %3137 = vmatpush1.msra.mxu0 %v3092
    %3138 = vmatprep.subr.mxu0 0.0
    %3139 = vmatpush1.msra.mxu0 %v3091
    %3140 = vmatprep.subr.mxu0 0.0
    %3141 = vmatpush1.msra.mxu0 %v3090
    %3142 = vmatprep.subr.mxu0 0.0
    %3143 = vmatpush1.msra.mxu0 %v3089
    %3144 = vmatprep.subr.mxu0 0.0
    %3145 = vmatpush2.msra.mxu0 0.0
    %3146 = vmatprep.subr.mxu0 0.0
    %3147 = vmatpush2.msra.mxu0 0.0
    %3148 = vmatprep.subr.mxu0 0.0
    %3149 = vmatpush2.msra.mxu0 0.0
    %3150 = vmatprep.subr.mxu0 0.0
    %3151 = vmatpush2.msra.mxu0 0.0
    %3152 = vmatprep.subr.mxu0 0.0
    %3153 = vmatpush2.msra.mxu0 0.0
    %3154 = vmatprep.subr.mxu0 0.0
    %3155 = vmatpush2.msra.mxu0 0.0
    %3156 = vmatprep.subr.mxu0 0.0
    %3157 = vmatpush2.msra.mxu0 0.0
    %3158 = vmatprep.subr.mxu0 0.0
    %3159 = vmatpush2.msra.mxu0 0.0
    %3160 = vmatprep.subr.mxu0 0.0
    %3161 = vmatpush2.msra.mxu0 0.0
    %3162 = vmatprep.subr.mxu0 0.0
    %3163 = vmatpush2.msra.mxu0 0.0
    %3164 = vmatprep.subr.mxu0 0.0
    %3165 = vmatpush2.msra.mxu0 0.0
    %3166 = vmatprep.subr.mxu0 0.0
    %3167 = vmatpush2.msra.mxu0 0.0
    %3168 = vmatprep.subr.mxu0 0.0
    %3169 = vmatpush2.msra.mxu0 0.0
    %3170 = vmatprep.subr.mxu0 0.0
    %3171 = vmatpush2.msra.mxu0 0.0
    %3172 = vmatprep.subr.mxu0 0.0
    %3173 = vmatpush2.msra.mxu0 0.0
    %3174 = vmatprep.subr.mxu0 0.0
    %3175 = vmatpush2.msra.mxu0 0.0
    %3176 = vmatprep.mubr.f32.mxu0 0.0
    %3177 = vmatmul.mubr.f32.gmra.mxu0 %v3088
    %v3178 = vpop.f32.mrf.mxu0
    %v3179 = vadd.f32 %v3110, %v3178
    %v3180 = vpop.f32.mrf.mxu0
    %3181 = vdwg.mxu0
    %vm3182 = vcmask 9216
    %3183 = vst.msk [vmem:[#allocation7] sm:$0x3] %vm3182, %v3179
    // Predicated region
    $region34: #{tpu_custom_call.1} parent=1 // pred_check
      _
    $region35: #{tpu_custom_call.1} parent=1 // pred_check_branch
      %3185 = sbr.rel (0) target = $region37
    $region36: #{tpu_custom_call.1} parent=1 // pred_region
      %s3187 = ssub.s32 32, 32
      %3188 = vsyncadd [#allocation4], %s3187
      %s3190 = sshll.u32 [#allocation7], 4
      %s3191 = int_to_ptr.vmem [resolvable:$true] %s3190
      %3193 = dma.vmem_to_hbm [thread:$0]  %s3191, 32, %s6, [#allocation4]
    $region37: #{tpu_custom_call.1} parent=1 // pred_fallthru
      _
    // Predicated region
    $region38: #{tpu_custom_call.1} parent=1 // pred_check
      _
    $region39: #{tpu_custom_call.1} parent=1 // pred_check_branch
      %3195 = sbr.rel (0) target = $region41
    $region40: #{tpu_custom_call.1} parent=1 // pred_region
      %3196 = dma.done [#allocation4], 32
    $region41: #{tpu_custom_call.1} parent=1 // pred_fallthru
      _
    %3197 = vsyncpa [#allocation3], 1
    %3198 = vsyncpa [#allocation6], 1
    %3199 = vsyncpa [#allocation4], 1

</llo_original>
